<compile_context>
chip_gen: v7x
topology: tpu7x:2x2x1
jax: 0.10.0
libtpu: 0.0.40
codegen_flags: <defaults>
</compile_context>

<pallas_src>
import math
from functools import partial

import jax
import jax.numpy as jnp
from jax.experimental import pallas as pl
from jax.experimental.pallas import tpu as pltpu


# ----------------------------------------------------------------------------
# small in-kernel helpers
# ----------------------------------------------------------------------------
def _layer_norm(x, gamma, beta, eps=1e-5):
    """Post-norm LayerNorm over the hidden (lane) axis, f32 math."""
    mu = jnp.mean(x, axis=-1, keepdims=True)
    xc = x - mu
    var = jnp.mean(xc * xc, axis=-1, keepdims=True)
    return xc * jax.lax.rsqrt(var + eps) * gamma + beta


# ----------------------------------------------------------------------------
# fused forward kernel (one batch element per grid step)
# ----------------------------------------------------------------------------
def _make_kernel(num_heads, layers_t1, layers_t2):
    nh = num_heads

    def kernel(ids_col_ref, ids_row_ref, emb_ref, pe_ref,
               wq_ref, bq_ref, wk_ref, bk_ref, wv_ref, bv_ref,
               wo_ref, bo_ref, ln1g_ref, ln1b_ref,
               w1_ref, b1_ref, w2_ref, b2_ref, ln2g_ref, ln2b_ref,
               wdec_ref, bdec_ref, out_ref):
        S = ids_col_ref.shape[0]
        V, H = emb_ref.shape
        dh = wq_ref.shape[-1]
        inv_sqrt_dh = 1.0 / math.sqrt(dh)
        bf16, f32 = jnp.bfloat16, jnp.float32

        # ---- fused embedding gather on the MXU: onehot(ids) @ emb ---------
        ids = ids_col_ref[...]                                     # (S, 1) i32
        col = jax.lax.broadcasted_iota(jnp.int32, (S, V), 1)
        onehot = (col == ids).astype(bf16)                         # (S, V)
        x = jnp.dot(onehot, emb_ref[...],
                    preferred_element_type=f32)                    # (S, H) f32
        x = x * math.sqrt(H)                                       # * sqrt(dim_model)
        pe = pe_ref[...]                                           # (S, H) f32
        x = x + pe                                                 # positional encoding (encoder #1)

        # ---- key-padding additive bias: True where token == 0 (pad) -------
        ids_row = ids_row_ref[0]                                   # (1, S) i32
        key_bias = jnp.where(ids_row == 0, -1e9, 0.0).astype(f32)  # (1, S)

        def encoder_layer(x, l):
            """Post-norm nn.TransformerEncoderLayer (relu FFN, eval dropout)."""
            xb = x.astype(bf16)
            attn = jnp.zeros((S, H), f32)
            for h in range(nh):                                    # static unroll
                qh = jnp.dot(xb, wq_ref[l, h], preferred_element_type=f32) + bq_ref[l, h]
                kh = jnp.dot(xb, wk_ref[l, h], preferred_element_type=f32) + bk_ref[l, h]
                vh = jnp.dot(xb, wv_ref[l, h], preferred_element_type=f32) + bv_ref[l, h]
                # scores = Q @ K^T / sqrt(dh) + key_padding_bias   (trans-B dot, no transpose op)
                scores = jax.lax.dot_general(
                    qh.astype(bf16), kh.astype(bf16),
                    dimension_numbers=(((1,), (1,)), ((), ())),
                    preferred_element_type=f32) * inv_sqrt_dh + key_bias
                m = jnp.max(scores, axis=-1, keepdims=True)        # f32 softmax
                e = jnp.exp(scores - m)
                p = e * pl.reciprocal(jnp.sum(e, axis=-1, keepdims=True),
                                      approx=True)
                ctx = jnp.dot(p.astype(bf16), vh.astype(bf16),
                              preferred_element_type=f32)          # (S, dh)
                # concat-over-heads folded into the output projection
                attn = attn + jnp.dot(ctx.astype(bf16), wo_ref[l, h],
                                      preferred_element_type=f32)
            attn = attn + bo_ref[l]
            x = _layer_norm(x + attn, ln1g_ref[l], ln1b_ref[l])

            hid = jnp.dot(x.astype(bf16), w1_ref[l],
                          preferred_element_type=f32) + b1_ref[l]
            hid = jnp.maximum(hid, 0.0)                            # relu
            ff = jnp.dot(hid.astype(bf16), w2_ref[l],
                         preferred_element_type=f32) + b2_ref[l]
            x = _layer_norm(x + ff, ln2g_ref[l], ln2b_ref[l])
            return x

        # pretrained encoder (out = Identity)
        for l in range(layers_t1):
            x = encoder_layer(x, l)
        # stacked Transformer (pretrain=True: no embedding, fresh pos-enc).
        # .detach() in the reference is a no-op for the forward pass.
        x = x + pe
        for l in range(layers_t1, layers_t1 + layers_t2):
            x = encoder_layer(x, l)
        # pretrained decoder head: hidden -> vocab logits (lane-dense V)
        logits = jnp.dot(x.astype(bf16), wdec_ref[...],
                         preferred_element_type=f32) + bdec_ref[...]
        out_ref[0] = logits

    return kernel


# ----------------------------------------------------------------------------
# host wrapper
# ----------------------------------------------------------------------------
def trained_transformer_forward(params, src, *, num_heads, layers_t1, layers_t2):
    """src: (B, S) int32 token ids  ->  (B, S, num_tokens) f32 logits."""
    B, S = src.shape
    V, H = params['emb'].shape
    dff = params['w1'].shape[-1]
    L = layers_t1 + layers_t2
    nh = num_heads

    ids_col = src.reshape(B * S, 1).astype(jnp.int32)   # sublane-aligned per-batch tiles
    ids_row = src.reshape(B, 1, S).astype(jnp.int32)    # lane layout for the key-pad mask
    pe = params['pe'][:S].astype(jnp.float32)           # (S, H) positional table

    operands = (
        ids_col, ids_row, params['emb'], pe,
        params['wq'], params['bq'], params['wk'], params['bk'],
        params['wv'], params['bv'], params['wo'], params['bo'],
        params['ln1_g'], params['ln1_b'],
        params['w1'], params['b1'], params['w2'], params['b2'],
        params['ln2_g'], params['ln2_b'],
        params['wdec'], params['bdec'],
    )

    def full_spec(a):
        nd = a.ndim
        return pl.BlockSpec(a.shape, lambda b, _nd=nd: (0,) * _nd)

    in_specs = [
        pl.BlockSpec((S, 1), lambda b: (b, 0)),          # ids_col, per-batch row tile
        pl.BlockSpec((1, 1, S), lambda b: (b, 0, 0)),    # ids_row, per-batch lane tile
    ] + [full_spec(a) for a in operands[2:]]

    # advisory cost estimate — the kernel is tiny and latency/launch bound
    mm = 2 * S * V * H + 2 * S * H * V                   # embedding gather + decoder head
    mm += L * (3 * 2 * S * H * H                         # q/k/v projections
               + 2 * 2 * S * S * H                       # scores + context
               + 2 * S * H * H                           # output projection
               + 2 * 2 * S * H * dff)                    # feed-forward
    flops = B * mm
    transcendentals = B * L * (nh * S * S + nh * S + 4 * S)
    bytes_accessed = int(sum(int(a.size) * a.dtype.itemsize for a in operands)
                         + B * S * V * 4)

    return pl.pallas_call(
        _make_kernel(num_heads, layers_t1, layers_t2),
        out_shape=jax.ShapeDtypeStruct((B, S, V), jnp.float32),
        grid=(B,),
        in_specs=in_specs,
        out_specs=pl.BlockSpec((1, S, V), lambda b: (b, 0, 0)),
        compiler_params=pltpu.CompilerParams(
            dimension_semantics=("parallel",)),          # batch across TCs (v7x megacore)
        cost_estimate=pl.CostEstimate(flops=flops,
                                      transcendentals=transcendentals,
                                      bytes_accessed=bytes_accessed),
    )(*operands)


# ----------------------------------------------------------------------------
# deterministic synthetic parameters (fetch_model checkpoints are not available)
# ----------------------------------------------------------------------------
def make_positional_encoding(max_len, d_model):
    position = jnp.arange(max_len, dtype=jnp.float32)[:, None]
    div_term = jnp.exp(jnp.arange(0, d_model, 2, dtype=jnp.float32)
                       * (-math.log(10000.0) / d_model))
    pe = jnp.zeros((max_len, d_model), jnp.float32)
    pe = pe.at[:, 0::2].set(jnp.sin(position * div_term))
    pe = pe.at[:, 1::2].set(jnp.cos(position * div_term))
    return pe


def init_params(key, *, num_tokens, dim_model, num_heads, dff, num_layers, max_len):
    V, H, L, nh = num_tokens, dim_model, num_layers, num_heads
    dh = H // nh
    ks = jax.random.split(key, 14)

    def nrm(k, shape, scale):
        return jax.random.normal(k, shape, jnp.float32) * scale

    bf = jnp.bfloat16
    # matmul operands stored in bf16 (halves DMA bytes, MXU-native on v6e/v7x);
    # biases, layernorm params and the positional table stay f32.
    return {
        'emb':   nrm(ks[0], (V, H), 0.02).astype(bf),
        'pe':    make_positional_encoding(max_len, H),
        'wq':    nrm(ks[1], (L, nh, H, dh), 0.05).astype(bf),
        'bq':    nrm(ks[2], (L, nh, 1, dh), 0.01),
        'wk':    nrm(ks[3], (L, nh, H, dh), 0.05).astype(bf),
        'bk':    nrm(ks[4], (L, nh, 1, dh), 0.01),
        'wv':    nrm(ks[5], (L, nh, H, dh), 0.05).astype(bf),
        'bv':    nrm(ks[6], (L, nh, 1, dh), 0.01),
        'wo':    nrm(ks[7], (L, nh, dh, H), 0.05).astype(bf),
        'bo':    nrm(ks[8], (L, 1, H), 0.01),
        'ln1_g': jnp.ones((L, 1, H), jnp.float32),
        'ln1_b': jnp.zeros((L, 1, H), jnp.float32),
        'w1':    nrm(ks[9], (L, H, dff), 0.05).astype(bf),
        'b1':    nrm(ks[10], (L, 1, dff), 0.01),
        'w2':    nrm(ks[11], (L, dff, H), 0.05).astype(bf),
        'b2':    nrm(ks[12], (L, 1, H), 0.01),
        'ln2_g': jnp.ones((L, 1, H), jnp.float32),
        'ln2_b': jnp.zeros((L, 1, H), jnp.float32),
        'wdec':  nrm(ks[13], (H, V), 0.05).astype(bf),
        'bdec':  jnp.zeros((1, V), jnp.float32),
    }


# ----------------------------------------------------------------------------
# main
# ----------------------------------------------------------------------------
if __name__ == "__main__":
    # small shapes consistent with the module: batch=2, seq=16, dim_model=32,
    # num_heads=2, dff=64, num_tokens=128 (lane-width vocab), one encoder layer
    # in the pretrained encoder and one in the stacked transformer.
    B, S = 2, 16
    NUM_TOKENS, DIM_MODEL, NUM_HEADS, DFF, MAX_LEN = 128, 32, 2, 64, 64
    L1, L2 = 1, 1

    key = jax.random.PRNGKey(0)
    k_par, k_seq = jax.random.split(key)
    params = init_params(k_par, num_tokens=NUM_TOKENS, dim_model=DIM_MODEL,
                         num_heads=NUM_HEADS, dff=DFF,
                         num_layers=L1 + L2, max_len=MAX_LEN)

    # token ids in [0, 66); 0 = pad. Force a couple of pad positions so the
    # src_key_padding_mask path is exercised.
    seq = jax.random.randint(k_seq, (B, S), 0, 66, dtype=jnp.int32)
    seq = seq.at[:, -2:].set(0)

    fwd = jax.jit(partial(trained_transformer_forward,
                          num_heads=NUM_HEADS, layers_t1=L1, layers_t2=L2))
    logits = fwd(params, seq)
    jax.block_until_ready(logits)
    assert logits.shape == (B, S, NUM_TOKENS)
    assert bool(jnp.all(jnp.isfinite(logits)))
    print("KERNEL_OK")
</pallas_src>

<mosaic_0001>
module attributes {stable_mosaic.version = 11 : i64} {
  func.func @kernel(%arg0: i32, %arg1: memref<16x1xi32, #tpu.memory_space<vmem>>, %arg2: memref<1x1x16xi32, #tpu.memory_space<vmem>>, %arg3: memref<128x32xbf16, #tpu.memory_space<vmem>>, %arg4: memref<16x32xf32, #tpu.memory_space<vmem>>, %arg5: memref<2x2x32x16xbf16, #tpu.memory_space<vmem>>, %arg6: memref<2x2x1x16xf32, #tpu.memory_space<vmem>>, %arg7: memref<2x2x32x16xbf16, #tpu.memory_space<vmem>>, %arg8: memref<2x2x1x16xf32, #tpu.memory_space<vmem>>, %arg9: memref<2x2x32x16xbf16, #tpu.memory_space<vmem>>, %arg10: memref<2x2x1x16xf32, #tpu.memory_space<vmem>>, %arg11: memref<2x2x16x32xbf16, #tpu.memory_space<vmem>>, %arg12: memref<2x1x32xf32, #tpu.memory_space<vmem>>, %arg13: memref<2x1x32xf32, #tpu.memory_space<vmem>>, %arg14: memref<2x1x32xf32, #tpu.memory_space<vmem>>, %arg15: memref<2x32x64xbf16, #tpu.memory_space<vmem>>, %arg16: memref<2x1x64xf32, #tpu.memory_space<vmem>>, %arg17: memref<2x64x32xbf16, #tpu.memory_space<vmem>>, %arg18: memref<2x1x32xf32, #tpu.memory_space<vmem>>, %arg19: memref<2x1x32xf32, #tpu.memory_space<vmem>>, %arg20: memref<2x1x32xf32, #tpu.memory_space<vmem>>, %arg21: memref<32x128xbf16, #tpu.memory_space<vmem>>, %arg22: memref<1x128xf32, #tpu.memory_space<vmem>>, %arg23: memref<1x16x128xf32, #tpu.memory_space<vmem>>) attributes {dimension_semantics = [#tpu.dimension_semantics<parallel>], iteration_bounds = array<i64: 2>, scalar_prefetch = 0 : i64, scratch_operands = 0 : i64, tpu.core_type = #tpu.core_type<tc>, window_params = [{transform_indices = @transform_0, window_bounds = array<i64: 16, 1>}, {transform_indices = @transform_1, window_bounds = array<i64: 1, 1, 16>}, {pipeline_mode = #tpu.pipeline_mode<synchronous>, transform_indices = @transform_2, window_bounds = array<i64: 128, 32>}, {pipeline_mode = #tpu.pipeline_mode<synchronous>, transform_indices = @transform_3, window_bounds = array<i64: 16, 32>}, {pipeline_mode = #tpu.pipeline_mode<synchronous>, transform_indices = @transform_4, window_bounds = array<i64: 2, 2, 32, 16>}, {pipeline_mode = #tpu.pipeline_mode<synchronous>, transform_indices = @transform_5, window_bounds = array<i64: 2, 2, 1, 16>}, {pipeline_mode = #tpu.pipeline_mode<synchronous>, transform_indices = @transform_6, window_bounds = array<i64: 2, 2, 32, 16>}, {pipeline_mode = #tpu.pipeline_mode<synchronous>, transform_indices = @transform_7, window_bounds = array<i64: 2, 2, 1, 16>}, {pipeline_mode = #tpu.pipeline_mode<synchronous>, transform_indices = @transform_8, window_bounds = array<i64: 2, 2, 32, 16>}, {pipeline_mode = #tpu.pipeline_mode<synchronous>, transform_indices = @transform_9, window_bounds = array<i64: 2, 2, 1, 16>}, {pipeline_mode = #tpu.pipeline_mode<synchronous>, transform_indices = @transform_10, window_bounds = array<i64: 2, 2, 16, 32>}, {pipeline_mode = #tpu.pipeline_mode<synchronous>, transform_indices = @transform_11, window_bounds = array<i64: 2, 1, 32>}, {pipeline_mode = #tpu.pipeline_mode<synchronous>, transform_indices = @transform_12, window_bounds = array<i64: 2, 1, 32>}, {pipeline_mode = #tpu.pipeline_mode<synchronous>, transform_indices = @transform_13, window_bounds = array<i64: 2, 1, 32>}, {pipeline_mode = #tpu.pipeline_mode<synchronous>, transform_indices = @transform_14, window_bounds = array<i64: 2, 32, 64>}, {pipeline_mode = #tpu.pipeline_mode<synchronous>, transform_indices = @transform_15, window_bounds = array<i64: 2, 1, 64>}, {pipeline_mode = #tpu.pipeline_mode<synchronous>, transform_indices = @transform_16, window_bounds = array<i64: 2, 64, 32>}, {pipeline_mode = #tpu.pipeline_mode<synchronous>, transform_indices = @transform_17, window_bounds = array<i64: 2, 1, 32>}, {pipeline_mode = #tpu.pipeline_mode<synchronous>, transform_indices = @transform_18, window_bounds = array<i64: 2, 1, 32>}, {pipeline_mode = #tpu.pipeline_mode<synchronous>, transform_indices = @transform_19, window_bounds = array<i64: 2, 1, 32>}, {pipeline_mode = #tpu.pipeline_mode<synchronous>, transform_indices = @transform_20, window_bounds = array<i64: 32, 128>}, {pipeline_mode = #tpu.pipeline_mode<synchronous>, transform_indices = @transform_21, window_bounds = array<i64: 1, 128>}, {transform_indices = @transform_22, window_bounds = array<i64: 1, 16, 128>}]} {
    %c0 = arith.constant 0 : index
    %c0_0 = arith.constant 0 : index
    %0 = vector.load %arg1[%c0, %c0_0] : memref<16x1xi32, #tpu.memory_space<vmem>>, vector<16x1xi32>
    %1 = tpu.iota {dimensions = array<i32: 1>} : vector<16x128xi32>
    %2 = vector.broadcast %0 : vector<16x1xi32> to vector<16x128xi32>
    %3 = arith.cmpi eq, %1, %2 : vector<16x128xi32>
    %4 = arith.extui %3 : vector<16x128xi1> to vector<16x128xi32>
    %5 = arith.sitofp %4 : vector<16x128xi32> to vector<16x128xf32>
    %6 = arith.truncf %5 : vector<16x128xf32> to vector<16x128xbf16>
    %c0_1 = arith.constant 0 : index
    %c0_2 = arith.constant 0 : index
    %7 = vector.load %arg3[%c0_1, %c0_2] : memref<128x32xbf16, #tpu.memory_space<vmem>>, vector<128x32xbf16>
    %cst = arith.constant dense<0.000000e+00> : vector<16x32xf32>
    %8 = tpu.matmul %6, %7, %cst {dimension_numbers = #tpu.dot_dimension_numbers<[1], [0], [0], [1], [0, 0, 1, 1], [], []>} : vector<16x128xbf16>, vector<128x32xbf16>, vector<16x32xf32> -> vector<16x32xf32>
    %cst_3 = arith.constant 5.65685415 : f32
    %9 = vector.broadcast %cst_3 : f32 to vector<16x32xf32>
    %10 = arith.mulf %8, %9 : vector<16x32xf32>
    %c0_4 = arith.constant 0 : index
    %c0_5 = arith.constant 0 : index
    %11 = vector.load %arg4[%c0_4, %c0_5] : memref<16x32xf32, #tpu.memory_space<vmem>>, vector<16x32xf32>
    %12 = arith.addf %10, %11 : vector<16x32xf32>
    %c0_6 = arith.constant 0 : index
    %c0_7 = arith.constant 0 : index
    %c0_8 = arith.constant 0 : index
    %13 = vector.load %arg2[%c0_6, %c0_7, %c0_8] : memref<1x1x16xi32, #tpu.memory_space<vmem>>, vector<1x1x16xi32>
    %14 = vector.shape_cast %13 : vector<1x1x16xi32> to vector<1x16xi32>
    %c0_i32 = arith.constant 0 : i32
    %15 = vector.broadcast %c0_i32 : i32 to vector<1x16xi32>
    %16 = arith.cmpi eq, %14, %15 : vector<1x16xi32>
    %cst_9 = arith.constant -1.000000e+09 : f32
    %cst_10 = arith.constant 0.000000e+00 : f32
    %17 = vector.broadcast %cst_9 : f32 to vector<1x16xf32>
    %18 = vector.broadcast %cst_10 : f32 to vector<1x16xf32>
    %19 = arith.select %16, %17, %18 : vector<1x16xi1>, vector<1x16xf32>
    %20 = arith.truncf %12 : vector<16x32xf32> to vector<16x32xbf16>
    %cst_11 = arith.constant 0.000000e+00 : f32
    %21 = vector.broadcast %cst_11 : f32 to vector<16x32xf32>
    %c0_12 = arith.constant 0 : index
    %c0_13 = arith.constant 0 : index
    %c0_14 = arith.constant 0 : index
    %c0_15 = arith.constant 0 : index
    %22 = vector.load %arg5[%c0_12, %c0_13, %c0_14, %c0_15] : memref<2x2x32x16xbf16, #tpu.memory_space<vmem>>, vector<1x1x32x16xbf16>
    %23 = vector.shape_cast %22 : vector<1x1x32x16xbf16> to vector<32x16xbf16>
    %cst_16 = arith.constant dense<0.000000e+00> : vector<16x16xf32>
    %24 = tpu.matmul %20, %23, %cst_16 {dimension_numbers = #tpu.dot_dimension_numbers<[1], [0], [0], [1], [0, 0, 1, 1], [], []>} : vector<16x32xbf16>, vector<32x16xbf16>, vector<16x16xf32> -> vector<16x16xf32>
    %c0_17 = arith.constant 0 : index
    %c0_18 = arith.constant 0 : index
    %c0_19 = arith.constant 0 : index
    %c0_20 = arith.constant 0 : index
    %25 = vector.load %arg6[%c0_17, %c0_18, %c0_19, %c0_20] : memref<2x2x1x16xf32, #tpu.memory_space<vmem>>, vector<1x1x1x16xf32>
    %26 = vector.shape_cast %25 : vector<1x1x1x16xf32> to vector<1x16xf32>
    %27 = vector.broadcast %26 : vector<1x16xf32> to vector<16x16xf32>
    %28 = arith.addf %24, %27 : vector<16x16xf32>
    %c0_21 = arith.constant 0 : index
    %c0_22 = arith.constant 0 : index
    %c0_23 = arith.constant 0 : index
    %c0_24 = arith.constant 0 : index
    %29 = vector.load %arg7[%c0_21, %c0_22, %c0_23, %c0_24] : memref<2x2x32x16xbf16, #tpu.memory_space<vmem>>, vector<1x1x32x16xbf16>
    %30 = vector.shape_cast %29 : vector<1x1x32x16xbf16> to vector<32x16xbf16>
    %cst_25 = arith.constant dense<0.000000e+00> : vector<16x16xf32>
    %31 = tpu.matmul %20, %30, %cst_25 {dimension_numbers = #tpu.dot_dimension_numbers<[1], [0], [0], [1], [0, 0, 1, 1], [], []>} : vector<16x32xbf16>, vector<32x16xbf16>, vector<16x16xf32> -> vector<16x16xf32>
    %c0_26 = arith.constant 0 : index
    %c0_27 = arith.constant 0 : index
    %c0_28 = arith.constant 0 : index
    %c0_29 = arith.constant 0 : index
    %32 = vector.load %arg8[%c0_26, %c0_27, %c0_28, %c0_29] : memref<2x2x1x16xf32, #tpu.memory_space<vmem>>, vector<1x1x1x16xf32>
    %33 = vector.shape_cast %32 : vector<1x1x1x16xf32> to vector<1x16xf32>
    %34 = vector.broadcast %33 : vector<1x16xf32> to vector<16x16xf32>
    %35 = arith.addf %31, %34 : vector<16x16xf32>
    %c0_30 = arith.constant 0 : index
    %c0_31 = arith.constant 0 : index
    %c0_32 = arith.constant 0 : index
    %c0_33 = arith.constant 0 : index
    %36 = vector.load %arg9[%c0_30, %c0_31, %c0_32, %c0_33] : memref<2x2x32x16xbf16, #tpu.memory_space<vmem>>, vector<1x1x32x16xbf16>
    %37 = vector.shape_cast %36 : vector<1x1x32x16xbf16> to vector<32x16xbf16>
    %cst_34 = arith.constant dense<0.000000e+00> : vector<16x16xf32>
    %38 = tpu.matmul %20, %37, %cst_34 {dimension_numbers = #tpu.dot_dimension_numbers<[1], [0], [0], [1], [0, 0, 1, 1], [], []>} : vector<16x32xbf16>, vector<32x16xbf16>, vector<16x16xf32> -> vector<16x16xf32>
    %c0_35 = arith.constant 0 : index
    %c0_36 = arith.constant 0 : index
    %c0_37 = arith.constant 0 : index
    %c0_38 = arith.constant 0 : index
    %39 = vector.load %arg10[%c0_35, %c0_36, %c0_37, %c0_38] : memref<2x2x1x16xf32, #tpu.memory_space<vmem>>, vector<1x1x1x16xf32>
    %40 = vector.shape_cast %39 : vector<1x1x1x16xf32> to vector<1x16xf32>
    %41 = vector.broadcast %40 : vector<1x16xf32> to vector<16x16xf32>
    %42 = arith.addf %38, %41 : vector<16x16xf32>
    %43 = arith.truncf %28 : vector<16x16xf32> to vector<16x16xbf16>
    %44 = arith.truncf %35 : vector<16x16xf32> to vector<16x16xbf16>
    %cst_39 = arith.constant dense<0.000000e+00> : vector<16x16xf32>
    %45 = tpu.matmul %43, %44, %cst_39 {dimension_numbers = #tpu.dot_dimension_numbers<[1], [1], [0], [0], [0, 0, 1, 0], [], []>} : vector<16x16xbf16>, vector<16x16xbf16>, vector<16x16xf32> -> vector<16x16xf32>
    %cst_40 = arith.constant 2.500000e-01 : f32
    %46 = vector.broadcast %cst_40 : f32 to vector<16x16xf32>
    %47 = arith.mulf %45, %46 : vector<16x16xf32>
    %48 = vector.broadcast %19 : vector<1x16xf32> to vector<16x16xf32>
    %49 = arith.addf %47, %48 : vector<16x16xf32>
    %cst_41 = arith.constant dense<0xFF800000> : vector<16xf32>
    %50 = vector.multi_reduction <maximumf>, %49, %cst_41 [1] : vector<16x16xf32> to vector<16xf32>
    %51 = vector.shape_cast %50 : vector<16xf32> to vector<16x1xf32>
    %52 = vector.broadcast %51 : vector<16x1xf32> to vector<16x16xf32>
    %53 = arith.subf %49, %52 : vector<16x16xf32>
    %54 = math.exp %53 : vector<16x16xf32>
    %cst_42 = arith.constant dense<0.000000e+00> : vector<16xf32>
    %55 = vector.multi_reduction <add>, %54, %cst_42 [1] : vector<16x16xf32> to vector<16xf32>
    %56 = vector.shape_cast %55 : vector<16xf32> to vector<16x1xf32>
    %57 = tpu.reciprocal %56 {approx = true} : vector<16x1xf32> -> vector<16x1xf32>
    %58 = vector.broadcast %57 : vector<16x1xf32> to vector<16x16xf32>
    %59 = arith.mulf %54, %58 : vector<16x16xf32>
    %60 = arith.truncf %59 : vector<16x16xf32> to vector<16x16xbf16>
    %61 = arith.truncf %42 : vector<16x16xf32> to vector<16x16xbf16>
    %cst_43 = arith.constant dense<0.000000e+00> : vector<16x16xf32>
    %62 = tpu.matmul %60, %61, %cst_43 {dimension_numbers = #tpu.dot_dimension_numbers<[1], [0], [0], [1], [0, 0, 1, 1], [], []>} : vector<16x16xbf16>, vector<16x16xbf16>, vector<16x16xf32> -> vector<16x16xf32>
    %63 = arith.truncf %62 : vector<16x16xf32> to vector<16x16xbf16>
    %c0_44 = arith.constant 0 : index
    %c0_45 = arith.constant 0 : index
    %c0_46 = arith.constant 0 : index
    %c0_47 = arith.constant 0 : index
    %64 = vector.load %arg11[%c0_44, %c0_45, %c0_46, %c0_47] : memref<2x2x16x32xbf16, #tpu.memory_space<vmem>>, vector<1x1x16x32xbf16>
    %65 = vector.shape_cast %64 : vector<1x1x16x32xbf16> to vector<16x32xbf16>
    %cst_48 = arith.constant dense<0.000000e+00> : vector<16x32xf32>
    %66 = tpu.matmul %63, %65, %cst_48 {dimension_numbers = #tpu.dot_dimension_numbers<[1], [0], [0], [1], [0, 0, 1, 1], [], []>} : vector<16x16xbf16>, vector<16x32xbf16>, vector<16x32xf32> -> vector<16x32xf32>
    %67 = arith.addf %21, %66 : vector<16x32xf32>
    %c0_49 = arith.constant 0 : index
    %c1 = arith.constant 1 : index
    %c0_50 = arith.constant 0 : index
    %c0_51 = arith.constant 0 : index
    %68 = vector.load %arg5[%c0_49, %c1, %c0_50, %c0_51] : memref<2x2x32x16xbf16, #tpu.memory_space<vmem>>, vector<1x1x32x16xbf16>
    %69 = vector.shape_cast %68 : vector<1x1x32x16xbf16> to vector<32x16xbf16>
    %cst_52 = arith.constant dense<0.000000e+00> : vector<16x16xf32>
    %70 = tpu.matmul %20, %69, %cst_52 {dimension_numbers = #tpu.dot_dimension_numbers<[1], [0], [0], [1], [0, 0, 1, 1], [], []>} : vector<16x32xbf16>, vector<32x16xbf16>, vector<16x16xf32> -> vector<16x16xf32>
    %c0_53 = arith.constant 0 : index
    %c1_54 = arith.constant 1 : index
    %c0_55 = arith.constant 0 : index
    %c0_56 = arith.constant 0 : index
    %71 = vector.load %arg6[%c0_53, %c1_54, %c0_55, %c0_56] : memref<2x2x1x16xf32, #tpu.memory_space<vmem>>, vector<1x1x1x16xf32>
    %72 = vector.shape_cast %71 : vector<1x1x1x16xf32> to vector<1x16xf32>
    %73 = vector.broadcast %72 : vector<1x16xf32> to vector<16x16xf32>
    %74 = arith.addf %70, %73 : vector<16x16xf32>
    %c0_57 = arith.constant 0 : index
    %c1_58 = arith.constant 1 : index
    %c0_59 = arith.constant 0 : index
    %c0_60 = arith.constant 0 : index
    %75 = vector.load %arg7[%c0_57, %c1_58, %c0_59, %c0_60] : memref<2x2x32x16xbf16, #tpu.memory_space<vmem>>, vector<1x1x32x16xbf16>
    %76 = vector.shape_cast %75 : vector<1x1x32x16xbf16> to vector<32x16xbf16>
    %cst_61 = arith.constant dense<0.000000e+00> : vector<16x16xf32>
    %77 = tpu.matmul %20, %76, %cst_61 {dimension_numbers = #tpu.dot_dimension_numbers<[1], [0], [0], [1], [0, 0, 1, 1], [], []>} : vector<16x32xbf16>, vector<32x16xbf16>, vector<16x16xf32> -> vector<16x16xf32>
    %c0_62 = arith.constant 0 : index
    %c1_63 = arith.constant 1 : index
    %c0_64 = arith.constant 0 : index
    %c0_65 = arith.constant 0 : index
    %78 = vector.load %arg8[%c0_62, %c1_63, %c0_64, %c0_65] : memref<2x2x1x16xf32, #tpu.memory_space<vmem>>, vector<1x1x1x16xf32>
    %79 = vector.shape_cast %78 : vector<1x1x1x16xf32> to vector<1x16xf32>
    %80 = vector.broadcast %79 : vector<1x16xf32> to vector<16x16xf32>
    %81 = arith.addf %77, %80 : vector<16x16xf32>
    %c0_66 = arith.constant 0 : index
    %c1_67 = arith.constant 1 : index
    %c0_68 = arith.constant 0 : index
    %c0_69 = arith.constant 0 : index
    %82 = vector.load %arg9[%c0_66, %c1_67, %c0_68, %c0_69] : memref<2x2x32x16xbf16, #tpu.memory_space<vmem>>, vector<1x1x32x16xbf16>
    %83 = vector.shape_cast %82 : vector<1x1x32x16xbf16> to vector<32x16xbf16>
    %cst_70 = arith.constant dense<0.000000e+00> : vector<16x16xf32>
    %84 = tpu.matmul %20, %83, %cst_70 {dimension_numbers = #tpu.dot_dimension_numbers<[1], [0], [0], [1], [0, 0, 1, 1], [], []>} : vector<16x32xbf16>, vector<32x16xbf16>, vector<16x16xf32> -> vector<16x16xf32>
    %c0_71 = arith.constant 0 : index
    %c1_72 = arith.constant 1 : index
    %c0_73 = arith.constant 0 : index
    %c0_74 = arith.constant 0 : index
    %85 = vector.load %arg10[%c0_71, %c1_72, %c0_73, %c0_74] : memref<2x2x1x16xf32, #tpu.memory_space<vmem>>, vector<1x1x1x16xf32>
    %86 = vector.shape_cast %85 : vector<1x1x1x16xf32> to vector<1x16xf32>
    %87 = vector.broadcast %86 : vector<1x16xf32> to vector<16x16xf32>
    %88 = arith.addf %84, %87 : vector<16x16xf32>
    %89 = arith.truncf %74 : vector<16x16xf32> to vector<16x16xbf16>
    %90 = arith.truncf %81 : vector<16x16xf32> to vector<16x16xbf16>
    %cst_75 = arith.constant dense<0.000000e+00> : vector<16x16xf32>
    %91 = tpu.matmul %89, %90, %cst_75 {dimension_numbers = #tpu.dot_dimension_numbers<[1], [1], [0], [0], [0, 0, 1, 0], [], []>} : vector<16x16xbf16>, vector<16x16xbf16>, vector<16x16xf32> -> vector<16x16xf32>
    %cst_76 = arith.constant 2.500000e-01 : f32
    %92 = vector.broadcast %cst_76 : f32 to vector<16x16xf32>
    %93 = arith.mulf %91, %92 : vector<16x16xf32>
    %94 = vector.broadcast %19 : vector<1x16xf32> to vector<16x16xf32>
    %95 = arith.addf %93, %94 : vector<16x16xf32>
    %cst_77 = arith.constant dense<0xFF800000> : vector<16xf32>
    %96 = vector.multi_reduction <maximumf>, %95, %cst_77 [1] : vector<16x16xf32> to vector<16xf32>
    %97 = vector.shape_cast %96 : vector<16xf32> to vector<16x1xf32>
    %98 = vector.broadcast %97 : vector<16x1xf32> to vector<16x16xf32>
    %99 = arith.subf %95, %98 : vector<16x16xf32>
    %100 = math.exp %99 : vector<16x16xf32>
    %cst_78 = arith.constant dense<0.000000e+00> : vector<16xf32>
    %101 = vector.multi_reduction <add>, %100, %cst_78 [1] : vector<16x16xf32> to vector<16xf32>
    %102 = vector.shape_cast %101 : vector<16xf32> to vector<16x1xf32>
    %103 = tpu.reciprocal %102 {approx = true} : vector<16x1xf32> -> vector<16x1xf32>
    %104 = vector.broadcast %103 : vector<16x1xf32> to vector<16x16xf32>
    %105 = arith.mulf %100, %104 : vector<16x16xf32>
    %106 = arith.truncf %105 : vector<16x16xf32> to vector<16x16xbf16>
    %107 = arith.truncf %88 : vector<16x16xf32> to vector<16x16xbf16>
    %cst_79 = arith.constant dense<0.000000e+00> : vector<16x16xf32>
    %108 = tpu.matmul %106, %107, %cst_79 {dimension_numbers = #tpu.dot_dimension_numbers<[1], [0], [0], [1], [0, 0, 1, 1], [], []>} : vector<16x16xbf16>, vector<16x16xbf16>, vector<16x16xf32> -> vector<16x16xf32>
    %109 = arith.truncf %108 : vector<16x16xf32> to vector<16x16xbf16>
    %c0_80 = arith.constant 0 : index
    %c1_81 = arith.constant 1 : index
    %c0_82 = arith.constant 0 : index
    %c0_83 = arith.constant 0 : index
    %110 = vector.load %arg11[%c0_80, %c1_81, %c0_82, %c0_83] : memref<2x2x16x32xbf16, #tpu.memory_space<vmem>>, vector<1x1x16x32xbf16>
    %111 = vector.shape_cast %110 : vector<1x1x16x32xbf16> to vector<16x32xbf16>
    %cst_84 = arith.constant dense<0.000000e+00> : vector<16x32xf32>
    %112 = tpu.matmul %109, %111, %cst_84 {dimension_numbers = #tpu.dot_dimension_numbers<[1], [0], [0], [1], [0, 0, 1, 1], [], []>} : vector<16x16xbf16>, vector<16x32xbf16>, vector<16x32xf32> -> vector<16x32xf32>
    %113 = arith.addf %67, %112 : vector<16x32xf32>
    %c0_85 = arith.constant 0 : index
    %c0_86 = arith.constant 0 : index
    %c0_87 = arith.constant 0 : index
    %114 = vector.load %arg12[%c0_85, %c0_86, %c0_87] : memref<2x1x32xf32, #tpu.memory_space<vmem>>, vector<1x1x32xf32>
    %115 = vector.shape_cast %114 : vector<1x1x32xf32> to vector<1x32xf32>
    %116 = vector.broadcast %115 : vector<1x32xf32> to vector<16x32xf32>
    %117 = arith.addf %113, %116 : vector<16x32xf32>
    %118 = arith.addf %12, %117 : vector<16x32xf32>
    %c0_88 = arith.constant 0 : index
    %c0_89 = arith.constant 0 : index
    %c0_90 = arith.constant 0 : index
    %119 = vector.load %arg13[%c0_88, %c0_89, %c0_90] : memref<2x1x32xf32, #tpu.memory_space<vmem>>, vector<1x1x32xf32>
    %120 = vector.shape_cast %119 : vector<1x1x32xf32> to vector<1x32xf32>
    %c0_91 = arith.constant 0 : index
    %c0_92 = arith.constant 0 : index
    %c0_93 = arith.constant 0 : index
    %121 = vector.load %arg14[%c0_91, %c0_92, %c0_93] : memref<2x1x32xf32, #tpu.memory_space<vmem>>, vector<1x1x32xf32>
    %122 = vector.shape_cast %121 : vector<1x1x32xf32> to vector<1x32xf32>
    %cst_94 = arith.constant dense<0.000000e+00> : vector<16xf32>
    %123 = vector.multi_reduction <add>, %118, %cst_94 [1] : vector<16x32xf32> to vector<16xf32>
    %124 = vector.shape_cast %123 : vector<16xf32> to vector<16x1xf32>
    %cst_95 = arith.constant 3.200000e+01 : f32
    %125 = vector.broadcast %cst_95 : f32 to vector<16x1xf32>
    %126 = arith.divf %124, %125 : vector<16x1xf32>
    %127 = vector.broadcast %126 : vector<16x1xf32> to vector<16x32xf32>
    %128 = arith.subf %118, %127 : vector<16x32xf32>
    %129 = arith.mulf %128, %128 : vector<16x32xf32>
    %cst_96 = arith.constant dense<0.000000e+00> : vector<16xf32>
    %130 = vector.multi_reduction <add>, %129, %cst_96 [1] : vector<16x32xf32> to vector<16xf32>
    %131 = vector.shape_cast %130 : vector<16xf32> to vector<16x1xf32>
    %cst_97 = arith.constant 3.200000e+01 : f32
    %132 = vector.broadcast %cst_97 : f32 to vector<16x1xf32>
    %133 = arith.divf %131, %132 : vector<16x1xf32>
    %cst_98 = arith.constant 9.99999974E-6 : f32
    %134 = vector.broadcast %cst_98 : f32 to vector<16x1xf32>
    %135 = arith.addf %133, %134 : vector<16x1xf32>
    %136 = math.rsqrt %135 : vector<16x1xf32>
    %137 = vector.broadcast %136 : vector<16x1xf32> to vector<16x32xf32>
    %138 = arith.mulf %128, %137 : vector<16x32xf32>
    %139 = vector.broadcast %120 : vector<1x32xf32> to vector<16x32xf32>
    %140 = arith.mulf %138, %139 : vector<16x32xf32>
    %141 = vector.broadcast %122 : vector<1x32xf32> to vector<16x32xf32>
    %142 = arith.addf %140, %141 : vector<16x32xf32>
    %143 = arith.truncf %142 : vector<16x32xf32> to vector<16x32xbf16>
    %c0_99 = arith.constant 0 : index
    %c0_100 = arith.constant 0 : index
    %c0_101 = arith.constant 0 : index
    %144 = vector.load %arg15[%c0_99, %c0_100, %c0_101] : memref<2x32x64xbf16, #tpu.memory_space<vmem>>, vector<1x32x64xbf16>
    %145 = vector.shape_cast %144 : vector<1x32x64xbf16> to vector<32x64xbf16>
    %cst_102 = arith.constant dense<0.000000e+00> : vector<16x64xf32>
    %146 = tpu.matmul %143, %145, %cst_102 {dimension_numbers = #tpu.dot_dimension_numbers<[1], [0], [0], [1], [0, 0, 1, 1], [], []>} : vector<16x32xbf16>, vector<32x64xbf16>, vector<16x64xf32> -> vector<16x64xf32>
    %c0_103 = arith.constant 0 : index
    %c0_104 = arith.constant 0 : index
    %c0_105 = arith.constant 0 : index
    %147 = vector.load %arg16[%c0_103, %c0_104, %c0_105] : memref<2x1x64xf32, #tpu.memory_space<vmem>>, vector<1x1x64xf32>
    %148 = vector.shape_cast %147 : vector<1x1x64xf32> to vector<1x64xf32>
    %149 = vector.broadcast %148 : vector<1x64xf32> to vector<16x64xf32>
    %150 = arith.addf %146, %149 : vector<16x64xf32>
    %cst_106 = arith.constant 0.000000e+00 : f32
    %151 = vector.broadcast %cst_106 : f32 to vector<16x64xf32>
    %152 = arith.maximumf %150, %151 : vector<16x64xf32>
    %153 = arith.truncf %152 : vector<16x64xf32> to vector<16x64xbf16>
    %c0_107 = arith.constant 0 : index
    %c0_108 = arith.constant 0 : index
    %c0_109 = arith.constant 0 : index
    %154 = vector.load %arg17[%c0_107, %c0_108, %c0_109] : memref<2x64x32xbf16, #tpu.memory_space<vmem>>, vector<1x64x32xbf16>
    %155 = vector.shape_cast %154 : vector<1x64x32xbf16> to vector<64x32xbf16>
    %cst_110 = arith.constant dense<0.000000e+00> : vector<16x32xf32>
    %156 = tpu.matmul %153, %155, %cst_110 {dimension_numbers = #tpu.dot_dimension_numbers<[1], [0], [0], [1], [0, 0, 1, 1], [], []>} : vector<16x64xbf16>, vector<64x32xbf16>, vector<16x32xf32> -> vector<16x32xf32>
    %c0_111 = arith.constant 0 : index
    %c0_112 = arith.constant 0 : index
    %c0_113 = arith.constant 0 : index
    %157 = vector.load %arg18[%c0_111, %c0_112, %c0_113] : memref<2x1x32xf32, #tpu.memory_space<vmem>>, vector<1x1x32xf32>
    %158 = vector.shape_cast %157 : vector<1x1x32xf32> to vector<1x32xf32>
    %159 = vector.broadcast %158 : vector<1x32xf32> to vector<16x32xf32>
    %160 = arith.addf %156, %159 : vector<16x32xf32>
    %161 = arith.addf %142, %160 : vector<16x32xf32>
    %c0_114 = arith.constant 0 : index
    %c0_115 = arith.constant 0 : index
    %c0_116 = arith.constant 0 : index
    %162 = vector.load %arg19[%c0_114, %c0_115, %c0_116] : memref<2x1x32xf32, #tpu.memory_space<vmem>>, vector<1x1x32xf32>
    %163 = vector.shape_cast %162 : vector<1x1x32xf32> to vector<1x32xf32>
    %c0_117 = arith.constant 0 : index
    %c0_118 = arith.constant 0 : index
    %c0_119 = arith.constant 0 : index
    %164 = vector.load %arg20[%c0_117, %c0_118, %c0_119] : memref<2x1x32xf32, #tpu.memory_space<vmem>>, vector<1x1x32xf32>
    %165 = vector.shape_cast %164 : vector<1x1x32xf32> to vector<1x32xf32>
    %cst_120 = arith.constant dense<0.000000e+00> : vector<16xf32>
    %166 = vector.multi_reduction <add>, %161, %cst_120 [1] : vector<16x32xf32> to vector<16xf32>
    %167 = vector.shape_cast %166 : vector<16xf32> to vector<16x1xf32>
    %cst_121 = arith.constant 3.200000e+01 : f32
    %168 = vector.broadcast %cst_121 : f32 to vector<16x1xf32>
    %169 = arith.divf %167, %168 : vector<16x1xf32>
    %170 = vector.broadcast %169 : vector<16x1xf32> to vector<16x32xf32>
    %171 = arith.subf %161, %170 : vector<16x32xf32>
    %172 = arith.mulf %171, %171 : vector<16x32xf32>
    %cst_122 = arith.constant dense<0.000000e+00> : vector<16xf32>
    %173 = vector.multi_reduction <add>, %172, %cst_122 [1] : vector<16x32xf32> to vector<16xf32>
    %174 = vector.shape_cast %173 : vector<16xf32> to vector<16x1xf32>
    %cst_123 = arith.constant 3.200000e+01 : f32
    %175 = vector.broadcast %cst_123 : f32 to vector<16x1xf32>
    %176 = arith.divf %174, %175 : vector<16x1xf32>
    %cst_124 = arith.constant 9.99999974E-6 : f32
    %177 = vector.broadcast %cst_124 : f32 to vector<16x1xf32>
    %178 = arith.addf %176, %177 : vector<16x1xf32>
    %179 = math.rsqrt %178 : vector<16x1xf32>
    %180 = vector.broadcast %179 : vector<16x1xf32> to vector<16x32xf32>
    %181 = arith.mulf %171, %180 : vector<16x32xf32>
    %182 = vector.broadcast %163 : vector<1x32xf32> to vector<16x32xf32>
    %183 = arith.mulf %181, %182 : vector<16x32xf32>
    %184 = vector.broadcast %165 : vector<1x32xf32> to vector<16x32xf32>
    %185 = arith.addf %183, %184 : vector<16x32xf32>
    %186 = arith.addf %185, %11 : vector<16x32xf32>
    %187 = arith.truncf %186 : vector<16x32xf32> to vector<16x32xbf16>
    %cst_125 = arith.constant 0.000000e+00 : f32
    %188 = vector.broadcast %cst_125 : f32 to vector<16x32xf32>
    %c1_126 = arith.constant 1 : index
    %c0_127 = arith.constant 0 : index
    %c0_128 = arith.constant 0 : index
    %c0_129 = arith.constant 0 : index
    %189 = vector.load %arg5[%c1_126, %c0_127, %c0_128, %c0_129] : memref<2x2x32x16xbf16, #tpu.memory_space<vmem>>, vector<1x1x32x16xbf16>
    %190 = vector.shape_cast %189 : vector<1x1x32x16xbf16> to vector<32x16xbf16>
    %cst_130 = arith.constant dense<0.000000e+00> : vector<16x16xf32>
    %191 = tpu.matmul %187, %190, %cst_130 {dimension_numbers = #tpu.dot_dimension_numbers<[1], [0], [0], [1], [0, 0, 1, 1], [], []>} : vector<16x32xbf16>, vector<32x16xbf16>, vector<16x16xf32> -> vector<16x16xf32>
    %c1_131 = arith.constant 1 : index
    %c0_132 = arith.constant 0 : index
    %c0_133 = arith.constant 0 : index
    %c0_134 = arith.constant 0 : index
    %192 = vector.load %arg6[%c1_131, %c0_132, %c0_133, %c0_134] : memref<2x2x1x16xf32, #tpu.memory_space<vmem>>, vector<1x1x1x16xf32>
    %193 = vector.shape_cast %192 : vector<1x1x1x16xf32> to vector<1x16xf32>
    %194 = vector.broadcast %193 : vector<1x16xf32> to vector<16x16xf32>
    %195 = arith.addf %191, %194 : vector<16x16xf32>
    %c1_135 = arith.constant 1 : index
    %c0_136 = arith.constant 0 : index
    %c0_137 = arith.constant 0 : index
    %c0_138 = arith.constant 0 : index
    %196 = vector.load %arg7[%c1_135, %c0_136, %c0_137, %c0_138] : memref<2x2x32x16xbf16, #tpu.memory_space<vmem>>, vector<1x1x32x16xbf16>
    %197 = vector.shape_cast %196 : vector<1x1x32x16xbf16> to vector<32x16xbf16>
    %cst_139 = arith.constant dense<0.000000e+00> : vector<16x16xf32>
    %198 = tpu.matmul %187, %197, %cst_139 {dimension_numbers = #tpu.dot_dimension_numbers<[1], [0], [0], [1], [0, 0, 1, 1], [], []>} : vector<16x32xbf16>, vector<32x16xbf16>, vector<16x16xf32> -> vector<16x16xf32>
    %c1_140 = arith.constant 1 : index
    %c0_141 = arith.constant 0 : index
    %c0_142 = arith.constant 0 : index
    %c0_143 = arith.constant 0 : index
    %199 = vector.load %arg8[%c1_140, %c0_141, %c0_142, %c0_143] : memref<2x2x1x16xf32, #tpu.memory_space<vmem>>, vector<1x1x1x16xf32>
    %200 = vector.shape_cast %199 : vector<1x1x1x16xf32> to vector<1x16xf32>
    %201 = vector.broadcast %200 : vector<1x16xf32> to vector<16x16xf32>
    %202 = arith.addf %198, %201 : vector<16x16xf32>
    %c1_144 = arith.constant 1 : index
    %c0_145 = arith.constant 0 : index
    %c0_146 = arith.constant 0 : index
    %c0_147 = arith.constant 0 : index
    %203 = vector.load %arg9[%c1_144, %c0_145, %c0_146, %c0_147] : memref<2x2x32x16xbf16, #tpu.memory_space<vmem>>, vector<1x1x32x16xbf16>
    %204 = vector.shape_cast %203 : vector<1x1x32x16xbf16> to vector<32x16xbf16>
    %cst_148 = arith.constant dense<0.000000e+00> : vector<16x16xf32>
    %205 = tpu.matmul %187, %204, %cst_148 {dimension_numbers = #tpu.dot_dimension_numbers<[1], [0], [0], [1], [0, 0, 1, 1], [], []>} : vector<16x32xbf16>, vector<32x16xbf16>, vector<16x16xf32> -> vector<16x16xf32>
    %c1_149 = arith.constant 1 : index
    %c0_150 = arith.constant 0 : index
    %c0_151 = arith.constant 0 : index
    %c0_152 = arith.constant 0 : index
    %206 = vector.load %arg10[%c1_149, %c0_150, %c0_151, %c0_152] : memref<2x2x1x16xf32, #tpu.memory_space<vmem>>, vector<1x1x1x16xf32>
    %207 = vector.shape_cast %206 : vector<1x1x1x16xf32> to vector<1x16xf32>
    %208 = vector.broadcast %207 : vector<1x16xf32> to vector<16x16xf32>
    %209 = arith.addf %205, %208 : vector<16x16xf32>
    %210 = arith.truncf %195 : vector<16x16xf32> to vector<16x16xbf16>
    %211 = arith.truncf %202 : vector<16x16xf32> to vector<16x16xbf16>
    %cst_153 = arith.constant dense<0.000000e+00> : vector<16x16xf32>
    %212 = tpu.matmul %210, %211, %cst_153 {dimension_numbers = #tpu.dot_dimension_numbers<[1], [1], [0], [0], [0, 0, 1, 0], [], []>} : vector<16x16xbf16>, vector<16x16xbf16>, vector<16x16xf32> -> vector<16x16xf32>
    %cst_154 = arith.constant 2.500000e-01 : f32
    %213 = vector.broadcast %cst_154 : f32 to vector<16x16xf32>
    %214 = arith.mulf %212, %213 : vector<16x16xf32>
    %215 = vector.broadcast %19 : vector<1x16xf32> to vector<16x16xf32>
    %216 = arith.addf %214, %215 : vector<16x16xf32>
    %cst_155 = arith.constant dense<0xFF800000> : vector<16xf32>
    %217 = vector.multi_reduction <maximumf>, %216, %cst_155 [1] : vector<16x16xf32> to vector<16xf32>
    %218 = vector.shape_cast %217 : vector<16xf32> to vector<16x1xf32>
    %219 = vector.broadcast %218 : vector<16x1xf32> to vector<16x16xf32>
    %220 = arith.subf %216, %219 : vector<16x16xf32>
    %221 = math.exp %220 : vector<16x16xf32>
    %cst_156 = arith.constant dense<0.000000e+00> : vector<16xf32>
    %222 = vector.multi_reduction <add>, %221, %cst_156 [1] : vector<16x16xf32> to vector<16xf32>
    %223 = vector.shape_cast %222 : vector<16xf32> to vector<16x1xf32>
    %224 = tpu.reciprocal %223 {approx = true} : vector<16x1xf32> -> vector<16x1xf32>
    %225 = vector.broadcast %224 : vector<16x1xf32> to vector<16x16xf32>
    %226 = arith.mulf %221, %225 : vector<16x16xf32>
    %227 = arith.truncf %226 : vector<16x16xf32> to vector<16x16xbf16>
    %228 = arith.truncf %209 : vector<16x16xf32> to vector<16x16xbf16>
    %cst_157 = arith.constant dense<0.000000e+00> : vector<16x16xf32>
    %229 = tpu.matmul %227, %228, %cst_157 {dimension_numbers = #tpu.dot_dimension_numbers<[1], [0], [0], [1], [0, 0, 1, 1], [], []>} : vector<16x16xbf16>, vector<16x16xbf16>, vector<16x16xf32> -> vector<16x16xf32>
    %230 = arith.truncf %229 : vector<16x16xf32> to vector<16x16xbf16>
    %c1_158 = arith.constant 1 : index
    %c0_159 = arith.constant 0 : index
    %c0_160 = arith.constant 0 : index
    %c0_161 = arith.constant 0 : index
    %231 = vector.load %arg11[%c1_158, %c0_159, %c0_160, %c0_161] : memref<2x2x16x32xbf16, #tpu.memory_space<vmem>>, vector<1x1x16x32xbf16>
    %232 = vector.shape_cast %231 : vector<1x1x16x32xbf16> to vector<16x32xbf16>
    %cst_162 = arith.constant dense<0.000000e+00> : vector<16x32xf32>
    %233 = tpu.matmul %230, %232, %cst_162 {dimension_numbers = #tpu.dot_dimension_numbers<[1], [0], [0], [1], [0, 0, 1, 1], [], []>} : vector<16x16xbf16>, vector<16x32xbf16>, vector<16x32xf32> -> vector<16x32xf32>
    %234 = arith.addf %188, %233 : vector<16x32xf32>
    %c1_163 = arith.constant 1 : index
    %c1_164 = arith.constant 1 : index
    %c0_165 = arith.constant 0 : index
    %c0_166 = arith.constant 0 : index
    %235 = vector.load %arg5[%c1_163, %c1_164, %c0_165, %c0_166] : memref<2x2x32x16xbf16, #tpu.memory_space<vmem>>, vector<1x1x32x16xbf16>
    %236 = vector.shape_cast %235 : vector<1x1x32x16xbf16> to vector<32x16xbf16>
    %cst_167 = arith.constant dense<0.000000e+00> : vector<16x16xf32>
    %237 = tpu.matmul %187, %236, %cst_167 {dimension_numbers = #tpu.dot_dimension_numbers<[1], [0], [0], [1], [0, 0, 1, 1], [], []>} : vector<16x32xbf16>, vector<32x16xbf16>, vector<16x16xf32> -> vector<16x16xf32>
    %c1_168 = arith.constant 1 : index
    %c1_169 = arith.constant 1 : index
    %c0_170 = arith.constant 0 : index
    %c0_171 = arith.constant 0 : index
    %238 = vector.load %arg6[%c1_168, %c1_169, %c0_170, %c0_171] : memref<2x2x1x16xf32, #tpu.memory_space<vmem>>, vector<1x1x1x16xf32>
    %239 = vector.shape_cast %238 : vector<1x1x1x16xf32> to vector<1x16xf32>
    %240 = vector.broadcast %239 : vector<1x16xf32> to vector<16x16xf32>
    %241 = arith.addf %237, %240 : vector<16x16xf32>
    %c1_172 = arith.constant 1 : index
    %c1_173 = arith.constant 1 : index
    %c0_174 = arith.constant 0 : index
    %c0_175 = arith.constant 0 : index
    %242 = vector.load %arg7[%c1_172, %c1_173, %c0_174, %c0_175] : memref<2x2x32x16xbf16, #tpu.memory_space<vmem>>, vector<1x1x32x16xbf16>
    %243 = vector.shape_cast %242 : vector<1x1x32x16xbf16> to vector<32x16xbf16>
    %cst_176 = arith.constant dense<0.000000e+00> : vector<16x16xf32>
    %244 = tpu.matmul %187, %243, %cst_176 {dimension_numbers = #tpu.dot_dimension_numbers<[1], [0], [0], [1], [0, 0, 1, 1], [], []>} : vector<16x32xbf16>, vector<32x16xbf16>, vector<16x16xf32> -> vector<16x16xf32>
    %c1_177 = arith.constant 1 : index
    %c1_178 = arith.constant 1 : index
    %c0_179 = arith.constant 0 : index
    %c0_180 = arith.constant 0 : index
    %245 = vector.load %arg8[%c1_177, %c1_178, %c0_179, %c0_180] : memref<2x2x1x16xf32, #tpu.memory_space<vmem>>, vector<1x1x1x16xf32>
    %246 = vector.shape_cast %245 : vector<1x1x1x16xf32> to vector<1x16xf32>
    %247 = vector.broadcast %246 : vector<1x16xf32> to vector<16x16xf32>
    %248 = arith.addf %244, %247 : vector<16x16xf32>
    %c1_181 = arith.constant 1 : index
    %c1_182 = arith.constant 1 : index
    %c0_183 = arith.constant 0 : index
    %c0_184 = arith.constant 0 : index
    %249 = vector.load %arg9[%c1_181, %c1_182, %c0_183, %c0_184] : memref<2x2x32x16xbf16, #tpu.memory_space<vmem>>, vector<1x1x32x16xbf16>
    %250 = vector.shape_cast %249 : vector<1x1x32x16xbf16> to vector<32x16xbf16>
    %cst_185 = arith.constant dense<0.000000e+00> : vector<16x16xf32>
    %251 = tpu.matmul %187, %250, %cst_185 {dimension_numbers = #tpu.dot_dimension_numbers<[1], [0], [0], [1], [0, 0, 1, 1], [], []>} : vector<16x32xbf16>, vector<32x16xbf16>, vector<16x16xf32> -> vector<16x16xf32>
    %c1_186 = arith.constant 1 : index
    %c1_187 = arith.constant 1 : index
    %c0_188 = arith.constant 0 : index
    %c0_189 = arith.constant 0 : index
    %252 = vector.load %arg10[%c1_186, %c1_187, %c0_188, %c0_189] : memref<2x2x1x16xf32, #tpu.memory_space<vmem>>, vector<1x1x1x16xf32>
    %253 = vector.shape_cast %252 : vector<1x1x1x16xf32> to vector<1x16xf32>
    %254 = vector.broadcast %253 : vector<1x16xf32> to vector<16x16xf32>
    %255 = arith.addf %251, %254 : vector<16x16xf32>
    %256 = arith.truncf %241 : vector<16x16xf32> to vector<16x16xbf16>
    %257 = arith.truncf %248 : vector<16x16xf32> to vector<16x16xbf16>
    %cst_190 = arith.constant dense<0.000000e+00> : vector<16x16xf32>
    %258 = tpu.matmul %256, %257, %cst_190 {dimension_numbers = #tpu.dot_dimension_numbers<[1], [1], [0], [0], [0, 0, 1, 0], [], []>} : vector<16x16xbf16>, vector<16x16xbf16>, vector<16x16xf32> -> vector<16x16xf32>
    %cst_191 = arith.constant 2.500000e-01 : f32
    %259 = vector.broadcast %cst_191 : f32 to vector<16x16xf32>
    %260 = arith.mulf %258, %259 : vector<16x16xf32>
    %261 = vector.broadcast %19 : vector<1x16xf32> to vector<16x16xf32>
    %262 = arith.addf %260, %261 : vector<16x16xf32>
    %cst_192 = arith.constant dense<0xFF800000> : vector<16xf32>
    %263 = vector.multi_reduction <maximumf>, %262, %cst_192 [1] : vector<16x16xf32> to vector<16xf32>
    %264 = vector.shape_cast %263 : vector<16xf32> to vector<16x1xf32>
    %265 = vector.broadcast %264 : vector<16x1xf32> to vector<16x16xf32>
    %266 = arith.subf %262, %265 : vector<16x16xf32>
    %267 = math.exp %266 : vector<16x16xf32>
    %cst_193 = arith.constant dense<0.000000e+00> : vector<16xf32>
    %268 = vector.multi_reduction <add>, %267, %cst_193 [1] : vector<16x16xf32> to vector<16xf32>
    %269 = vector.shape_cast %268 : vector<16xf32> to vector<16x1xf32>
    %270 = tpu.reciprocal %269 {approx = true} : vector<16x1xf32> -> vector<16x1xf32>
    %271 = vector.broadcast %270 : vector<16x1xf32> to vector<16x16xf32>
    %272 = arith.mulf %267, %271 : vector<16x16xf32>
    %273 = arith.truncf %272 : vector<16x16xf32> to vector<16x16xbf16>
    %274 = arith.truncf %255 : vector<16x16xf32> to vector<16x16xbf16>
    %cst_194 = arith.constant dense<0.000000e+00> : vector<16x16xf32>
    %275 = tpu.matmul %273, %274, %cst_194 {dimension_numbers = #tpu.dot_dimension_numbers<[1], [0], [0], [1], [0, 0, 1, 1], [], []>} : vector<16x16xbf16>, vector<16x16xbf16>, vector<16x16xf32> -> vector<16x16xf32>
    %276 = arith.truncf %275 : vector<16x16xf32> to vector<16x16xbf16>
    %c1_195 = arith.constant 1 : index
    %c1_196 = arith.constant 1 : index
    %c0_197 = arith.constant 0 : index
    %c0_198 = arith.constant 0 : index
    %277 = vector.load %arg11[%c1_195, %c1_196, %c0_197, %c0_198] : memref<2x2x16x32xbf16, #tpu.memory_space<vmem>>, vector<1x1x16x32xbf16>
    %278 = vector.shape_cast %277 : vector<1x1x16x32xbf16> to vector<16x32xbf16>
    %cst_199 = arith.constant dense<0.000000e+00> : vector<16x32xf32>
    %279 = tpu.matmul %276, %278, %cst_199 {dimension_numbers = #tpu.dot_dimension_numbers<[1], [0], [0], [1], [0, 0, 1, 1], [], []>} : vector<16x16xbf16>, vector<16x32xbf16>, vector<16x32xf32> -> vector<16x32xf32>
    %280 = arith.addf %234, %279 : vector<16x32xf32>
    %c1_200 = arith.constant 1 : index
    %c0_201 = arith.constant 0 : index
    %c0_202 = arith.constant 0 : index
    %281 = vector.load %arg12[%c1_200, %c0_201, %c0_202] : memref<2x1x32xf32, #tpu.memory_space<vmem>>, vector<1x1x32xf32>
    %282 = vector.shape_cast %281 : vector<1x1x32xf32> to vector<1x32xf32>
    %283 = vector.broadcast %282 : vector<1x32xf32> to vector<16x32xf32>
    %284 = arith.addf %280, %283 : vector<16x32xf32>
    %285 = arith.addf %186, %284 : vector<16x32xf32>
    %c1_203 = arith.constant 1 : index
    %c0_204 = arith.constant 0 : index
    %c0_205 = arith.constant 0 : index
    %286 = vector.load %arg13[%c1_203, %c0_204, %c0_205] : memref<2x1x32xf32, #tpu.memory_space<vmem>>, vector<1x1x32xf32>
    %287 = vector.shape_cast %286 : vector<1x1x32xf32> to vector<1x32xf32>
    %c1_206 = arith.constant 1 : index
    %c0_207 = arith.constant 0 : index
    %c0_208 = arith.constant 0 : index
    %288 = vector.load %arg14[%c1_206, %c0_207, %c0_208] : memref<2x1x32xf32, #tpu.memory_space<vmem>>, vector<1x1x32xf32>
    %289 = vector.shape_cast %288 : vector<1x1x32xf32> to vector<1x32xf32>
    %cst_209 = arith.constant dense<0.000000e+00> : vector<16xf32>
    %290 = vector.multi_reduction <add>, %285, %cst_209 [1] : vector<16x32xf32> to vector<16xf32>
    %291 = vector.shape_cast %290 : vector<16xf32> to vector<16x1xf32>
    %cst_210 = arith.constant 3.200000e+01 : f32
    %292 = vector.broadcast %cst_210 : f32 to vector<16x1xf32>
    %293 = arith.divf %291, %292 : vector<16x1xf32>
    %294 = vector.broadcast %293 : vector<16x1xf32> to vector<16x32xf32>
    %295 = arith.subf %285, %294 : vector<16x32xf32>
    %296 = arith.mulf %295, %295 : vector<16x32xf32>
    %cst_211 = arith.constant dense<0.000000e+00> : vector<16xf32>
    %297 = vector.multi_reduction <add>, %296, %cst_211 [1] : vector<16x32xf32> to vector<16xf32>
    %298 = vector.shape_cast %297 : vector<16xf32> to vector<16x1xf32>
    %cst_212 = arith.constant 3.200000e+01 : f32
    %299 = vector.broadcast %cst_212 : f32 to vector<16x1xf32>
    %300 = arith.divf %298, %299 : vector<16x1xf32>
    %cst_213 = arith.constant 9.99999974E-6 : f32
    %301 = vector.broadcast %cst_213 : f32 to vector<16x1xf32>
    %302 = arith.addf %300, %301 : vector<16x1xf32>
    %303 = math.rsqrt %302 : vector<16x1xf32>
    %304 = vector.broadcast %303 : vector<16x1xf32> to vector<16x32xf32>
    %305 = arith.mulf %295, %304 : vector<16x32xf32>
    %306 = vector.broadcast %287 : vector<1x32xf32> to vector<16x32xf32>
    %307 = arith.mulf %305, %306 : vector<16x32xf32>
    %308 = vector.broadcast %289 : vector<1x32xf32> to vector<16x32xf32>
    %309 = arith.addf %307, %308 : vector<16x32xf32>
    %310 = arith.truncf %309 : vector<16x32xf32> to vector<16x32xbf16>
    %c1_214 = arith.constant 1 : index
    %c0_215 = arith.constant 0 : index
    %c0_216 = arith.constant 0 : index
    %311 = vector.load %arg15[%c1_214, %c0_215, %c0_216] : memref<2x32x64xbf16, #tpu.memory_space<vmem>>, vector<1x32x64xbf16>
    %312 = vector.shape_cast %311 : vector<1x32x64xbf16> to vector<32x64xbf16>
    %cst_217 = arith.constant dense<0.000000e+00> : vector<16x64xf32>
    %313 = tpu.matmul %310, %312, %cst_217 {dimension_numbers = #tpu.dot_dimension_numbers<[1], [0], [0], [1], [0, 0, 1, 1], [], []>} : vector<16x32xbf16>, vector<32x64xbf16>, vector<16x64xf32> -> vector<16x64xf32>
    %c1_218 = arith.constant 1 : index
    %c0_219 = arith.constant 0 : index
    %c0_220 = arith.constant 0 : index
    %314 = vector.load %arg16[%c1_218, %c0_219, %c0_220] : memref<2x1x64xf32, #tpu.memory_space<vmem>>, vector<1x1x64xf32>
    %315 = vector.shape_cast %314 : vector<1x1x64xf32> to vector<1x64xf32>
    %316 = vector.broadcast %315 : vector<1x64xf32> to vector<16x64xf32>
    %317 = arith.addf %313, %316 : vector<16x64xf32>
    %cst_221 = arith.constant 0.000000e+00 : f32
    %318 = vector.broadcast %cst_221 : f32 to vector<16x64xf32>
    %319 = arith.maximumf %317, %318 : vector<16x64xf32>
    %320 = arith.truncf %319 : vector<16x64xf32> to vector<16x64xbf16>
    %c1_222 = arith.constant 1 : index
    %c0_223 = arith.constant 0 : index
    %c0_224 = arith.constant 0 : index
    %321 = vector.load %arg17[%c1_222, %c0_223, %c0_224] : memref<2x64x32xbf16, #tpu.memory_space<vmem>>, vector<1x64x32xbf16>
    %322 = vector.shape_cast %321 : vector<1x64x32xbf16> to vector<64x32xbf16>
    %cst_225 = arith.constant dense<0.000000e+00> : vector<16x32xf32>
    %323 = tpu.matmul %320, %322, %cst_225 {dimension_numbers = #tpu.dot_dimension_numbers<[1], [0], [0], [1], [0, 0, 1, 1], [], []>} : vector<16x64xbf16>, vector<64x32xbf16>, vector<16x32xf32> -> vector<16x32xf32>
    %c1_226 = arith.constant 1 : index
    %c0_227 = arith.constant 0 : index
    %c0_228 = arith.constant 0 : index
    %324 = vector.load %arg18[%c1_226, %c0_227, %c0_228] : memref<2x1x32xf32, #tpu.memory_space<vmem>>, vector<1x1x32xf32>
    %325 = vector.shape_cast %324 : vector<1x1x32xf32> to vector<1x32xf32>
    %326 = vector.broadcast %325 : vector<1x32xf32> to vector<16x32xf32>
    %327 = arith.addf %323, %326 : vector<16x32xf32>
    %328 = arith.addf %309, %327 : vector<16x32xf32>
    %c1_229 = arith.constant 1 : index
    %c0_230 = arith.constant 0 : index
    %c0_231 = arith.constant 0 : index
    %329 = vector.load %arg19[%c1_229, %c0_230, %c0_231] : memref<2x1x32xf32, #tpu.memory_space<vmem>>, vector<1x1x32xf32>
    %330 = vector.shape_cast %329 : vector<1x1x32xf32> to vector<1x32xf32>
    %c1_232 = arith.constant 1 : index
    %c0_233 = arith.constant 0 : index
    %c0_234 = arith.constant 0 : index
    %331 = vector.load %arg20[%c1_232, %c0_233, %c0_234] : memref<2x1x32xf32, #tpu.memory_space<vmem>>, vector<1x1x32xf32>
    %332 = vector.shape_cast %331 : vector<1x1x32xf32> to vector<1x32xf32>
    %cst_235 = arith.constant dense<0.000000e+00> : vector<16xf32>
    %333 = vector.multi_reduction <add>, %328, %cst_235 [1] : vector<16x32xf32> to vector<16xf32>
    %334 = vector.shape_cast %333 : vector<16xf32> to vector<16x1xf32>
    %cst_236 = arith.constant 3.200000e+01 : f32
    %335 = vector.broadcast %cst_236 : f32 to vector<16x1xf32>
    %336 = arith.divf %334, %335 : vector<16x1xf32>
    %337 = vector.broadcast %336 : vector<16x1xf32> to vector<16x32xf32>
    %338 = arith.subf %328, %337 : vector<16x32xf32>
    %339 = arith.mulf %338, %338 : vector<16x32xf32>
    %cst_237 = arith.constant dense<0.000000e+00> : vector<16xf32>
    %340 = vector.multi_reduction <add>, %339, %cst_237 [1] : vector<16x32xf32> to vector<16xf32>
    %341 = vector.shape_cast %340 : vector<16xf32> to vector<16x1xf32>
    %cst_238 = arith.constant 3.200000e+01 : f32
    %342 = vector.broadcast %cst_238 : f32 to vector<16x1xf32>
    %343 = arith.divf %341, %342 : vector<16x1xf32>
    %cst_239 = arith.constant 9.99999974E-6 : f32
    %344 = vector.broadcast %cst_239 : f32 to vector<16x1xf32>
    %345 = arith.addf %343, %344 : vector<16x1xf32>
    %346 = math.rsqrt %345 : vector<16x1xf32>
    %347 = vector.broadcast %346 : vector<16x1xf32> to vector<16x32xf32>
    %348 = arith.mulf %338, %347 : vector<16x32xf32>
    %349 = vector.broadcast %330 : vector<1x32xf32> to vector<16x32xf32>
    %350 = arith.mulf %348, %349 : vector<16x32xf32>
    %351 = vector.broadcast %332 : vector<1x32xf32> to vector<16x32xf32>
    %352 = arith.addf %350, %351 : vector<16x32xf32>
    %353 = arith.truncf %352 : vector<16x32xf32> to vector<16x32xbf16>
    %c0_240 = arith.constant 0 : index
    %c0_241 = arith.constant 0 : index
    %354 = vector.load %arg21[%c0_240, %c0_241] : memref<32x128xbf16, #tpu.memory_space<vmem>>, vector<32x128xbf16>
    %cst_242 = arith.constant dense<0.000000e+00> : vector<16x128xf32>
    %355 = tpu.matmul %353, %354, %cst_242 {dimension_numbers = #tpu.dot_dimension_numbers<[1], [0], [0], [1], [0, 0, 1, 1], [], []>} : vector<16x32xbf16>, vector<32x128xbf16>, vector<16x128xf32> -> vector<16x128xf32>
    %c0_243 = arith.constant 0 : index
    %c0_244 = arith.constant 0 : index
    %356 = vector.load %arg22[%c0_243, %c0_244] : memref<1x128xf32, #tpu.memory_space<vmem>>, vector<1x128xf32>
    %357 = vector.broadcast %356 : vector<1x128xf32> to vector<16x128xf32>
    %358 = arith.addf %355, %357 : vector<16x128xf32>
    %c0_245 = arith.constant 0 : index
    %c0_246 = arith.constant 0 : index
    %c0_247 = arith.constant 0 : index
    %359 = vector.load %arg23[%c0_245, %c0_246, %c0_247] : memref<1x16x128xf32, #tpu.memory_space<vmem>>, vector<1x16x128xf32>
    %360 = vector.shape_cast %359 : vector<1x16x128xf32> to vector<16x128xf32>
    %361 = vector.shape_cast %358 : vector<16x128xf32> to vector<1x16x128xf32>
    tpu.vector_store %arg23[%c0_245, %c0_246, %c0_247], %361 {strides = array<i32>} : memref<1x16x128xf32, #tpu.memory_space<vmem>>, vector<1x16x128xf32>,
    return
  }
  func.func @transform_0(%arg0: i32) -> (i32, i32) {
    %c0_i32 = arith.constant 0 : i32
    %c0_i32_0 = arith.constant 0 : i32
    return %arg0, %c0_i32 : i32, i32
  }
  func.func @transform_1(%arg0: i32) -> (i32, i32, i32) {
    %c0_i32 = arith.constant 0 : i32
    %c0_i32_0 = arith.constant 0 : i32
    %c0_i32_1 = arith.constant 0 : i32
    return %arg0, %c0_i32, %c0_i32_0 : i32, i32, i32
  }
  func.func @transform_2(%arg0: i32) -> (i32, i32) {
    %c0_i32 = arith.constant 0 : i32
    %c0_i32_0 = arith.constant 0 : i32
    %c0_i32_1 = arith.constant 0 : i32
    return %c0_i32, %c0_i32_0 : i32, i32
  }
  func.func @transform_3(%arg0: i32) -> (i32, i32) {
    %c0_i32 = arith.constant 0 : i32
    %c0_i32_0 = arith.constant 0 : i32
    %c0_i32_1 = arith.constant 0 : i32
    return %c0_i32, %c0_i32_0 : i32, i32
  }
  func.func @transform_4(%arg0: i32) -> (i32, i32, i32, i32) {
    %c0_i32 = arith.constant 0 : i32
    %c0_i32_0 = arith.constant 0 : i32
    %c0_i32_1 = arith.constant 0 : i32
    %c0_i32_2 = arith.constant 0 : i32
    %c0_i32_3 = arith.constant 0 : i32
    return %c0_i32, %c0_i32_0, %c0_i32_1, %c0_i32_2 : i32, i32, i32, i32
  }
  func.func @transform_5(%arg0: i32) -> (i32, i32, i32, i32) {
    %c0_i32 = arith.constant 0 : i32
    %c0_i32_0 = arith.constant 0 : i32
    %c0_i32_1 = arith.constant 0 : i32
    %c0_i32_2 = arith.constant 0 : i32
    %c0_i32_3 = arith.constant 0 : i32
    return %c0_i32, %c0_i32_0, %c0_i32_1, %c0_i32_2 : i32, i32, i32, i32
  }
  func.func @transform_6(%arg0: i32) -> (i32, i32, i32, i32) {
    %c0_i32 = arith.constant 0 : i32
    %c0_i32_0 = arith.constant 0 : i32
    %c0_i32_1 = arith.constant 0 : i32
    %c0_i32_2 = arith.constant 0 : i32
    %c0_i32_3 = arith.constant 0 : i32
    return %c0_i32, %c0_i32_0, %c0_i32_1, %c0_i32_2 : i32, i32, i32, i32
  }
  func.func @transform_7(%arg0: i32) -> (i32, i32, i32, i32) {
    %c0_i32 = arith.constant 0 : i32
    %c0_i32_0 = arith.constant 0 : i32
    %c0_i32_1 = arith.constant 0 : i32
    %c0_i32_2 = arith.constant 0 : i32
    %c0_i32_3 = arith.constant 0 : i32
    return %c0_i32, %c0_i32_0, %c0_i32_1, %c0_i32_2 : i32, i32, i32, i32
  }
  func.func @transform_8(%arg0: i32) -> (i32, i32, i32, i32) {
    %c0_i32 = arith.constant 0 : i32
    %c0_i32_0 = arith.constant 0 : i32
    %c0_i32_1 = arith.constant 0 : i32
    %c0_i32_2 = arith.constant 0 : i32
    %c0_i32_3 = arith.constant 0 : i32
    return %c0_i32, %c0_i32_0, %c0_i32_1, %c0_i32_2 : i32, i32, i32, i32
  }
  func.func @transform_9(%arg0: i32) -> (i32, i32, i32, i32) {
    %c0_i32 = arith.constant 0 : i32
    %c0_i32_0 = arith.constant 0 : i32
    %c0_i32_1 = arith.constant 0 : i32
    %c0_i32_2 = arith.constant 0 : i32
    %c0_i32_3 = arith.constant 0 : i32
    return %c0_i32, %c0_i32_0, %c0_i32_1, %c0_i32_2 : i32, i32, i32, i32
  }
  func.func @transform_10(%arg0: i32) -> (i32, i32, i32, i32) {
    %c0_i32 = arith.constant 0 : i32
    %c0_i32_0 = arith.constant 0 : i32
    %c0_i32_1 = arith.constant 0 : i32
    %c0_i32_2 = arith.constant 0 : i32
    %c0_i32_3 = arith.constant 0 : i32
    return %c0_i32, %c0_i32_0, %c0_i32_1, %c0_i32_2 : i32, i32, i32, i32
  }
  func.func @transform_11(%arg0: i32) -> (i32, i32, i32) {
    %c0_i32 = arith.constant 0 : i32
    %c0_i32_0 = arith.constant 0 : i32
    %c0_i32_1 = arith.constant 0 : i32
    %c0_i32_2 = arith.constant 0 : i32
    return %c0_i32, %c0_i32_0, %c0_i32_1 : i32, i32, i32
  }
  func.func @transform_12(%arg0: i32) -> (i32, i32, i32) {
    %c0_i32 = arith.constant 0 : i32
    %c0_i32_0 = arith.constant 0 : i32
    %c0_i32_1 = arith.constant 0 : i32
    %c0_i32_2 = arith.constant 0 : i32
    return %c0_i32, %c0_i32_0, %c0_i32_1 : i32, i32, i32
  }
  func.func @transform_13(%arg0: i32) -> (i32, i32, i32) {
    %c0_i32 = arith.constant 0 : i32
    %c0_i32_0 = arith.constant 0 : i32
    %c0_i32_1 = arith.constant 0 : i32
    %c0_i32_2 = arith.constant 0 : i32
    return %c0_i32, %c0_i32_0, %c0_i32_1 : i32, i32, i32
  }
  func.func @transform_14(%arg0: i32) -> (i32, i32, i32) {
    %c0_i32 = arith.constant 0 : i32
    %c0_i32_0 = arith.constant 0 : i32
    %c0_i32_1 = arith.constant 0 : i32
    %c0_i32_2 = arith.constant 0 : i32
    return %c0_i32, %c0_i32_0, %c0_i32_1 : i32, i32, i32
  }
  func.func @transform_15(%arg0: i32) -> (i32, i32, i32) {
    %c0_i32 = arith.constant 0 : i32
    %c0_i32_0 = arith.constant 0 : i32
    %c0_i32_1 = arith.constant 0 : i32
    %c0_i32_2 = arith.constant 0 : i32
    return %c0_i32, %c0_i32_0, %c0_i32_1 : i32, i32, i32
  }
  func.func @transform_16(%arg0: i32) -> (i32, i32, i32) {
    %c0_i32 = arith.constant 0 : i32
    %c0_i32_0 = arith.constant 0 : i32
    %c0_i32_1 = arith.constant 0 : i32
    %c0_i32_2 = arith.constant 0 : i32
    return %c0_i32, %c0_i32_0, %c0_i32_1 : i32, i32, i32
  }
  func.func @transform_17(%arg0: i32) -> (i32, i32, i32) {
    %c0_i32 = arith.constant 0 : i32
    %c0_i32_0 = arith.constant 0 : i32
    %c0_i32_1 = arith.constant 0 : i32
    %c0_i32_2 = arith.constant 0 : i32
    return %c0_i32, %c0_i32_0, %c0_i32_1 : i32, i32, i32
  }
  func.func @transform_18(%arg0: i32) -> (i32, i32, i32) {
    %c0_i32 = arith.constant 0 : i32
    %c0_i32_0 = arith.constant 0 : i32
    %c0_i32_1 = arith.constant 0 : i32
    %c0_i32_2 = arith.constant 0 : i32
    return %c0_i32, %c0_i32_0, %c0_i32_1 : i32, i32, i32
  }
  func.func @transform_19(%arg0: i32) -> (i32, i32, i32) {
    %c0_i32 = arith.constant 0 : i32
    %c0_i32_0 = arith.constant 0 : i32
    %c0_i32_1 = arith.constant 0 : i32
    %c0_i32_2 = arith.constant 0 : i32
    return %c0_i32, %c0_i32_0, %c0_i32_1 : i32, i32, i32
  }
  func.func @transform_20(%arg0: i32) -> (i32, i32) {
    %c0_i32 = arith.constant 0 : i32
    %c0_i32_0 = arith.constant 0 : i32
    %c0_i32_1 = arith.constant 0 : i32
    return %c0_i32, %c0_i32_0 : i32, i32
  }
  func.func @transform_21(%arg0: i32) -> (i32, i32) {
    %c0_i32 = arith.constant 0 : i32
    %c0_i32_0 = arith.constant 0 : i32
    %c0_i32_1 = arith.constant 0 : i32
    return %c0_i32, %c0_i32_0 : i32, i32
  }
  func.func @transform_22(%arg0: i32) -> (i32, i32, i32) {
    %c0_i32 = arith.constant 0 : i32
    %c0_i32_0 = arith.constant 0 : i32
    %c0_i32_1 = arith.constant 0 : i32
    return %arg0, %c0_i32, %c0_i32_0 : i32, i32, i32
  }
}

</mosaic_0001>

<llo_original>
// kernel: trained_transformer_forward.1
$region0: #{trained_transformer_forward.1}
  #allocation0 [shape = 'u32[]', space=smem, size = 0x4, offset = 0x4, fixed_abs, tag = 'smem constant byte address 0x4 - core index']
  #allocation1 [shape = 'u32[144,128]{1,0:T(1,128)}', space=vmem, size = 0x12000, scoped, tag = 'internal scratch']
  %s0 = inlined_call_operand.vmem [shape: s32[32,1], index: 0, kind: input, shape index: {}]
  %s1 = inlined_call_operand.vmem [shape: s32[2,1,16], index: 1, kind: input, shape index: {}]
  %s2 = inlined_call_operand.vmem [shape: bf16[128,32], index: 2, kind: input, shape index: {}]
  %s3 = inlined_call_operand.vmem [shape: f32[16,32], index: 3, kind: input, shape index: {}]
  %s4 = inlined_call_operand.vmem [shape: bf16[2,2,32,16], index: 4, kind: input, shape index: {}]
  %s5 = inlined_call_operand.vmem [shape: f32[2,2,1,16], index: 5, kind: input, shape index: {}]
  %s6 = inlined_call_operand.vmem [shape: bf16[2,2,32,16], index: 6, kind: input, shape index: {}]
  %s7 = inlined_call_operand.vmem [shape: f32[2,2,1,16], index: 7, kind: input, shape index: {}]
  %s8 = inlined_call_operand.vmem [shape: bf16[2,2,32,16], index: 8, kind: input, shape index: {}]
  %s9 = inlined_call_operand.vmem [shape: f32[2,2,1,16], index: 9, kind: input, shape index: {}]
  %s10 = inlined_call_operand.vmem [shape: bf16[2,2,16,32], index: 10, kind: input, shape index: {}]
  %s11 = inlined_call_operand.vmem [shape: f32[2,1,32], index: 11, kind: input, shape index: {}]
  %s12 = inlined_call_operand.vmem [shape: f32[2,1,32], index: 12, kind: input, shape index: {}]
  %s13 = inlined_call_operand.vmem [shape: f32[2,1,32], index: 13, kind: input, shape index: {}]
  %s14 = inlined_call_operand.vmem [shape: bf16[2,32,64], index: 14, kind: input, shape index: {}]
  %s15 = inlined_call_operand.vmem [shape: f32[2,1,64], index: 15, kind: input, shape index: {}]
  %s16 = inlined_call_operand.vmem [shape: bf16[2,64,32], index: 16, kind: input, shape index: {}]
  %s17 = inlined_call_operand.vmem [shape: f32[2,1,32], index: 17, kind: input, shape index: {}]
  %s18 = inlined_call_operand.vmem [shape: f32[2,1,32], index: 18, kind: input, shape index: {}]
  %s19 = inlined_call_operand.vmem [shape: f32[2,1,32], index: 19, kind: input, shape index: {}]
  %s20 = inlined_call_operand.vmem [shape: bf16[32,128], index: 20, kind: input, shape index: {}]
  %s21 = inlined_call_operand.vmem [shape: f32[1,128], index: 21, kind: input, shape index: {}]
  %s22 = inlined_call_operand.hbm [shape: f32[2,16,128], index: 22, kind: output, shape index: {}]
  %s23 = sld [smem:[#allocation0]]
  $region121: #{trained_transformer_forward.1} parent=0
    _
  %s25 = ssub.s32 1, %s23
  %s26 = scalar_select 0, %s25, %s23
  $region1: #{trained_transformer_forward.1} parent=0
    #allocation2 [shape = 'u8[16384]{0}', space=vmem, size = 0x4000, scoped, tag = 'output window, operand 0']
    #allocation3 [shape = 's32[2]{0}', space=sflag, size = 0x8, scoped, tag = 'scoped memory for trained_transformer_forward.1']
    %27 = vsyncpa [#allocation3], 0
    %s28 = scalar_lea.sflag [#allocation3], 1
    %29 = vsyncpa %s28, 0
    loop: start=0, step=1, limit=4
    $region2: #{trained_transformer_forward.1} parent=1 // loop_pre_header
      _
    $region3: #{trained_transformer_forward.1} parent=1 // loop_header
      %s31 = sphi 0, %s35
      %p32 = scmp.ge.s32.totalorder %s31, 4
      %s41 = sphi 0, %s43
      %s44 = sphi 0, %s41
      %s45 = sphi 0, %s44
      %s61 = sphi 0, %s45
      %s67 = sphi 0, %s69
      %s70 = sphi 0, %s67
      %s71 = sphi 0, %s70
      %s87 = sphi 0, %s71
      %s91 = sphi 0, %s91
      %s93 = sphi 0, %s91
      %s94 = sphi 0, %s93
      %s108 = sphi 0, %s94
      %s112 = sphi 0, %s112
      %s114 = sphi 0, %s112
      %s115 = sphi 0, %s114
      %s129 = sphi 0, %s115
      %s133 = sphi 0, %s133
      %s135 = sphi 0, %s133
      %s136 = sphi 0, %s135
      %s150 = sphi 0, %s136
      %s154 = sphi 0, %s154
      %s156 = sphi 0, %s154
      %s157 = sphi 0, %s156
      %s171 = sphi 0, %s157
      %s175 = sphi 0, %s175
      %s177 = sphi 0, %s175
      %s178 = sphi 0, %s177
      %s192 = sphi 0, %s178
      %s196 = sphi 0, %s196
      %s198 = sphi 0, %s196
      %s199 = sphi 0, %s198
      %s213 = sphi 0, %s199
      %s217 = sphi 0, %s217
      %s219 = sphi 0, %s217
      %s220 = sphi 0, %s219
      %s234 = sphi 0, %s220
      %s238 = sphi 0, %s238
      %s240 = sphi 0, %s238
      %s241 = sphi 0, %s240
      %s255 = sphi 0, %s241
      %s259 = sphi 0, %s259
      %s261 = sphi 0, %s259
      %s262 = sphi 0, %s261
      %s276 = sphi 0, %s262
      %s280 = sphi 0, %s280
      %s282 = sphi 0, %s280
      %s283 = sphi 0, %s282
      %s297 = sphi 0, %s283
      %s301 = sphi 0, %s301
      %s303 = sphi 0, %s301
      %s304 = sphi 0, %s303
      %s318 = sphi 0, %s304
      %s322 = sphi 0, %s322
      %s324 = sphi 0, %s322
      %s325 = sphi 0, %s324
      %s339 = sphi 0, %s325
      %s343 = sphi 0, %s343
      %s345 = sphi 0, %s343
      %s346 = sphi 0, %s345
      %s360 = sphi 0, %s346
      %s364 = sphi 0, %s364
      %s366 = sphi 0, %s364
      %s367 = sphi 0, %s366
      %s381 = sphi 0, %s367
      %s385 = sphi 0, %s385
      %s387 = sphi 0, %s385
      %s388 = sphi 0, %s387
      %s402 = sphi 0, %s388
      %s406 = sphi 0, %s406
      %s408 = sphi 0, %s406
      %s409 = sphi 0, %s408
      %s423 = sphi 0, %s409
      %s427 = sphi 0, %s427
      %s429 = sphi 0, %s427
      %s430 = sphi 0, %s429
      %s444 = sphi 0, %s430
      %s448 = sphi 0, %s448
      %s450 = sphi 0, %s448
      %s451 = sphi 0, %s450
      %s465 = sphi 0, %s451
      %s469 = sphi 0, %s469
      %s471 = sphi 0, %s469
      %s472 = sphi 0, %s471
      %s486 = sphi 0, %s472
      %s490 = sphi 0, %s490
      %s492 = sphi 0, %s490
      %s493 = sphi 0, %s492
      %s507 = sphi 0, %s493
      %s513 = sphi 0, %s515
      %s516 = sphi 0, %s513
      %s517 = sphi 0, %s516
      %s533 = sphi 0, %s517
    $region4: #{trained_transformer_forward.1} parent=1 // loop_header_branch
      %34 = sbr.rel (%p32) target = $region8
    $region5: #{trained_transformer_forward.1} parent=1 // loop_body
      %s36 = ssub.s32 %s31, 1
      %s37 = ssub.s32 %s31, 2
      %s38 = sadd.s32 %s31, 1
      %s39 = ssub.s32 %s31, %s38
      %p40 = scmp.eq.s32.totalorder %s39, 0
      %s42 = sadd.s32 %s41, 1
      %s43 = scalar_select %p40, %s41, %s42
      %p46 = pneg %p40
      %p47 = scmp.eq.s32.totalorder %s31, 1
      %p48 = por %p46, %p47
      %p49 = scmp.ne.s32.totalorder %s41, %s44
      %p50 = scmp.eq.s32.totalorder %s31, 0
      %p51 = por %p49, %p50
      %p52 = scmp.ne.s32.totalorder %s41, %s44
      %p53 = scmp.eq.s32.totalorder %s36, 1
      %p54 = por %p52, %p53
      %p55 = scmp.ne.s32.totalorder %s44, %s45
      %p56 = scmp.eq.s32.totalorder %s36, 0
      %p57 = por %p55, %p56
      %p58 = scmp.ne.s32.totalorder %s44, %s45
      %p59 = scmp.eq.s32.totalorder %s37, 1
      %p60 = por %p58, %p59
      %p62 = scmp.ne.s32.totalorder %s45, %s61
      %p63 = scmp.eq.s32.totalorder %s37, 0
      %p64 = por %p62, %p63
      %s65 = ssub.s32 %s31, %s38
      %p66 = scmp.eq.s32.totalorder %s65, 0
      %s68 = sadd.s32 %s67, 1
      %s69 = scalar_select %p66, %s67, %s68
      %p72 = pneg %p66
      %p73 = scmp.eq.s32.totalorder %s31, 1
      %p74 = por %p72, %p73
      %p75 = scmp.ne.s32.totalorder %s67, %s70
      %p76 = scmp.eq.s32.totalorder %s31, 0
      %p77 = por %p75, %p76
      %p78 = scmp.ne.s32.totalorder %s67, %s70
      %p79 = scmp.eq.s32.totalorder %s36, 1
      %p80 = por %p78, %p79
      %p81 = scmp.ne.s32.totalorder %s70, %s71
      %p82 = scmp.eq.s32.totalorder %s36, 0
      %p83 = por %p81, %p82
      %p84 = scmp.ne.s32.totalorder %s70, %s71
      %p85 = scmp.eq.s32.totalorder %s37, 1
      %p86 = por %p84, %p85
      %p88 = scmp.ne.s32.totalorder %s71, %s87
      %p89 = scmp.eq.s32.totalorder %s37, 0
      %p90 = por %p88, %p89
      %s92 = sadd.s32 %s91, 1
      %p95 = scmp.eq.s32.totalorder %s31, 1
      %p96 = scmp.ne.s32.totalorder %s91, %s93
      %p97 = scmp.eq.s32.totalorder %s31, 0
      %p98 = por %p96, %p97
      %p99 = scmp.ne.s32.totalorder %s91, %s93
      %p100 = scmp.eq.s32.totalorder %s36, 1
      %p101 = por %p99, %p100
      %p102 = scmp.ne.s32.totalorder %s93, %s94
      %p103 = scmp.eq.s32.totalorder %s36, 0
      %p104 = por %p102, %p103
      %p105 = scmp.ne.s32.totalorder %s93, %s94
      %p106 = scmp.eq.s32.totalorder %s37, 1
      %p107 = por %p105, %p106
      %p109 = scmp.ne.s32.totalorder %s94, %s108
      %p110 = scmp.eq.s32.totalorder %s37, 0
      %p111 = por %p109, %p110
      %s113 = sadd.s32 %s112, 1
      %p116 = scmp.eq.s32.totalorder %s31, 1
      %p117 = scmp.ne.s32.totalorder %s112, %s114
      %p118 = scmp.eq.s32.totalorder %s31, 0
      %p119 = por %p117, %p118
      %p120 = scmp.ne.s32.totalorder %s112, %s114
      %p121 = scmp.eq.s32.totalorder %s36, 1
      %p122 = por %p120, %p121
      %p123 = scmp.ne.s32.totalorder %s114, %s115
      %p124 = scmp.eq.s32.totalorder %s36, 0
      %p125 = por %p123, %p124
      %p126 = scmp.ne.s32.totalorder %s114, %s115
      %p127 = scmp.eq.s32.totalorder %s37, 1
      %p128 = por %p126, %p127
      %p130 = scmp.ne.s32.totalorder %s115, %s129
      %p131 = scmp.eq.s32.totalorder %s37, 0
      %p132 = por %p130, %p131
      %s134 = sadd.s32 %s133, 1
      %p137 = scmp.eq.s32.totalorder %s31, 1
      %p138 = scmp.ne.s32.totalorder %s133, %s135
      %p139 = scmp.eq.s32.totalorder %s31, 0
      %p140 = por %p138, %p139
      %p141 = scmp.ne.s32.totalorder %s133, %s135
      %p142 = scmp.eq.s32.totalorder %s36, 1
      %p143 = por %p141, %p142
      %p144 = scmp.ne.s32.totalorder %s135, %s136
      %p145 = scmp.eq.s32.totalorder %s36, 0
      %p146 = por %p144, %p145
      %p147 = scmp.ne.s32.totalorder %s135, %s136
      %p148 = scmp.eq.s32.totalorder %s37, 1
      %p149 = por %p147, %p148
      %p151 = scmp.ne.s32.totalorder %s136, %s150
      %p152 = scmp.eq.s32.totalorder %s37, 0
      %p153 = por %p151, %p152
      %s155 = sadd.s32 %s154, 1
      %p158 = scmp.eq.s32.totalorder %s31, 1
      %p159 = scmp.ne.s32.totalorder %s154, %s156
      %p160 = scmp.eq.s32.totalorder %s31, 0
      %p161 = por %p159, %p160
      %p162 = scmp.ne.s32.totalorder %s154, %s156
      %p163 = scmp.eq.s32.totalorder %s36, 1
      %p164 = por %p162, %p163
      %p165 = scmp.ne.s32.totalorder %s156, %s157
      %p166 = scmp.eq.s32.totalorder %s36, 0
      %p167 = por %p165, %p166
      %p168 = scmp.ne.s32.totalorder %s156, %s157
      %p169 = scmp.eq.s32.totalorder %s37, 1
      %p170 = por %p168, %p169
      %p172 = scmp.ne.s32.totalorder %s157, %s171
      %p173 = scmp.eq.s32.totalorder %s37, 0
      %p174 = por %p172, %p173
      %s176 = sadd.s32 %s175, 1
      %p179 = scmp.eq.s32.totalorder %s31, 1
      %p180 = scmp.ne.s32.totalorder %s175, %s177
      %p181 = scmp.eq.s32.totalorder %s31, 0
      %p182 = por %p180, %p181
      %p183 = scmp.ne.s32.totalorder %s175, %s177
      %p184 = scmp.eq.s32.totalorder %s36, 1
      %p185 = por %p183, %p184
      %p186 = scmp.ne.s32.totalorder %s177, %s178
      %p187 = scmp.eq.s32.totalorder %s36, 0
      %p188 = por %p186, %p187
      %p189 = scmp.ne.s32.totalorder %s177, %s178
      %p190 = scmp.eq.s32.totalorder %s37, 1
      %p191 = por %p189, %p190
      %p193 = scmp.ne.s32.totalorder %s178, %s192
      %p194 = scmp.eq.s32.totalorder %s37, 0
      %p195 = por %p193, %p194
      %s197 = sadd.s32 %s196, 1
      %p200 = scmp.eq.s32.totalorder %s31, 1
      %p201 = scmp.ne.s32.totalorder %s196, %s198
      %p202 = scmp.eq.s32.totalorder %s31, 0
      %p203 = por %p201, %p202
      %p204 = scmp.ne.s32.totalorder %s196, %s198
      %p205 = scmp.eq.s32.totalorder %s36, 1
      %p206 = por %p204, %p205
      %p207 = scmp.ne.s32.totalorder %s198, %s199
      %p208 = scmp.eq.s32.totalorder %s36, 0
      %p209 = por %p207, %p208
      %p210 = scmp.ne.s32.totalorder %s198, %s199
      %p211 = scmp.eq.s32.totalorder %s37, 1
      %p212 = por %p210, %p211
      %p214 = scmp.ne.s32.totalorder %s199, %s213
      %p215 = scmp.eq.s32.totalorder %s37, 0
      %p216 = por %p214, %p215
      %s218 = sadd.s32 %s217, 1
      %p221 = scmp.eq.s32.totalorder %s31, 1
      %p222 = scmp.ne.s32.totalorder %s217, %s219
      %p223 = scmp.eq.s32.totalorder %s31, 0
      %p224 = por %p222, %p223
      %p225 = scmp.ne.s32.totalorder %s217, %s219
      %p226 = scmp.eq.s32.totalorder %s36, 1
      %p227 = por %p225, %p226
      %p228 = scmp.ne.s32.totalorder %s219, %s220
      %p229 = scmp.eq.s32.totalorder %s36, 0
      %p230 = por %p228, %p229
      %p231 = scmp.ne.s32.totalorder %s219, %s220
      %p232 = scmp.eq.s32.totalorder %s37, 1
      %p233 = por %p231, %p232
      %p235 = scmp.ne.s32.totalorder %s220, %s234
      %p236 = scmp.eq.s32.totalorder %s37, 0
      %p237 = por %p235, %p236
      %s239 = sadd.s32 %s238, 1
      %p242 = scmp.eq.s32.totalorder %s31, 1
      %p243 = scmp.ne.s32.totalorder %s238, %s240
      %p244 = scmp.eq.s32.totalorder %s31, 0
      %p245 = por %p243, %p244
      %p246 = scmp.ne.s32.totalorder %s238, %s240
      %p247 = scmp.eq.s32.totalorder %s36, 1
      %p248 = por %p246, %p247
      %p249 = scmp.ne.s32.totalorder %s240, %s241
      %p250 = scmp.eq.s32.totalorder %s36, 0
      %p251 = por %p249, %p250
      %p252 = scmp.ne.s32.totalorder %s240, %s241
      %p253 = scmp.eq.s32.totalorder %s37, 1
      %p254 = por %p252, %p253
      %p256 = scmp.ne.s32.totalorder %s241, %s255
      %p257 = scmp.eq.s32.totalorder %s37, 0
      %p258 = por %p256, %p257
      %s260 = sadd.s32 %s259, 1
      %p263 = scmp.eq.s32.totalorder %s31, 1
      %p264 = scmp.ne.s32.totalorder %s259, %s261
      %p265 = scmp.eq.s32.totalorder %s31, 0
      %p266 = por %p264, %p265
      %p267 = scmp.ne.s32.totalorder %s259, %s261
      %p268 = scmp.eq.s32.totalorder %s36, 1
      %p269 = por %p267, %p268
      %p270 = scmp.ne.s32.totalorder %s261, %s262
      %p271 = scmp.eq.s32.totalorder %s36, 0
      %p272 = por %p270, %p271
      %p273 = scmp.ne.s32.totalorder %s261, %s262
      %p274 = scmp.eq.s32.totalorder %s37, 1
      %p275 = por %p273, %p274
      %p277 = scmp.ne.s32.totalorder %s262, %s276
      %p278 = scmp.eq.s32.totalorder %s37, 0
      %p279 = por %p277, %p278
      %s281 = sadd.s32 %s280, 1
      %p284 = scmp.eq.s32.totalorder %s31, 1
      %p285 = scmp.ne.s32.totalorder %s280, %s282
      %p286 = scmp.eq.s32.totalorder %s31, 0
      %p287 = por %p285, %p286
      %p288 = scmp.ne.s32.totalorder %s280, %s282
      %p289 = scmp.eq.s32.totalorder %s36, 1
      %p290 = por %p288, %p289
      %p291 = scmp.ne.s32.totalorder %s282, %s283
      %p292 = scmp.eq.s32.totalorder %s36, 0
      %p293 = por %p291, %p292
      %p294 = scmp.ne.s32.totalorder %s282, %s283
      %p295 = scmp.eq.s32.totalorder %s37, 1
      %p296 = por %p294, %p295
      %p298 = scmp.ne.s32.totalorder %s283, %s297
      %p299 = scmp.eq.s32.totalorder %s37, 0
      %p300 = por %p298, %p299
      %s302 = sadd.s32 %s301, 1
      %p305 = scmp.eq.s32.totalorder %s31, 1
      %p306 = scmp.ne.s32.totalorder %s301, %s303
      %p307 = scmp.eq.s32.totalorder %s31, 0
      %p308 = por %p306, %p307
      %p309 = scmp.ne.s32.totalorder %s301, %s303
      %p310 = scmp.eq.s32.totalorder %s36, 1
      %p311 = por %p309, %p310
      %p312 = scmp.ne.s32.totalorder %s303, %s304
      %p313 = scmp.eq.s32.totalorder %s36, 0
      %p314 = por %p312, %p313
      %p315 = scmp.ne.s32.totalorder %s303, %s304
      %p316 = scmp.eq.s32.totalorder %s37, 1
      %p317 = por %p315, %p316
      %p319 = scmp.ne.s32.totalorder %s304, %s318
      %p320 = scmp.eq.s32.totalorder %s37, 0
      %p321 = por %p319, %p320
      %s323 = sadd.s32 %s322, 1
      %p326 = scmp.eq.s32.totalorder %s31, 1
      %p327 = scmp.ne.s32.totalorder %s322, %s324
      %p328 = scmp.eq.s32.totalorder %s31, 0
      %p329 = por %p327, %p328
      %p330 = scmp.ne.s32.totalorder %s322, %s324
      %p331 = scmp.eq.s32.totalorder %s36, 1
      %p332 = por %p330, %p331
      %p333 = scmp.ne.s32.totalorder %s324, %s325
      %p334 = scmp.eq.s32.totalorder %s36, 0
      %p335 = por %p333, %p334
      %p336 = scmp.ne.s32.totalorder %s324, %s325
      %p337 = scmp.eq.s32.totalorder %s37, 1
      %p338 = por %p336, %p337
      %p340 = scmp.ne.s32.totalorder %s325, %s339
      %p341 = scmp.eq.s32.totalorder %s37, 0
      %p342 = por %p340, %p341
      %s344 = sadd.s32 %s343, 1
      %p347 = scmp.eq.s32.totalorder %s31, 1
      %p348 = scmp.ne.s32.totalorder %s343, %s345
      %p349 = scmp.eq.s32.totalorder %s31, 0
      %p350 = por %p348, %p349
      %p351 = scmp.ne.s32.totalorder %s343, %s345
      %p352 = scmp.eq.s32.totalorder %s36, 1
      %p353 = por %p351, %p352
      %p354 = scmp.ne.s32.totalorder %s345, %s346
      %p355 = scmp.eq.s32.totalorder %s36, 0
      %p356 = por %p354, %p355
      %p357 = scmp.ne.s32.totalorder %s345, %s346
      %p358 = scmp.eq.s32.totalorder %s37, 1
      %p359 = por %p357, %p358
      %p361 = scmp.ne.s32.totalorder %s346, %s360
      %p362 = scmp.eq.s32.totalorder %s37, 0
      %p363 = por %p361, %p362
      %s365 = sadd.s32 %s364, 1
      %p368 = scmp.eq.s32.totalorder %s31, 1
      %p369 = scmp.ne.s32.totalorder %s364, %s366
      %p370 = scmp.eq.s32.totalorder %s31, 0
      %p371 = por %p369, %p370
      %p372 = scmp.ne.s32.totalorder %s364, %s366
      %p373 = scmp.eq.s32.totalorder %s36, 1
      %p374 = por %p372, %p373
      %p375 = scmp.ne.s32.totalorder %s366, %s367
      %p376 = scmp.eq.s32.totalorder %s36, 0
      %p377 = por %p375, %p376
      %p378 = scmp.ne.s32.totalorder %s366, %s367
      %p379 = scmp.eq.s32.totalorder %s37, 1
      %p380 = por %p378, %p379
      %p382 = scmp.ne.s32.totalorder %s367, %s381
      %p383 = scmp.eq.s32.totalorder %s37, 0
      %p384 = por %p382, %p383
      %s386 = sadd.s32 %s385, 1
      %p389 = scmp.eq.s32.totalorder %s31, 1
      %p390 = scmp.ne.s32.totalorder %s385, %s387
      %p391 = scmp.eq.s32.totalorder %s31, 0
      %p392 = por %p390, %p391
      %p393 = scmp.ne.s32.totalorder %s385, %s387
      %p394 = scmp.eq.s32.totalorder %s36, 1
      %p395 = por %p393, %p394
      %p396 = scmp.ne.s32.totalorder %s387, %s388
      %p397 = scmp.eq.s32.totalorder %s36, 0
      %p398 = por %p396, %p397
      %p399 = scmp.ne.s32.totalorder %s387, %s388
      %p400 = scmp.eq.s32.totalorder %s37, 1
      %p401 = por %p399, %p400
      %p403 = scmp.ne.s32.totalorder %s388, %s402
      %p404 = scmp.eq.s32.totalorder %s37, 0
      %p405 = por %p403, %p404
      %s407 = sadd.s32 %s406, 1
      %p410 = scmp.eq.s32.totalorder %s31, 1
      %p411 = scmp.ne.s32.totalorder %s406, %s408
      %p412 = scmp.eq.s32.totalorder %s31, 0
      %p413 = por %p411, %p412
      %p414 = scmp.ne.s32.totalorder %s406, %s408
      %p415 = scmp.eq.s32.totalorder %s36, 1
      %p416 = por %p414, %p415
      %p417 = scmp.ne.s32.totalorder %s408, %s409
      %p418 = scmp.eq.s32.totalorder %s36, 0
      %p419 = por %p417, %p418
      %p420 = scmp.ne.s32.totalorder %s408, %s409
      %p421 = scmp.eq.s32.totalorder %s37, 1
      %p422 = por %p420, %p421
      %p424 = scmp.ne.s32.totalorder %s409, %s423
      %p425 = scmp.eq.s32.totalorder %s37, 0
      %p426 = por %p424, %p425
      %s428 = sadd.s32 %s427, 1
      %p431 = scmp.eq.s32.totalorder %s31, 1
      %p432 = scmp.ne.s32.totalorder %s427, %s429
      %p433 = scmp.eq.s32.totalorder %s31, 0
      %p434 = por %p432, %p433
      %p435 = scmp.ne.s32.totalorder %s427, %s429
      %p436 = scmp.eq.s32.totalorder %s36, 1
      %p437 = por %p435, %p436
      %p438 = scmp.ne.s32.totalorder %s429, %s430
      %p439 = scmp.eq.s32.totalorder %s36, 0
      %p440 = por %p438, %p439
      %p441 = scmp.ne.s32.totalorder %s429, %s430
      %p442 = scmp.eq.s32.totalorder %s37, 1
      %p443 = por %p441, %p442
      %p445 = scmp.ne.s32.totalorder %s430, %s444
      %p446 = scmp.eq.s32.totalorder %s37, 0
      %p447 = por %p445, %p446
      %s449 = sadd.s32 %s448, 1
      %p452 = scmp.eq.s32.totalorder %s31, 1
      %p453 = scmp.ne.s32.totalorder %s448, %s450
      %p454 = scmp.eq.s32.totalorder %s31, 0
      %p455 = por %p453, %p454
      %p456 = scmp.ne.s32.totalorder %s448, %s450
      %p457 = scmp.eq.s32.totalorder %s36, 1
      %p458 = por %p456, %p457
      %p459 = scmp.ne.s32.totalorder %s450, %s451
      %p460 = scmp.eq.s32.totalorder %s36, 0
      %p461 = por %p459, %p460
      %p462 = scmp.ne.s32.totalorder %s450, %s451
      %p463 = scmp.eq.s32.totalorder %s37, 1
      %p464 = por %p462, %p463
      %p466 = scmp.ne.s32.totalorder %s451, %s465
      %p467 = scmp.eq.s32.totalorder %s37, 0
      %p468 = por %p466, %p467
      %s470 = sadd.s32 %s469, 1
      %p473 = scmp.eq.s32.totalorder %s31, 1
      %p474 = scmp.ne.s32.totalorder %s469, %s471
      %p475 = scmp.eq.s32.totalorder %s31, 0
      %p476 = por %p474, %p475
      %p477 = scmp.ne.s32.totalorder %s469, %s471
      %p478 = scmp.eq.s32.totalorder %s36, 1
      %p479 = por %p477, %p478
      %p480 = scmp.ne.s32.totalorder %s471, %s472
      %p481 = scmp.eq.s32.totalorder %s36, 0
      %p482 = por %p480, %p481
      %p483 = scmp.ne.s32.totalorder %s471, %s472
      %p484 = scmp.eq.s32.totalorder %s37, 1
      %p485 = por %p483, %p484
      %p487 = scmp.ne.s32.totalorder %s472, %s486
      %p488 = scmp.eq.s32.totalorder %s37, 0
      %p489 = por %p487, %p488
      %s491 = sadd.s32 %s490, 1
      %p494 = scmp.eq.s32.totalorder %s31, 1
      %p495 = scmp.ne.s32.totalorder %s490, %s492
      %p496 = scmp.eq.s32.totalorder %s31, 0
      %p497 = por %p495, %p496
      %p498 = scmp.ne.s32.totalorder %s490, %s492
      %p499 = scmp.eq.s32.totalorder %s36, 1
      %p500 = por %p498, %p499
      %p501 = scmp.ne.s32.totalorder %s492, %s493
      %p502 = scmp.eq.s32.totalorder %s36, 0
      %p503 = por %p501, %p502
      %p504 = scmp.ne.s32.totalorder %s492, %s493
      %p505 = scmp.eq.s32.totalorder %s37, 1
      %p506 = por %p504, %p505
      %p508 = scmp.ne.s32.totalorder %s493, %s507
      %p509 = scmp.eq.s32.totalorder %s37, 0
      %p510 = por %p508, %p509
      %s511 = ssub.s32 %s31, %s38
      %p512 = scmp.eq.s32.totalorder %s511, 0
      %s514 = sadd.s32 %s513, 1
      %s515 = scalar_select %p512, %s513, %s514
      %p518 = pneg %p512
      %p519 = scmp.eq.s32.totalorder %s31, 1
      %p520 = por %p518, %p519
      %p521 = scmp.ne.s32.totalorder %s513, %s516
      %p522 = scmp.eq.s32.totalorder %s31, 0
      %p523 = por %p521, %p522
      %p524 = scmp.ne.s32.totalorder %s513, %s516
      %p525 = scmp.eq.s32.totalorder %s36, 1
      %p526 = por %p524, %p525
      %p527 = scmp.ne.s32.totalorder %s516, %s517
      %p528 = scmp.eq.s32.totalorder %s36, 0
      %p529 = por %p527, %p528
      %p530 = scmp.ne.s32.totalorder %s516, %s517
      %p531 = scmp.eq.s32.totalorder %s37, 1
      %p532 = por %p530, %p531
      %p534 = scmp.ne.s32.totalorder %s517, %s533
      %p535 = scmp.eq.s32.totalorder %s37, 0
      %p536 = por %p534, %p535
      %p537 = scmp.le.s32.totalorder 1, %s31
      %p538 = scmp.lt.s32.totalorder %s31, 3
      %p539 = pnand %p537, %p538
      %p540 = pneg %p539
      // Predicated region
      $region9: #{trained_transformer_forward.1} parent=5 // pred_check
        _
      $region10: #{trained_transformer_forward.1} parent=5 // pred_check_branch
        %542 = sbr.rel (%p539) target = $region12
      $region11: #{trained_transformer_forward.1} parent=5 // pred_region
        %s543 = ssub.s32 %s31, 1
        // Predicated region
        $region13: #{trained_transformer_forward.1} parent=11 // pred_check
          %p544 = pneg %p104
        $region14: #{trained_transformer_forward.1} parent=11 // pred_check_branch
          %546 = sbr.rel (%p544) target = $region16
        $region15: #{trained_transformer_forward.1} parent=11 // pred_region
          _
        $region16: #{trained_transformer_forward.1} parent=11 // pred_fallthru
          _
        // Predicated region
        $region17: #{trained_transformer_forward.1} parent=11 // pred_check
          %p547 = pneg %p125
        $region18: #{trained_transformer_forward.1} parent=11 // pred_check_branch
          %549 = sbr.rel (%p547) target = $region20
        $region19: #{trained_transformer_forward.1} parent=11 // pred_region
          _
        $region20: #{trained_transformer_forward.1} parent=11 // pred_fallthru
          _
        // Predicated region
        $region21: #{trained_transformer_forward.1} parent=11 // pred_check
          %p550 = pneg %p146
        $region22: #{trained_transformer_forward.1} parent=11 // pred_check_branch
          %552 = sbr.rel (%p550) target = $region24
        $region23: #{trained_transformer_forward.1} parent=11 // pred_region
          _
        $region24: #{trained_transformer_forward.1} parent=11 // pred_fallthru
          _
        // Predicated region
        $region25: #{trained_transformer_forward.1} parent=11 // pred_check
          %p553 = pneg %p167
        $region26: #{trained_transformer_forward.1} parent=11 // pred_check_branch
          %555 = sbr.rel (%p553) target = $region28
        $region27: #{trained_transformer_forward.1} parent=11 // pred_region
          _
        $region28: #{trained_transformer_forward.1} parent=11 // pred_fallthru
          _
        // Predicated region
        $region29: #{trained_transformer_forward.1} parent=11 // pred_check
          %p556 = pneg %p188
        $region30: #{trained_transformer_forward.1} parent=11 // pred_check_branch
          %558 = sbr.rel (%p556) target = $region32
        $region31: #{trained_transformer_forward.1} parent=11 // pred_region
          _
        $region32: #{trained_transformer_forward.1} parent=11 // pred_fallthru
          _
        // Predicated region
        $region33: #{trained_transformer_forward.1} parent=11 // pred_check
          %p559 = pneg %p209
        $region34: #{trained_transformer_forward.1} parent=11 // pred_check_branch
          %561 = sbr.rel (%p559) target = $region36
        $region35: #{trained_transformer_forward.1} parent=11 // pred_region
          _
        $region36: #{trained_transformer_forward.1} parent=11 // pred_fallthru
          _
        // Predicated region
        $region37: #{trained_transformer_forward.1} parent=11 // pred_check
          %p562 = pneg %p230
        $region38: #{trained_transformer_forward.1} parent=11 // pred_check_branch
          %564 = sbr.rel (%p562) target = $region40
        $region39: #{trained_transformer_forward.1} parent=11 // pred_region
          _
        $region40: #{trained_transformer_forward.1} parent=11 // pred_fallthru
          _
        // Predicated region
        $region41: #{trained_transformer_forward.1} parent=11 // pred_check
          %p565 = pneg %p251
        $region42: #{trained_transformer_forward.1} parent=11 // pred_check_branch
          %567 = sbr.rel (%p565) target = $region44
        $region43: #{trained_transformer_forward.1} parent=11 // pred_region
          _
        $region44: #{trained_transformer_forward.1} parent=11 // pred_fallthru
          _
        // Predicated region
        $region45: #{trained_transformer_forward.1} parent=11 // pred_check
          %p568 = pneg %p272
        $region46: #{trained_transformer_forward.1} parent=11 // pred_check_branch
          %570 = sbr.rel (%p568) target = $region48
        $region47: #{trained_transformer_forward.1} parent=11 // pred_region
          _
        $region48: #{trained_transformer_forward.1} parent=11 // pred_fallthru
          _
        // Predicated region
        $region49: #{trained_transformer_forward.1} parent=11 // pred_check
          %p571 = pneg %p293
        $region50: #{trained_transformer_forward.1} parent=11 // pred_check_branch
          %573 = sbr.rel (%p571) target = $region52
        $region51: #{trained_transformer_forward.1} parent=11 // pred_region
          _
        $region52: #{trained_transformer_forward.1} parent=11 // pred_fallthru
          _
        // Predicated region
        $region53: #{trained_transformer_forward.1} parent=11 // pred_check
          %p574 = pneg %p314
        $region54: #{trained_transformer_forward.1} parent=11 // pred_check_branch
          %576 = sbr.rel (%p574) target = $region56
        $region55: #{trained_transformer_forward.1} parent=11 // pred_region
          _
        $region56: #{trained_transformer_forward.1} parent=11 // pred_fallthru
          _
        // Predicated region
        $region57: #{trained_transformer_forward.1} parent=11 // pred_check
          %p577 = pneg %p335
        $region58: #{trained_transformer_forward.1} parent=11 // pred_check_branch
          %579 = sbr.rel (%p577) target = $region60
        $region59: #{trained_transformer_forward.1} parent=11 // pred_region
          _
        $region60: #{trained_transformer_forward.1} parent=11 // pred_fallthru
          _
        // Predicated region
        $region61: #{trained_transformer_forward.1} parent=11 // pred_check
          %p580 = pneg %p356
        $region62: #{trained_transformer_forward.1} parent=11 // pred_check_branch
          %582 = sbr.rel (%p580) target = $region64
        $region63: #{trained_transformer_forward.1} parent=11 // pred_region
          _
        $region64: #{trained_transformer_forward.1} parent=11 // pred_fallthru
          _
        // Predicated region
        $region65: #{trained_transformer_forward.1} parent=11 // pred_check
          %p583 = pneg %p377
        $region66: #{trained_transformer_forward.1} parent=11 // pred_check_branch
          %585 = sbr.rel (%p583) target = $region68
        $region67: #{trained_transformer_forward.1} parent=11 // pred_region
          _
        $region68: #{trained_transformer_forward.1} parent=11 // pred_fallthru
          _
        // Predicated region
        $region69: #{trained_transformer_forward.1} parent=11 // pred_check
          %p586 = pneg %p398
        $region70: #{trained_transformer_forward.1} parent=11 // pred_check_branch
          %588 = sbr.rel (%p586) target = $region72
        $region71: #{trained_transformer_forward.1} parent=11 // pred_region
          _
        $region72: #{trained_transformer_forward.1} parent=11 // pred_fallthru
          _
        // Predicated region
        $region73: #{trained_transformer_forward.1} parent=11 // pred_check
          %p589 = pneg %p419
        $region74: #{trained_transformer_forward.1} parent=11 // pred_check_branch
          %591 = sbr.rel (%p589) target = $region76
        $region75: #{trained_transformer_forward.1} parent=11 // pred_region
          _
        $region76: #{trained_transformer_forward.1} parent=11 // pred_fallthru
          _
        // Predicated region
        $region77: #{trained_transformer_forward.1} parent=11 // pred_check
          %p592 = pneg %p440
        $region78: #{trained_transformer_forward.1} parent=11 // pred_check_branch
          %594 = sbr.rel (%p592) target = $region80
        $region79: #{trained_transformer_forward.1} parent=11 // pred_region
          _
        $region80: #{trained_transformer_forward.1} parent=11 // pred_fallthru
          _
        // Predicated region
        $region81: #{trained_transformer_forward.1} parent=11 // pred_check
          %p595 = pneg %p461
        $region82: #{trained_transformer_forward.1} parent=11 // pred_check_branch
          %597 = sbr.rel (%p595) target = $region84
        $region83: #{trained_transformer_forward.1} parent=11 // pred_region
          _
        $region84: #{trained_transformer_forward.1} parent=11 // pred_fallthru
          _
        // Predicated region
        $region85: #{trained_transformer_forward.1} parent=11 // pred_check
          %p598 = pneg %p482
        $region86: #{trained_transformer_forward.1} parent=11 // pred_check_branch
          %600 = sbr.rel (%p598) target = $region88
        $region87: #{trained_transformer_forward.1} parent=11 // pred_region
          _
        $region88: #{trained_transformer_forward.1} parent=11 // pred_fallthru
          _
        // Predicated region
        $region89: #{trained_transformer_forward.1} parent=11 // pred_check
          %p601 = pneg %p503
        $region90: #{trained_transformer_forward.1} parent=11 // pred_check_branch
          %603 = sbr.rel (%p601) target = $region92
        $region91: #{trained_transformer_forward.1} parent=11 // pred_region
          _
        $region92: #{trained_transformer_forward.1} parent=11 // pred_fallthru
          _
      $region12: #{trained_transformer_forward.1} parent=5 // pred_fallthru
        _
      %p604 = scmp.lt.s32.totalorder %s31, 2
      // Predicated region
      $region93: #{trained_transformer_forward.1} parent=5 // pred_check
        %p605 = pneg %p604
      $region94: #{trained_transformer_forward.1} parent=5 // pred_check_branch
        %607 = sbr.rel (%p605) target = $region96
      $region95: #{trained_transformer_forward.1} parent=5 // pred_region
        // Predicated region
        $region97: #{trained_transformer_forward.1} parent=95 // pred_check
          %p608 = pneg %p51
        $region98: #{trained_transformer_forward.1} parent=95 // pred_check_branch
          %610 = sbr.rel (%p608) target = $region100
        $region99: #{trained_transformer_forward.1} parent=95 // pred_region
          %s611 = smul.u32 2, %s31
          %p612 = scmp.lt.s32.totalorder %s611, 3
          %s613 = scalar_select %p612, %s611, 3
          %s614 = smul.addr %s613, 8
          %s615 = scalar_lea.vmem %s0, %s614
          %s616 = smul.u32 2, %s31
        $region100: #{trained_transformer_forward.1} parent=95 // pred_fallthru
          _
        // Predicated region
        $region101: #{trained_transformer_forward.1} parent=95 // pred_check
          %p617 = pneg %p77
        $region102: #{trained_transformer_forward.1} parent=95 // pred_check_branch
          %619 = sbr.rel (%p617) target = $region104
        $region103: #{trained_transformer_forward.1} parent=95 // pred_region
          %p620 = scmp.lt.s32.totalorder %s31, 1
          %s621 = scalar_select %p620, %s31, 1
          %s622 = scalar_lea.vmem %s1, %s621
        $region104: #{trained_transformer_forward.1} parent=95 // pred_fallthru
          _
      $region96: #{trained_transformer_forward.1} parent=5 // pred_fallthru
        _
      %p623 = scmp.le.s32.totalorder 1, %s31
      %p624 = scmp.lt.s32.totalorder %s31, 3
      %p625 = pnand %p623, %p624
      %p626 = pneg %p625
      // Predicated region
      $region105: #{trained_transformer_forward.1} parent=5 // pred_check
        _
      $region106: #{trained_transformer_forward.1} parent=5 // pred_check_branch
        %628 = sbr.rel (%p625) target = $region108
      $region107: #{trained_transformer_forward.1} parent=5 // pred_region
        %s629 = ssub.s32 %s31, 1
        %s630 = smul.u32 2, %s36
        %p631 = scmp.lt.s32.totalorder %s630, 3
        %s632 = scalar_select %p631, %s630, 3
        %s633 = smul.addr %s632, 8
        %s634 = scalar_lea.vmem %s0, %s633
        %p635 = pneg %p57
        %p636 = pneg %p54
        %p637 = scmp.lt.s32.totalorder %s36, 1
        %s638 = scalar_select %p637, %s36, 1
        %s639 = scalar_lea.vmem %s1, %s638
        %p640 = pneg %p83
        %p641 = pneg %p80
        %p642 = pneg %p104
        %p643 = pneg %p101
        %p644 = pneg %p125
        %p645 = pneg %p122
        %p646 = pneg %p146
        %p647 = pneg %p143
        %p648 = pneg %p167
        %p649 = pneg %p164
        %p650 = pneg %p188
        %p651 = pneg %p185
        %p652 = pneg %p209
        %p653 = pneg %p206
        %p654 = pneg %p230
        %p655 = pneg %p227
        %p656 = pneg %p251
        %p657 = pneg %p248
        %p658 = pneg %p272
        %p659 = pneg %p269
        %p660 = pneg %p293
        %p661 = pneg %p290
        %p662 = pneg %p314
        %p663 = pneg %p311
        %p664 = pneg %p335
        %p665 = pneg %p332
        %p666 = pneg %p356
        %p667 = pneg %p353
        %p668 = pneg %p377
        %p669 = pneg %p374
        %p670 = pneg %p398
        %p671 = pneg %p395
        %p672 = pneg %p419
        %p673 = pneg %p416
        %p674 = pneg %p440
        %p675 = pneg %p437
        %p676 = pneg %p461
        %p677 = pneg %p458
        %p678 = pneg %p482
        %p679 = pneg %p479
        %p680 = pneg %p503
        %p681 = pneg %p500
        %p682 = pneg %p529
        %p683 = pneg %p526
        %s684 = sand.u32 %s516, 1
        %s685 = scalar_lea.sflag [#allocation3], %s684
        %s686 = sand.u32 %s516, 1
        %s687 = smul.addr %s686, 16
        %s688 = scalar_lea.vmem [#allocation2], %s687
        %s689 = smul.u32 2, %s36
        %p690 = scmp.lt.s32.totalorder %s689, 3
        %s691 = scalar_select %p690, %s689, 3
        %s692 = smul.addr %s691, 8
        %s693 = scalar_lea.vmem %s0, %s692
        %s694 = smul.u32 2, %s36
        %p695 = scmp.lt.s32.totalorder %s36, 1
        %s696 = scalar_select %p695, %s36, 1
        %s697 = scalar_lea.vmem %s1, %s696
        %v699 = vld [vmem:[%s693] sm:$0xff]
        %v700 = vld [vmem:[%s693 + $0x8] sm:$0xff]
        %v701 = vlaneseq
        %v702 = vand.u32 %v701, 127
        %703 = vset.pattern.permute.xlu0 0
        %704 = vperm.xlu0 %703, %v699
        %v705 = vpop.permute.xlu0 %704
        %706 = vset.pattern.permute.xlu0 0
        %707 = vperm.xlu0 %706, %v700
        %v708 = vpop.permute.xlu0 %707
        %vm709 = vcmp.eq.s32.totalorder %v702, %v705
        %vm710 = vcmp.eq.s32.totalorder %v702, %v708
        %v711 = vsel %vm709, 1, 0
        %v712 = vsel %vm710, 1, 0
        %v713 = vcvt.s32.f32 %v711
        %v714 = vcvt.s32.f32 %v712
        %v715 = vpack.c.bf16 %v714, %v713
        %v716 = vld [vmem:[%s2] sm:$0xf]
        %v717 = vld [vmem:[%s2 + $0x4] sm:$0xf]
        %v718 = vld [vmem:[%s2 + $0x8] sm:$0xf]
        %v719 = vld [vmem:[%s2 + $0xc] sm:$0xf]
        %v720 = vld [vmem:[%s2 + $0x10] sm:$0xf]
        %v721 = vld [vmem:[%s2 + $0x14] sm:$0xf]
        %v722 = vld [vmem:[%s2 + $0x18] sm:$0xf]
        %v723 = vld [vmem:[%s2 + $0x1c] sm:$0xf]
        %v724 = vld [vmem:[%s2 + $0x20] sm:$0xf]
        %v725 = vld [vmem:[%s2 + $0x24] sm:$0xf]
        %v726 = vld [vmem:[%s2 + $0x28] sm:$0xf]
        %v727 = vld [vmem:[%s2 + $0x2c] sm:$0xf]
        %v728 = vld [vmem:[%s2 + $0x30] sm:$0xf]
        %v729 = vld [vmem:[%s2 + $0x34] sm:$0xf]
        %v730 = vld [vmem:[%s2 + $0x38] sm:$0xf]
        %v731 = vld [vmem:[%s2 + $0x3c] sm:$0xf]
        %v748 = vunpack.c.l.b16 %v716
        %v749 = vunpack.c.l.b16 %v717
        %v750 = vunpack.c.l.b16 %v718
        %v751 = vunpack.c.l.b16 %v719
        %v752 = vunpack.c.l.b16 %v720
        %v753 = vunpack.c.l.b16 %v721
        %v754 = vunpack.c.l.b16 %v722
        %v755 = vunpack.c.l.b16 %v723
        %v756 = vunpack.c.l.b16 %v724
        %v757 = vunpack.c.l.b16 %v725
        %v758 = vunpack.c.l.b16 %v726
        %v759 = vunpack.c.l.b16 %v727
        %v760 = vunpack.c.l.b16 %v728
        %v761 = vunpack.c.l.b16 %v729
        %v762 = vunpack.c.l.b16 %v730
        %v763 = vunpack.c.l.b16 %v731
        %v764 = vpack.c.b16 %v749, %v748
        %v765 = vpack.c.b16 %v751, %v750
        %v766 = vpack.c.b16 %v753, %v752
        %v767 = vpack.c.b16 %v755, %v754
        %v768 = vpack.c.b16 %v757, %v756
        %v769 = vpack.c.b16 %v759, %v758
        %v770 = vpack.c.b16 %v761, %v760
        %v771 = vpack.c.b16 %v763, %v762
        %780 = vmatprep.subr.bf16.mxu0 0
        %781 = vmatpush1.bf16.msra.mxu0 %v764
        %782 = vmatprep.subr.bf16.mxu0 0
        %783 = vmatpush1.bf16.msra.mxu0 %v765
        %784 = vmatprep.subr.bf16.mxu0 0
        %785 = vmatpush1.bf16.msra.mxu0 %v766
        %786 = vmatprep.subr.bf16.mxu0 0
        %787 = vmatpush1.bf16.msra.mxu0 %v767
        %788 = vmatprep.subr.bf16.mxu0 0
        %789 = vmatpush1.bf16.msra.mxu0 %v768
        %790 = vmatprep.subr.bf16.mxu0 0
        %791 = vmatpush1.bf16.msra.mxu0 %v769
        %792 = vmatprep.subr.bf16.mxu0 0
        %793 = vmatpush1.bf16.msra.mxu0 %v770
        %794 = vmatprep.subr.bf16.mxu0 0
        %795 = vmatpush1.bf16.msra.mxu0 %v771
        %796 = vmatprep.subr.bf16.mxu0 0
        %797 = vmatpush1.bf16.msra.mxu0 0
        %798 = vmatprep.subr.bf16.mxu0 0
        %799 = vmatpush1.bf16.msra.mxu0 0
        %800 = vmatprep.subr.bf16.mxu0 0
        %801 = vmatpush1.bf16.msra.mxu0 0
        %802 = vmatprep.subr.bf16.mxu0 0
        %803 = vmatpush1.bf16.msra.mxu0 0
        %804 = vmatprep.subr.bf16.mxu0 0
        %805 = vmatpush1.bf16.msra.mxu0 0
        %806 = vmatprep.subr.bf16.mxu0 0
        %807 = vmatpush1.bf16.msra.mxu0 0
        %808 = vmatprep.subr.bf16.mxu0 0
        %809 = vmatpush1.bf16.msra.mxu0 0
        %810 = vmatprep.subr.bf16.mxu0 0
        %811 = vmatpush1.bf16.msra.mxu0 0
        %812 = vmatprep.mubr.bf16.mxu0 0
        %813 = vmatmul.mubr.bf16.gmra.mrb[0].mxu0 %v715
        %v814 = vpop.f32.mrb[0].mxu0
        %v815 = vadd.f32 0.0, %v814
        %v816 = vpop.f32.mrb[0].mxu0
        %v817 = vpop.f32.mrb[0].mxu0
        %v818 = vadd.f32 0.0, %v817
        %v819 = vpop.f32.mrb[0].mxu0
        %820 = vdwg.mxu0
        %v821 = vmul.f32 %v815, 5.656854
        %v822 = vmul.f32 %v818, 5.656854
        %v823 = vld [vmem:[%s3] sm:$0xff]
        %v824 = vld [vmem:[%s3 + $0x8] sm:$0xff]
        %v825 = vadd.f32 %v821, %v823
        %v826 = vadd.f32 %v822, %v824
        %v827 = vld [vmem:[%s697] sm:$0x1]
        %vm828 = vcmp.eq.s32.totalorder %v827, 0
        %v829 = vsel %vm828, -1e+09, 0.0
        %v830 = vpack.c.bf16 %v826, %v825
        %v831 = vld [vmem:[%s4] sm:$0xf]
        %v832 = vld [vmem:[%s4 + $0x4] sm:$0xf]
        %v833 = vld [vmem:[%s4 + $0x8] sm:$0xf]
        %v834 = vld [vmem:[%s4 + $0xc] sm:$0xf]
        %v835 = vld [vmem:[%s5] sm:$0x1]
        %v837 = vlaneseq
        %v838 = vshrl.u32 %v837, 7
        %v839 = vsub.s32 0, %v838
        %v840 = vrot.slane %v835, %v839
        %v846 = vunpack.c.l.b16 %v831
        %v847 = vunpack.c.l.b16 %v832
        %v848 = vunpack.c.l.b16 %v833
        %v849 = vunpack.c.l.b16 %v834
        %v850 = vpack.c.b16 %v847, %v846
        %v851 = vpack.c.b16 %v849, %v848
        %vm854 = vcmask 261120
        %v856 = vsel %vm854, %v830, 0
        %858 = vmatprep.subr.bf16.mxu0 0
        %859 = vmatpush1.bf16.msra.mxu0 %v850
        %860 = vmatprep.subr.bf16.mxu0 0
        %861 = vmatpush1.bf16.msra.mxu0 %v851
        %862 = vmatprep.subr.bf16.mxu0 0
        %863 = vmatpush1.bf16.msra.mxu0 0
        %864 = vmatprep.subr.bf16.mxu0 0
        %865 = vmatpush1.bf16.msra.mxu0 0
        %866 = vmatprep.subr.bf16.mxu0 0
        %867 = vmatpush1.bf16.msra.mxu0 0
        %868 = vmatprep.subr.bf16.mxu0 0
        %869 = vmatpush1.bf16.msra.mxu0 0
        %870 = vmatprep.subr.bf16.mxu0 0
        %871 = vmatpush1.bf16.msra.mxu0 0
        %872 = vmatprep.subr.bf16.mxu0 0
        %873 = vmatpush1.bf16.msra.mxu0 0
        %874 = vmatprep.subr.bf16.mxu0 0
        %875 = vmatpush1.bf16.msra.mxu0 0
        %876 = vmatprep.subr.bf16.mxu0 0
        %877 = vmatpush1.bf16.msra.mxu0 0
        %878 = vmatprep.subr.bf16.mxu0 0
        %879 = vmatpush1.bf16.msra.mxu0 0
        %880 = vmatprep.subr.bf16.mxu0 0
        %881 = vmatpush1.bf16.msra.mxu0 0
        %882 = vmatprep.subr.bf16.mxu0 0
        %883 = vmatpush1.bf16.msra.mxu0 0
        %884 = vmatprep.subr.bf16.mxu0 0
        %885 = vmatpush1.bf16.msra.mxu0 0
        %886 = vmatprep.subr.bf16.mxu0 0
        %887 = vmatpush1.bf16.msra.mxu0 0
        %888 = vmatprep.subr.bf16.mxu0 0
        %889 = vmatpush1.bf16.msra.mxu0 0
        %890 = vmatprep.mubr.bf16.mxu0 0
        %891 = vmatmul.mubr.bf16.gmra.mrb[0].mxu0 %v856
        %v892 = vpop.f32.mrb[0].mxu0
        %v893 = vadd.f32 %v840, %v892
        %v894 = vpop.f32.mrb[0].mxu0
        %v895 = vpop.f32.mrb[0].mxu0
        %v896 = vadd.f32 %v840, %v895
        %v897 = vpop.f32.mrb[0].mxu0
        %898 = vdwg.mxu0
        %v899 = vld [vmem:[%s6] sm:$0xf]
        %v900 = vld [vmem:[%s6 + $0x4] sm:$0xf]
        %v901 = vld [vmem:[%s6 + $0x8] sm:$0xf]
        %v902 = vld [vmem:[%s6 + $0xc] sm:$0xf]
        %v903 = vld [vmem:[%s7] sm:$0x1]
        %v905 = vlaneseq
        %v906 = vshrl.u32 %v905, 7
        %v907 = vsub.s32 0, %v906
        %v908 = vrot.slane %v903, %v907
        %v914 = vunpack.c.l.b16 %v899
        %v915 = vunpack.c.l.b16 %v900
        %v916 = vunpack.c.l.b16 %v901
        %v917 = vunpack.c.l.b16 %v902
        %v918 = vpack.c.b16 %v915, %v914
        %v919 = vpack.c.b16 %v917, %v916
        %922 = vmatprep.subr.bf16.mxu0 0
        %923 = vmatpush1.bf16.msra.mxu0 %v918
        %924 = vmatprep.subr.bf16.mxu0 0
        %925 = vmatpush1.bf16.msra.mxu0 %v919
        %926 = vmatprep.subr.bf16.mxu0 0
        %927 = vmatpush1.bf16.msra.mxu0 0
        %928 = vmatprep.subr.bf16.mxu0 0
        %929 = vmatpush1.bf16.msra.mxu0 0
        %930 = vmatprep.subr.bf16.mxu0 0
        %931 = vmatpush1.bf16.msra.mxu0 0
        %932 = vmatprep.subr.bf16.mxu0 0
        %933 = vmatpush1.bf16.msra.mxu0 0
        %934 = vmatprep.subr.bf16.mxu0 0
        %935 = vmatpush1.bf16.msra.mxu0 0
        %936 = vmatprep.subr.bf16.mxu0 0
        %937 = vmatpush1.bf16.msra.mxu0 0
        %938 = vmatprep.subr.bf16.mxu0 0
        %939 = vmatpush1.bf16.msra.mxu0 0
        %940 = vmatprep.subr.bf16.mxu0 0
        %941 = vmatpush1.bf16.msra.mxu0 0
        %942 = vmatprep.subr.bf16.mxu0 0
        %943 = vmatpush1.bf16.msra.mxu0 0
        %944 = vmatprep.subr.bf16.mxu0 0
        %945 = vmatpush1.bf16.msra.mxu0 0
        %946 = vmatprep.subr.bf16.mxu0 0
        %947 = vmatpush1.bf16.msra.mxu0 0
        %948 = vmatprep.subr.bf16.mxu0 0
        %949 = vmatpush1.bf16.msra.mxu0 0
        %950 = vmatprep.subr.bf16.mxu0 0
        %951 = vmatpush1.bf16.msra.mxu0 0
        %952 = vmatprep.subr.bf16.mxu0 0
        %953 = vmatpush1.bf16.msra.mxu0 0
        %954 = vmatprep.mubr.bf16.mxu0 0
        %955 = vmatmul.mubr.bf16.gmra.mrb[0].mxu0 %v856
        %v956 = vpop.f32.mrb[0].mxu0
        %v957 = vadd.f32 %v908, %v956
        %v958 = vpop.f32.mrb[0].mxu0
        %v959 = vpop.f32.mrb[0].mxu0
        %v960 = vadd.f32 %v908, %v959
        %v961 = vpop.f32.mrb[0].mxu0
        %962 = vdwg.mxu0
        %v963 = vld [vmem:[%s8] sm:$0xf]
        %v964 = vld [vmem:[%s8 + $0x4] sm:$0xf]
        %v965 = vld [vmem:[%s8 + $0x8] sm:$0xf]
        %v966 = vld [vmem:[%s8 + $0xc] sm:$0xf]
        %v967 = vld [vmem:[%s9] sm:$0x1]
        %v969 = vlaneseq
        %v970 = vshrl.u32 %v969, 7
        %v971 = vsub.s32 0, %v970
        %v972 = vrot.slane %v967, %v971
        %v978 = vunpack.c.l.b16 %v963
        %v979 = vunpack.c.l.b16 %v964
        %v980 = vunpack.c.l.b16 %v965
        %v981 = vunpack.c.l.b16 %v966
        %v982 = vpack.c.b16 %v979, %v978
        %v983 = vpack.c.b16 %v981, %v980
        %986 = vmatprep.subr.bf16.mxu0 0
        %987 = vmatpush1.bf16.msra.mxu0 %v982
        %988 = vmatprep.subr.bf16.mxu0 0
        %989 = vmatpush1.bf16.msra.mxu0 %v983
        %990 = vmatprep.subr.bf16.mxu0 0
        %991 = vmatpush1.bf16.msra.mxu0 0
        %992 = vmatprep.subr.bf16.mxu0 0
        %993 = vmatpush1.bf16.msra.mxu0 0
        %994 = vmatprep.subr.bf16.mxu0 0
        %995 = vmatpush1.bf16.msra.mxu0 0
        %996 = vmatprep.subr.bf16.mxu0 0
        %997 = vmatpush1.bf16.msra.mxu0 0
        %998 = vmatprep.subr.bf16.mxu0 0
        %999 = vmatpush1.bf16.msra.mxu0 0
        %1000 = vmatprep.subr.bf16.mxu0 0
        %1001 = vmatpush1.bf16.msra.mxu0 0
        %1002 = vmatprep.subr.bf16.mxu0 0
        %1003 = vmatpush1.bf16.msra.mxu0 0
        %1004 = vmatprep.subr.bf16.mxu0 0
        %1005 = vmatpush1.bf16.msra.mxu0 0
        %1006 = vmatprep.subr.bf16.mxu0 0
        %1007 = vmatpush1.bf16.msra.mxu0 0
        %1008 = vmatprep.subr.bf16.mxu0 0
        %1009 = vmatpush1.bf16.msra.mxu0 0
        %1010 = vmatprep.subr.bf16.mxu0 0
        %1011 = vmatpush1.bf16.msra.mxu0 0
        %1012 = vmatprep.subr.bf16.mxu0 0
        %1013 = vmatpush1.bf16.msra.mxu0 0
        %1014 = vmatprep.subr.bf16.mxu0 0
        %1015 = vmatpush1.bf16.msra.mxu0 0
        %1016 = vmatprep.subr.bf16.mxu0 0
        %1017 = vmatpush1.bf16.msra.mxu0 0
        %1018 = vmatprep.mubr.bf16.mxu0 0
        %1019 = vmatmul.mubr.bf16.gmra.mrb[0].mxu0 %v856
        %v1020 = vpop.f32.mrb[0].mxu0
        %v1021 = vadd.f32 %v972, %v1020
        %v1022 = vpop.f32.mrb[0].mxu0
        %v1023 = vpop.f32.mrb[0].mxu0
        %v1024 = vadd.f32 %v972, %v1023
        %v1025 = vpop.f32.mrb[0].mxu0
        %1026 = vdwg.mxu0
        %v1027 = vpack.c.bf16 %v896, %v893
        %v1028 = vpack.c.bf16 %v960, %v957
        %vm1029 = vcmask 130048
        %v1031 = vsel %vm1029, %v1027, 0
        %v1034 = vsel %vm1029, %v1028, 0
        %1036 = vmatprep.subr.bf16.mxu0 0
        %1037 = vmatpush1.bf16.xpose.msra.mxu0 %v1034
        %1038 = vmatprep.subr.bf16.mxu0 0
        %1039 = vmatpush1.bf16.xpose.msra.mxu0 0
        %1040 = vmatprep.subr.bf16.mxu0 0
        %1041 = vmatpush1.bf16.xpose.msra.mxu0 0
        %1042 = vmatprep.subr.bf16.mxu0 0
        %1043 = vmatpush1.bf16.xpose.msra.mxu0 0
        %1044 = vmatprep.subr.bf16.mxu0 0
        %1045 = vmatpush1.bf16.xpose.msra.mxu0 0
        %1046 = vmatprep.subr.bf16.mxu0 0
        %1047 = vmatpush1.bf16.xpose.msra.mxu0 0
        %1048 = vmatprep.subr.bf16.mxu0 0
        %1049 = vmatpush1.bf16.xpose.msra.mxu0 0
        %1050 = vmatprep.subr.bf16.mxu0 0
        %1051 = vmatpush1.bf16.xpose.msra.mxu0 0
        %1052 = vmatprep.subr.bf16.mxu0 0
        %1053 = vmatpush1.bf16.xpose.msra.mxu0 0
        %1054 = vmatprep.subr.bf16.mxu0 0
        %1055 = vmatpush1.bf16.xpose.msra.mxu0 0
        %1056 = vmatprep.subr.bf16.mxu0 0
        %1057 = vmatpush1.bf16.xpose.msra.mxu0 0
        %1058 = vmatprep.subr.bf16.mxu0 0
        %1059 = vmatpush1.bf16.xpose.msra.mxu0 0
        %1060 = vmatprep.subr.bf16.mxu0 0
        %1061 = vmatpush1.bf16.xpose.msra.mxu0 0
        %1062 = vmatprep.subr.bf16.mxu0 0
        %1063 = vmatpush1.bf16.xpose.msra.mxu0 0
        %1064 = vmatprep.subr.bf16.mxu0 0
        %1065 = vmatpush1.bf16.xpose.msra.mxu0 0
        %1066 = vmatprep.subr.bf16.mxu0 0
        %1067 = vmatpush1.bf16.xpose.msra.mxu0 0
        %1068 = vmatprep.mubr.bf16.mxu0 0
        %1069 = vmatmul.mubr.bf16.gmra.mrb[0].mxu0 %v1031
        %v1070 = vpop.f32.mrb[0].mxu0
        %v1071 = vadd.f32 0.0, %v1070
        %v1072 = vpop.f32.mrb[0].mxu0
        %v1073 = vpop.f32.mrb[0].mxu0
        %v1074 = vadd.f32 0.0, %v1073
        %v1075 = vpop.f32.mrb[0].mxu0
        %1076 = vdwg.mxu0
        %v1077 = vmul.f32 %v1071, 0.25
        %v1078 = vmul.f32 %v1074, 0.25
        %v1080 = vlaneseq
        %v1081 = vshrl.u32 %v1080, 7
        %v1082 = vsub.s32 0, %v1081
        %v1083 = vrot.slane %v829, %v1082
        %v1085 = vadd.f32 %v1077, %v1083
        %v1086 = vadd.f32 %v1078, %v1083
        %v1087 = vsel %vm1029, %v1085, -inf
        %1088 = vmax.xlane.f32.xlu0 %v1087
        %v1089 = vpop.xlane.xlu0 %1088
        %v1090 = vsel %vm1029, %v1086, -inf
        %1091 = vmax.xlane.f32.xlu0 %v1090
        %v1092 = vpop.xlane.xlu0 %1091
        %v1093 = vsub.f32 %v1085, %v1089
        %v1094 = vsub.f32 %v1086, %v1092
        %v1095 = vmul.f32 %v1093, 1.442695
        %v1096 = vpow.pop %v1095
        %v1097 = vmul.f32 %v1094, 1.442695
        %v1098 = vpow.pop %v1097
        %v1099 = vsel %vm1029, %v1096, 0.0
        %1100 = vadd.xlane.f32.xlu0 %v1099
        %v1101 = vpop.xlane.xlu0 %1100
        %v1102 = vsel %vm1029, %v1098, 0.0
        %1103 = vadd.xlane.f32.xlu0 %v1102
        %v1104 = vpop.xlane.xlu0 %1103
        %v1105 = vrcp.pop %v1101
        %v1106 = vrcp.pop %v1104
        %v1107 = vmul.f32 %v1096, %v1105
        %v1108 = vmul.f32 %v1098, %v1106
        %v1109 = vpack.c.bf16 %v1108, %v1107
        %v1110 = vpack.c.bf16 %v1024, %v1021
        %v1112 = vsel %vm1029, %v1109, 0
        %1114 = vmatprep.subr.bf16.mxu0 0
        %1115 = vmatpush1.bf16.msra.mxu0 %v1110
        %1116 = vmatprep.subr.bf16.mxu0 0
        %1117 = vmatpush1.bf16.msra.mxu0 0
        %1118 = vmatprep.subr.bf16.mxu0 0
        %1119 = vmatpush1.bf16.msra.mxu0 0
        %1120 = vmatprep.subr.bf16.mxu0 0
        %1121 = vmatpush1.bf16.msra.mxu0 0
        %1122 = vmatprep.subr.bf16.mxu0 0
        %1123 = vmatpush1.bf16.msra.mxu0 0
        %1124 = vmatprep.subr.bf16.mxu0 0
        %1125 = vmatpush1.bf16.msra.mxu0 0
        %1126 = vmatprep.subr.bf16.mxu0 0
        %1127 = vmatpush1.bf16.msra.mxu0 0
        %1128 = vmatprep.subr.bf16.mxu0 0
        %1129 = vmatpush1.bf16.msra.mxu0 0
        %1130 = vmatprep.subr.bf16.mxu0 0
        %1131 = vmatpush1.bf16.msra.mxu0 0
        %1132 = vmatprep.subr.bf16.mxu0 0
        %1133 = vmatpush1.bf16.msra.mxu0 0
        %1134 = vmatprep.subr.bf16.mxu0 0
        %1135 = vmatpush1.bf16.msra.mxu0 0
        %1136 = vmatprep.subr.bf16.mxu0 0
        %1137 = vmatpush1.bf16.msra.mxu0 0
        %1138 = vmatprep.subr.bf16.mxu0 0
        %1139 = vmatpush1.bf16.msra.mxu0 0
        %1140 = vmatprep.subr.bf16.mxu0 0
        %1141 = vmatpush1.bf16.msra.mxu0 0
        %1142 = vmatprep.subr.bf16.mxu0 0
        %1143 = vmatpush1.bf16.msra.mxu0 0
        %1144 = vmatprep.subr.bf16.mxu0 0
        %1145 = vmatpush1.bf16.msra.mxu0 0
        %1146 = vmatprep.mubr.bf16.mxu0 0
        %1147 = vmatmul.mubr.bf16.gmra.mrb[0].mxu0 %v1112
        %v1148 = vpop.f32.mrb[0].mxu0
        %v1149 = vadd.f32 0.0, %v1148
        %v1150 = vpop.f32.mrb[0].mxu0
        %v1151 = vpop.f32.mrb[0].mxu0
        %v1152 = vadd.f32 0.0, %v1151
        %v1153 = vpop.f32.mrb[0].mxu0
        %1154 = vdwg.mxu0
        %v1155 = vpack.c.bf16 %v1152, %v1149
        %v1156 = vld [vmem:[%s10] sm:$0xf]
        %v1157 = vld [vmem:[%s10 + $0x4] sm:$0xf]
        %s1158 = scalar_lea.vmem %s4, 16
        %v1159 = vld [vmem:[%s1158] sm:$0xf]
        %v1160 = vld [vmem:[%s1158 + $0x4] sm:$0xf]
        %v1161 = vld [vmem:[%s1158 + $0x8] sm:$0xf]
        %v1162 = vld [vmem:[%s1158 + $0xc] sm:$0xf]
        %s1163 = scalar_lea.vmem %s5, 1
        %v1164 = vld [vmem:[%s1163] sm:$0x1]
        %v1166 = vlaneseq
        %v1167 = vshrl.u32 %v1166, 7
        %v1168 = vsub.s32 0, %v1167
        %v1169 = vrot.slane %v1164, %v1168
        %v1175 = vunpack.c.l.b16 %v1159
        %v1176 = vunpack.c.l.b16 %v1160
        %v1177 = vunpack.c.l.b16 %v1161
        %v1178 = vunpack.c.l.b16 %v1162
        %v1179 = vpack.c.b16 %v1176, %v1175
        %v1180 = vpack.c.b16 %v1178, %v1177
        %1183 = vmatprep.subr.bf16.mxu0 0
        %1184 = vmatpush1.bf16.msra.mxu0 %v1179
        %1185 = vmatprep.subr.bf16.mxu0 0
        %1186 = vmatpush1.bf16.msra.mxu0 %v1180
        %1187 = vmatprep.subr.bf16.mxu0 0
        %1188 = vmatpush1.bf16.msra.mxu0 0
        %1189 = vmatprep.subr.bf16.mxu0 0
        %1190 = vmatpush1.bf16.msra.mxu0 0
        %1191 = vmatprep.subr.bf16.mxu0 0
        %1192 = vmatpush1.bf16.msra.mxu0 0
        %1193 = vmatprep.subr.bf16.mxu0 0
        %1194 = vmatpush1.bf16.msra.mxu0 0
        %1195 = vmatprep.subr.bf16.mxu0 0
        %1196 = vmatpush1.bf16.msra.mxu0 0
        %1197 = vmatprep.subr.bf16.mxu0 0
        %1198 = vmatpush1.bf16.msra.mxu0 0
        %1199 = vmatprep.subr.bf16.mxu0 0
        %1200 = vmatpush1.bf16.msra.mxu0 0
        %1201 = vmatprep.subr.bf16.mxu0 0
        %1202 = vmatpush1.bf16.msra.mxu0 0
        %1203 = vmatprep.subr.bf16.mxu0 0
        %1204 = vmatpush1.bf16.msra.mxu0 0
        %1205 = vmatprep.subr.bf16.mxu0 0
        %1206 = vmatpush1.bf16.msra.mxu0 0
        %1207 = vmatprep.subr.bf16.mxu0 0
        %1208 = vmatpush1.bf16.msra.mxu0 0
        %1209 = vmatprep.subr.bf16.mxu0 0
        %1210 = vmatpush1.bf16.msra.mxu0 0
        %1211 = vmatprep.subr.bf16.mxu0 0
        %1212 = vmatpush1.bf16.msra.mxu0 0
        %1213 = vmatprep.subr.bf16.mxu0 0
        %1214 = vmatpush1.bf16.msra.mxu0 0
        %1215 = vmatprep.mubr.bf16.mxu0 0
        %1216 = vmatmul.mubr.bf16.gmra.mrb[0].mxu0 %v856
        %v1217 = vpop.f32.mrb[0].mxu0
        %v1218 = vadd.f32 %v1169, %v1217
        %v1219 = vpop.f32.mrb[0].mxu0
        %v1220 = vpop.f32.mrb[0].mxu0
        %v1221 = vadd.f32 %v1169, %v1220
        %v1222 = vpop.f32.mrb[0].mxu0
        %1223 = vdwg.mxu0
        %s1224 = scalar_lea.vmem %s6, 16
        %v1225 = vld [vmem:[%s1224] sm:$0xf]
        %v1226 = vld [vmem:[%s1224 + $0x4] sm:$0xf]
        %v1227 = vld [vmem:[%s1224 + $0x8] sm:$0xf]
        %v1228 = vld [vmem:[%s1224 + $0xc] sm:$0xf]
        %s1229 = scalar_lea.vmem %s7, 1
        %v1230 = vld [vmem:[%s1229] sm:$0x1]
        %v1232 = vlaneseq
        %v1233 = vshrl.u32 %v1232, 7
        %v1234 = vsub.s32 0, %v1233
        %v1235 = vrot.slane %v1230, %v1234
        %v1241 = vunpack.c.l.b16 %v1225
        %v1242 = vunpack.c.l.b16 %v1226
        %v1243 = vunpack.c.l.b16 %v1227
        %v1244 = vunpack.c.l.b16 %v1228
        %v1245 = vpack.c.b16 %v1242, %v1241
        %v1246 = vpack.c.b16 %v1244, %v1243
        %1249 = vmatprep.subr.bf16.mxu0 0
        %1250 = vmatpush1.bf16.msra.mxu0 %v1245
        %1251 = vmatprep.subr.bf16.mxu0 0
        %1252 = vmatpush1.bf16.msra.mxu0 %v1246
        %1253 = vmatprep.subr.bf16.mxu0 0
        %1254 = vmatpush1.bf16.msra.mxu0 0
        %1255 = vmatprep.subr.bf16.mxu0 0
        %1256 = vmatpush1.bf16.msra.mxu0 0
        %1257 = vmatprep.subr.bf16.mxu0 0
        %1258 = vmatpush1.bf16.msra.mxu0 0
        %1259 = vmatprep.subr.bf16.mxu0 0
        %1260 = vmatpush1.bf16.msra.mxu0 0
        %1261 = vmatprep.subr.bf16.mxu0 0
        %1262 = vmatpush1.bf16.msra.mxu0 0
        %1263 = vmatprep.subr.bf16.mxu0 0
        %1264 = vmatpush1.bf16.msra.mxu0 0
        %1265 = vmatprep.subr.bf16.mxu0 0
        %1266 = vmatpush1.bf16.msra.mxu0 0
        %1267 = vmatprep.subr.bf16.mxu0 0
        %1268 = vmatpush1.bf16.msra.mxu0 0
        %1269 = vmatprep.subr.bf16.mxu0 0
        %1270 = vmatpush1.bf16.msra.mxu0 0
        %1271 = vmatprep.subr.bf16.mxu0 0
        %1272 = vmatpush1.bf16.msra.mxu0 0
        %1273 = vmatprep.subr.bf16.mxu0 0
        %1274 = vmatpush1.bf16.msra.mxu0 0
        %1275 = vmatprep.subr.bf16.mxu0 0
        %1276 = vmatpush1.bf16.msra.mxu0 0
        %1277 = vmatprep.subr.bf16.mxu0 0
        %1278 = vmatpush1.bf16.msra.mxu0 0
        %1279 = vmatprep.subr.bf16.mxu0 0
        %1280 = vmatpush1.bf16.msra.mxu0 0
        %1281 = vmatprep.mubr.bf16.mxu0 0
        %1282 = vmatmul.mubr.bf16.gmra.mrb[0].mxu0 %v856
        %v1283 = vpop.f32.mrb[0].mxu0
        %v1284 = vadd.f32 %v1235, %v1283
        %v1285 = vpop.f32.mrb[0].mxu0
        %v1286 = vpop.f32.mrb[0].mxu0
        %v1287 = vadd.f32 %v1235, %v1286
        %v1288 = vpop.f32.mrb[0].mxu0
        %1289 = vdwg.mxu0
        %s1290 = scalar_lea.vmem %s8, 16
        %v1291 = vld [vmem:[%s1290] sm:$0xf]
        %v1292 = vld [vmem:[%s1290 + $0x4] sm:$0xf]
        %v1293 = vld [vmem:[%s1290 + $0x8] sm:$0xf]
        %v1294 = vld [vmem:[%s1290 + $0xc] sm:$0xf]
        %s1295 = scalar_lea.vmem %s9, 1
        %v1296 = vld [vmem:[%s1295] sm:$0x1]
        %v1298 = vlaneseq
        %v1299 = vshrl.u32 %v1298, 7
        %v1300 = vsub.s32 0, %v1299
        %v1301 = vrot.slane %v1296, %v1300
        %v1307 = vunpack.c.l.b16 %v1291
        %v1308 = vunpack.c.l.b16 %v1292
        %v1309 = vunpack.c.l.b16 %v1293
        %v1310 = vunpack.c.l.b16 %v1294
        %v1311 = vpack.c.b16 %v1308, %v1307
        %v1312 = vpack.c.b16 %v1310, %v1309
        %1315 = vmatprep.subr.bf16.mxu0 0
        %1316 = vmatpush1.bf16.msra.mxu0 %v1311
        %1317 = vmatprep.subr.bf16.mxu0 0
        %1318 = vmatpush1.bf16.msra.mxu0 %v1312
        %1319 = vmatprep.subr.bf16.mxu0 0
        %1320 = vmatpush1.bf16.msra.mxu0 0
        %1321 = vmatprep.subr.bf16.mxu0 0
        %1322 = vmatpush1.bf16.msra.mxu0 0
        %1323 = vmatprep.subr.bf16.mxu0 0
        %1324 = vmatpush1.bf16.msra.mxu0 0
        %1325 = vmatprep.subr.bf16.mxu0 0
        %1326 = vmatpush1.bf16.msra.mxu0 0
        %1327 = vmatprep.subr.bf16.mxu0 0
        %1328 = vmatpush1.bf16.msra.mxu0 0
        %1329 = vmatprep.subr.bf16.mxu0 0
        %1330 = vmatpush1.bf16.msra.mxu0 0
        %1331 = vmatprep.subr.bf16.mxu0 0
        %1332 = vmatpush1.bf16.msra.mxu0 0
        %1333 = vmatprep.subr.bf16.mxu0 0
        %1334 = vmatpush1.bf16.msra.mxu0 0
        %1335 = vmatprep.subr.bf16.mxu0 0
        %1336 = vmatpush1.bf16.msra.mxu0 0
        %1337 = vmatprep.subr.bf16.mxu0 0
        %1338 = vmatpush1.bf16.msra.mxu0 0
        %1339 = vmatprep.subr.bf16.mxu0 0
        %1340 = vmatpush1.bf16.msra.mxu0 0
        %1341 = vmatprep.subr.bf16.mxu0 0
        %1342 = vmatpush1.bf16.msra.mxu0 0
        %1343 = vmatprep.subr.bf16.mxu0 0
        %1344 = vmatpush1.bf16.msra.mxu0 0
        %1345 = vmatprep.subr.bf16.mxu0 0
        %1346 = vmatpush1.bf16.msra.mxu0 0
        %1347 = vmatprep.mubr.bf16.mxu0 0
        %1348 = vmatmul.mubr.bf16.gmra.mrb[0].mxu0 %v856
        %v1349 = vpop.f32.mrb[0].mxu0
        %v1350 = vadd.f32 %v1301, %v1349
        %v1351 = vpop.f32.mrb[0].mxu0
        %v1352 = vpop.f32.mrb[0].mxu0
        %v1353 = vadd.f32 %v1301, %v1352
        %v1354 = vpop.f32.mrb[0].mxu0
        %1355 = vdwg.mxu0
        %v1356 = vpack.c.bf16 %v1221, %v1218
        %v1357 = vpack.c.bf16 %v1287, %v1284
        %v1359 = vsel %vm1029, %v1356, 0
        %v1362 = vsel %vm1029, %v1357, 0
        %1364 = vmatprep.subr.bf16.mxu0 0
        %1365 = vmatpush1.bf16.xpose.msra.mxu0 %v1362
        %1366 = vmatprep.subr.bf16.mxu0 0
        %1367 = vmatpush1.bf16.xpose.msra.mxu0 0
        %1368 = vmatprep.subr.bf16.mxu0 0
        %1369 = vmatpush1.bf16.xpose.msra.mxu0 0
        %1370 = vmatprep.subr.bf16.mxu0 0
        %1371 = vmatpush1.bf16.xpose.msra.mxu0 0
        %1372 = vmatprep.subr.bf16.mxu0 0
        %1373 = vmatpush1.bf16.xpose.msra.mxu0 0
        %1374 = vmatprep.subr.bf16.mxu0 0
        %1375 = vmatpush1.bf16.xpose.msra.mxu0 0
        %1376 = vmatprep.subr.bf16.mxu0 0
        %1377 = vmatpush1.bf16.xpose.msra.mxu0 0
        %1378 = vmatprep.subr.bf16.mxu0 0
        %1379 = vmatpush1.bf16.xpose.msra.mxu0 0
        %1380 = vmatprep.subr.bf16.mxu0 0
        %1381 = vmatpush1.bf16.xpose.msra.mxu0 0
        %1382 = vmatprep.subr.bf16.mxu0 0
        %1383 = vmatpush1.bf16.xpose.msra.mxu0 0
        %1384 = vmatprep.subr.bf16.mxu0 0
        %1385 = vmatpush1.bf16.xpose.msra.mxu0 0
        %1386 = vmatprep.subr.bf16.mxu0 0
        %1387 = vmatpush1.bf16.xpose.msra.mxu0 0
        %1388 = vmatprep.subr.bf16.mxu0 0
        %1389 = vmatpush1.bf16.xpose.msra.mxu0 0
        %1390 = vmatprep.subr.bf16.mxu0 0
        %1391 = vmatpush1.bf16.xpose.msra.mxu0 0
        %1392 = vmatprep.subr.bf16.mxu0 0
        %1393 = vmatpush1.bf16.xpose.msra.mxu0 0
        %1394 = vmatprep.subr.bf16.mxu0 0
        %1395 = vmatpush1.bf16.xpose.msra.mxu0 0
        %1396 = vmatprep.mubr.bf16.mxu0 0
        %1397 = vmatmul.mubr.bf16.gmra.mrb[0].mxu0 %v1359
        %v1398 = vpop.f32.mrb[0].mxu0
        %v1399 = vadd.f32 0.0, %v1398
        %v1400 = vpop.f32.mrb[0].mxu0
        %v1401 = vpop.f32.mrb[0].mxu0
        %v1402 = vadd.f32 0.0, %v1401
        %v1403 = vpop.f32.mrb[0].mxu0
        %1404 = vdwg.mxu0
        %v1405 = vmul.f32 %v1399, 0.25
        %v1406 = vmul.f32 %v1402, 0.25
        %v1407 = vadd.f32 %v1405, %v1083
        %v1408 = vadd.f32 %v1406, %v1083
        %v1409 = vsel %vm1029, %v1407, -inf
        %1410 = vmax.xlane.f32.xlu0 %v1409
        %v1411 = vpop.xlane.xlu0 %1410
        %v1412 = vsel %vm1029, %v1408, -inf
        %1413 = vmax.xlane.f32.xlu0 %v1412
        %v1414 = vpop.xlane.xlu0 %1413
        %v1415 = vsub.f32 %v1407, %v1411
        %v1416 = vsub.f32 %v1408, %v1414
        %v1417 = vmul.f32 %v1415, 1.442695
        %v1418 = vpow.pop %v1417
        %v1419 = vmul.f32 %v1416, 1.442695
        %v1420 = vpow.pop %v1419
        %v1421 = vsel %vm1029, %v1418, 0.0
        %1422 = vadd.xlane.f32.xlu0 %v1421
        %v1423 = vpop.xlane.xlu0 %1422
        %v1424 = vsel %vm1029, %v1420, 0.0
        %1425 = vadd.xlane.f32.xlu0 %v1424
        %v1426 = vpop.xlane.xlu0 %1425
        %v1427 = vrcp.pop %v1423
        %v1428 = vrcp.pop %v1426
        %v1429 = vmul.f32 %v1418, %v1427
        %v1430 = vmul.f32 %v1420, %v1428
        %v1431 = vpack.c.bf16 %v1430, %v1429
        %v1432 = vpack.c.bf16 %v1353, %v1350
        %v1434 = vsel %vm1029, %v1431, 0
        %1436 = vmatprep.subr.bf16.mxu0 0
        %1437 = vmatpush1.bf16.msra.mxu0 %v1432
        %1438 = vmatprep.subr.bf16.mxu0 0
        %1439 = vmatpush1.bf16.msra.mxu0 0
        %1440 = vmatprep.subr.bf16.mxu0 0
        %1441 = vmatpush1.bf16.msra.mxu0 0
        %1442 = vmatprep.subr.bf16.mxu0 0
        %1443 = vmatpush1.bf16.msra.mxu0 0
        %1444 = vmatprep.subr.bf16.mxu0 0
        %1445 = vmatpush1.bf16.msra.mxu0 0
        %1446 = vmatprep.subr.bf16.mxu0 0
        %1447 = vmatpush1.bf16.msra.mxu0 0
        %1448 = vmatprep.subr.bf16.mxu0 0
        %1449 = vmatpush1.bf16.msra.mxu0 0
        %1450 = vmatprep.subr.bf16.mxu0 0
        %1451 = vmatpush1.bf16.msra.mxu0 0
        %1452 = vmatprep.subr.bf16.mxu0 0
        %1453 = vmatpush1.bf16.msra.mxu0 0
        %1454 = vmatprep.subr.bf16.mxu0 0
        %1455 = vmatpush1.bf16.msra.mxu0 0
        %1456 = vmatprep.subr.bf16.mxu0 0
        %1457 = vmatpush1.bf16.msra.mxu0 0
        %1458 = vmatprep.subr.bf16.mxu0 0
        %1459 = vmatpush1.bf16.msra.mxu0 0
        %1460 = vmatprep.subr.bf16.mxu0 0
        %1461 = vmatpush1.bf16.msra.mxu0 0
        %1462 = vmatprep.subr.bf16.mxu0 0
        %1463 = vmatpush1.bf16.msra.mxu0 0
        %1464 = vmatprep.subr.bf16.mxu0 0
        %1465 = vmatpush1.bf16.msra.mxu0 0
        %1466 = vmatprep.subr.bf16.mxu0 0
        %1467 = vmatpush1.bf16.msra.mxu0 0
        %1468 = vmatprep.mubr.bf16.mxu0 0
        %1469 = vmatmul.mubr.bf16.gmra.mrb[0].mxu0 %v1434
        %v1470 = vpop.f32.mrb[0].mxu0
        %v1471 = vadd.f32 0.0, %v1470
        %v1472 = vpop.f32.mrb[0].mxu0
        %v1473 = vpop.f32.mrb[0].mxu0
        %v1474 = vadd.f32 0.0, %v1473
        %v1475 = vpop.f32.mrb[0].mxu0
        %1476 = vdwg.mxu0
        %v1477 = vpack.c.bf16 %v1474, %v1471
        %s1478 = scalar_lea.vmem %s10, 8
        %v1479 = vld [vmem:[%s1478] sm:$0xf]
        %v1480 = vld [vmem:[%s1478 + $0x4] sm:$0xf]
        %v1483 = vunpack.c.l.b16 %v1479
        %v1484 = vunpack.c.l.b16 %v1480
        %v1485 = vpack.c.b16 %v1484, %v1483
        %v1488 = vsel %vm1029, %v1477, 0
        %1490 = vmatprep.subr.bf16.mxu0 0
        %1491 = vmatpush1.bf16.msra.mxu0 %v1485
        %1492 = vmatprep.subr.bf16.mxu0 0
        %1493 = vmatpush1.bf16.msra.mxu0 0
        %1494 = vmatprep.subr.bf16.mxu0 0
        %1495 = vmatpush1.bf16.msra.mxu0 0
        %1496 = vmatprep.subr.bf16.mxu0 0
        %1497 = vmatpush1.bf16.msra.mxu0 0
        %1498 = vmatprep.subr.bf16.mxu0 0
        %1499 = vmatpush1.bf16.msra.mxu0 0
        %1500 = vmatprep.subr.bf16.mxu0 0
        %1501 = vmatpush1.bf16.msra.mxu0 0
        %1502 = vmatprep.subr.bf16.mxu0 0
        %1503 = vmatpush1.bf16.msra.mxu0 0
        %1504 = vmatprep.subr.bf16.mxu0 0
        %1505 = vmatpush1.bf16.msra.mxu0 0
        %1506 = vmatprep.subr.bf16.mxu0 0
        %1507 = vmatpush1.bf16.msra.mxu0 0
        %1508 = vmatprep.subr.bf16.mxu0 0
        %1509 = vmatpush1.bf16.msra.mxu0 0
        %1510 = vmatprep.subr.bf16.mxu0 0
        %1511 = vmatpush1.bf16.msra.mxu0 0
        %1512 = vmatprep.subr.bf16.mxu0 0
        %1513 = vmatpush1.bf16.msra.mxu0 0
        %1514 = vmatprep.subr.bf16.mxu0 0
        %1515 = vmatpush1.bf16.msra.mxu0 0
        %1516 = vmatprep.subr.bf16.mxu0 0
        %1517 = vmatpush1.bf16.msra.mxu0 0
        %1518 = vmatprep.subr.bf16.mxu0 0
        %1519 = vmatpush1.bf16.msra.mxu0 0
        %1520 = vmatprep.subr.bf16.mxu0 0
        %1521 = vmatpush1.bf16.msra.mxu0 0
        %1522 = vmatprep.mubr.bf16.mxu0 0
        %1523 = vmatmul.mubr.bf16.gmra.mrb[0].mxu0 %v1488
        %v1524 = vpop.f32.mrb[0].mxu0
        %v1525 = vadd.f32 0.0, %v1524
        %v1526 = vpop.f32.mrb[0].mxu0
        %v1527 = vpop.f32.mrb[0].mxu0
        %v1528 = vadd.f32 0.0, %v1527
        %v1529 = vpop.f32.mrb[0].mxu0
        %1530 = vdwg.mxu0
        %v1533 = vunpack.c.l.b16 %v1156
        %v1534 = vunpack.c.l.b16 %v1157
        %v1535 = vpack.c.b16 %v1534, %v1533
        %v1538 = vsel %vm1029, %v1155, 0
        %1540 = vmatprep.subr.bf16.mxu0 0
        %1541 = vmatpush1.bf16.msra.mxu0 %v1535
        %1542 = vmatprep.subr.bf16.mxu0 0
        %1543 = vmatpush1.bf16.msra.mxu0 0
        %1544 = vmatprep.subr.bf16.mxu0 0
        %1545 = vmatpush1.bf16.msra.mxu0 0
        %1546 = vmatprep.subr.bf16.mxu0 0
        %1547 = vmatpush1.bf16.msra.mxu0 0
        %1548 = vmatprep.subr.bf16.mxu0 0
        %1549 = vmatpush1.bf16.msra.mxu0 0
        %1550 = vmatprep.subr.bf16.mxu0 0
        %1551 = vmatpush1.bf16.msra.mxu0 0
        %1552 = vmatprep.subr.bf16.mxu0 0
        %1553 = vmatpush1.bf16.msra.mxu0 0
        %1554 = vmatprep.subr.bf16.mxu0 0
        %1555 = vmatpush1.bf16.msra.mxu0 0
        %1556 = vmatprep.subr.bf16.mxu0 0
        %1557 = vmatpush1.bf16.msra.mxu0 0
        %1558 = vmatprep.subr.bf16.mxu0 0
        %1559 = vmatpush1.bf16.msra.mxu0 0
        %1560 = vmatprep.subr.bf16.mxu0 0
        %1561 = vmatpush1.bf16.msra.mxu0 0
        %1562 = vmatprep.subr.bf16.mxu0 0
        %1563 = vmatpush1.bf16.msra.mxu0 0
        %1564 = vmatprep.subr.bf16.mxu0 0
        %1565 = vmatpush1.bf16.msra.mxu0 0
        %1566 = vmatprep.subr.bf16.mxu0 0
        %1567 = vmatpush1.bf16.msra.mxu0 0
        %1568 = vmatprep.subr.bf16.mxu0 0
        %1569 = vmatpush1.bf16.msra.mxu0 0
        %1570 = vmatprep.subr.bf16.mxu0 0
        %1571 = vmatpush1.bf16.msra.mxu0 0
        %1572 = vmatprep.mubr.bf16.mxu0 0
        %1573 = vmatmul.mubr.bf16.gmra.mrb[0].mxu0 %v1538
        %v1574 = vpop.f32.mrb[0].mxu0
        %v1575 = vadd.f32 %v1525, %v1574
        %v1576 = vpop.f32.mrb[0].mxu0
        %v1577 = vpop.f32.mrb[0].mxu0
        %v1578 = vadd.f32 %v1528, %v1577
        %v1579 = vpop.f32.mrb[0].mxu0
        %1580 = vdwg.mxu0
        %v1581 = vld [vmem:[%s11] sm:$0x1]
        %v1583 = vlaneseq
        %v1584 = vshrl.u32 %v1583, 7
        %v1585 = vsub.s32 0, %v1584
        %v1586 = vrot.slane %v1581, %v1585
        %v1588 = vadd.f32 %v1575, %v1586
        %v1589 = vadd.f32 %v1578, %v1586
        %v1590 = vadd.f32 %v825, %v1588
        %v1591 = vadd.f32 %v826, %v1589
        %v1592 = vld [vmem:[%s12] sm:$0x1]
        %v1593 = vld [vmem:[%s13] sm:$0x1]
        %v1594 = vsel %vm854, %v1590, 0.0
        %1595 = vadd.xlane.f32.xlu0 %v1594
        %v1596 = vpop.xlane.xlu0 %1595
        %v1597 = vsel %vm854, %v1591, 0.0
        %1598 = vadd.xlane.f32.xlu0 %v1597
        %v1599 = vpop.xlane.xlu0 %1598
        %v1600 = vrcp.pop 32.0
        %v1601 = vmul.f32 %v1596, %v1600
        %v1602 = vmul.f32 %v1599, %v1600
        %v1603 = vsub.f32 %v1590, %v1601
        %v1604 = vsub.f32 %v1591, %v1602
        %v1605 = vmul.f32 %v1603, %v1603
        %v1606 = vmul.f32 %v1604, %v1604
        %v1607 = vsel %vm854, %v1605, 0.0
        %1608 = vadd.xlane.f32.xlu0 %v1607
        %v1609 = vpop.xlane.xlu0 %1608
        %v1610 = vsel %vm854, %v1606, 0.0
        %1611 = vadd.xlane.f32.xlu0 %v1610
        %v1612 = vpop.xlane.xlu0 %1611
        %v1613 = vmul.f32 %v1609, %v1600
        %v1614 = vmul.f32 %v1612, %v1600
        %v1615 = vadd.f32 %v1613, 1e-05
        %v1616 = vadd.f32 %v1614, 1e-05
        %v1617 = vrsqrt.pop %v1615
        %v1618 = vrsqrt.pop %v1616
        %v1619 = vmul.f32 %v1603, %v1617
        %v1620 = vmul.f32 %v1604, %v1618
        %v1622 = vlaneseq
        %v1623 = vshrl.u32 %v1622, 7
        %v1624 = vsub.s32 0, %v1623
        %v1625 = vrot.slane %v1592, %v1624
        %v1627 = vmul.f32 %v1619, %v1625
        %v1628 = vmul.f32 %v1620, %v1625
        %v1630 = vlaneseq
        %v1631 = vshrl.u32 %v1630, 7
        %v1632 = vsub.s32 0, %v1631
        %v1633 = vrot.slane %v1593, %v1632
        %v1635 = vadd.f32 %v1627, %v1633
        %v1636 = vadd.f32 %v1628, %v1633
        %v1637 = vpack.c.bf16 %v1636, %v1635
        %v1638 = vld [vmem:[%s14] sm:$0xf]
        %v1639 = vld [vmem:[%s14 + $0x4] sm:$0xf]
        %v1640 = vld [vmem:[%s14 + $0x8] sm:$0xf]
        %v1641 = vld [vmem:[%s14 + $0xc] sm:$0xf]
        %v1642 = vld [vmem:[%s15] sm:$0x1]
        %v1644 = vlaneseq
        %v1645 = vshrl.u32 %v1644, 7
        %v1646 = vsub.s32 0, %v1645
        %v1647 = vrot.slane %v1642, %v1646
        %v1653 = vunpack.c.l.b16 %v1638
        %v1654 = vunpack.c.l.b16 %v1639
        %v1655 = vunpack.c.l.b16 %v1640
        %v1656 = vunpack.c.l.b16 %v1641
        %v1657 = vpack.c.b16 %v1654, %v1653
        %v1658 = vpack.c.b16 %v1656, %v1655
        %v1662 = vsel %vm854, %v1637, 0
        %1664 = vmatprep.subr.bf16.mxu0 0
        %1665 = vmatpush1.bf16.msra.mxu0 %v1657
        %1666 = vmatprep.subr.bf16.mxu0 0
        %1667 = vmatpush1.bf16.msra.mxu0 %v1658
        %1668 = vmatprep.subr.bf16.mxu0 0
        %1669 = vmatpush1.bf16.msra.mxu0 0
        %1670 = vmatprep.subr.bf16.mxu0 0
        %1671 = vmatpush1.bf16.msra.mxu0 0
        %1672 = vmatprep.subr.bf16.mxu0 0
        %1673 = vmatpush1.bf16.msra.mxu0 0
        %1674 = vmatprep.subr.bf16.mxu0 0
        %1675 = vmatpush1.bf16.msra.mxu0 0
        %1676 = vmatprep.subr.bf16.mxu0 0
        %1677 = vmatpush1.bf16.msra.mxu0 0
        %1678 = vmatprep.subr.bf16.mxu0 0
        %1679 = vmatpush1.bf16.msra.mxu0 0
        %1680 = vmatprep.subr.bf16.mxu0 0
        %1681 = vmatpush1.bf16.msra.mxu0 0
        %1682 = vmatprep.subr.bf16.mxu0 0
        %1683 = vmatpush1.bf16.msra.mxu0 0
        %1684 = vmatprep.subr.bf16.mxu0 0
        %1685 = vmatpush1.bf16.msra.mxu0 0
        %1686 = vmatprep.subr.bf16.mxu0 0
        %1687 = vmatpush1.bf16.msra.mxu0 0
        %1688 = vmatprep.subr.bf16.mxu0 0
        %1689 = vmatpush1.bf16.msra.mxu0 0
        %1690 = vmatprep.subr.bf16.mxu0 0
        %1691 = vmatpush1.bf16.msra.mxu0 0
        %1692 = vmatprep.subr.bf16.mxu0 0
        %1693 = vmatpush1.bf16.msra.mxu0 0
        %1694 = vmatprep.subr.bf16.mxu0 0
        %1695 = vmatpush1.bf16.msra.mxu0 0
        %1696 = vmatprep.mubr.bf16.mxu0 0
        %1697 = vmatmul.mubr.bf16.gmra.mrb[0].mxu0 %v1662
        %v1698 = vpop.f32.mrb[0].mxu0
        %v1699 = vadd.f32 %v1647, %v1698
        %v1700 = vpop.f32.mrb[0].mxu0
        %v1701 = vpop.f32.mrb[0].mxu0
        %v1702 = vadd.f32 %v1647, %v1701
        %v1703 = vpop.f32.mrb[0].mxu0
        %1704 = vdwg.mxu0
        %v1705 = vmax.f32 %v1699, 0.0
        %v1706 = vmax.f32 %v1702, 0.0
        %v1707 = vpack.c.bf16 %v1706, %v1705
        %v1708 = vld [vmem:[%s16] sm:$0xf]
        %v1709 = vld [vmem:[%s16 + $0x4] sm:$0xf]
        %v1710 = vld [vmem:[%s16 + $0x8] sm:$0xf]
        %v1711 = vld [vmem:[%s16 + $0xc] sm:$0xf]
        %v1712 = vld [vmem:[%s16 + $0x10] sm:$0xf]
        %v1713 = vld [vmem:[%s16 + $0x14] sm:$0xf]
        %v1714 = vld [vmem:[%s16 + $0x18] sm:$0xf]
        %v1715 = vld [vmem:[%s16 + $0x1c] sm:$0xf]
        %v1716 = vld [vmem:[%s17] sm:$0x1]
        %v1718 = vlaneseq
        %v1719 = vshrl.u32 %v1718, 7
        %v1720 = vsub.s32 0, %v1719
        %v1721 = vrot.slane %v1716, %v1720
        %v1731 = vunpack.c.l.b16 %v1708
        %v1732 = vunpack.c.l.b16 %v1709
        %v1733 = vunpack.c.l.b16 %v1710
        %v1734 = vunpack.c.l.b16 %v1711
        %v1735 = vunpack.c.l.b16 %v1712
        %v1736 = vunpack.c.l.b16 %v1713
        %v1737 = vunpack.c.l.b16 %v1714
        %v1738 = vunpack.c.l.b16 %v1715
        %v1739 = vpack.c.b16 %v1732, %v1731
        %v1740 = vpack.c.b16 %v1734, %v1733
        %v1741 = vpack.c.b16 %v1736, %v1735
        %v1742 = vpack.c.b16 %v1738, %v1737
        %vm1747 = vcmask 523264
        %v1749 = vsel %vm1747, %v1707, 0
        %1751 = vmatprep.subr.bf16.mxu0 0
        %1752 = vmatpush1.bf16.msra.mxu0 %v1739
        %1753 = vmatprep.subr.bf16.mxu0 0
        %1754 = vmatpush1.bf16.msra.mxu0 %v1740
        %1755 = vmatprep.subr.bf16.mxu0 0
        %1756 = vmatpush1.bf16.msra.mxu0 %v1741
        %1757 = vmatprep.subr.bf16.mxu0 0
        %1758 = vmatpush1.bf16.msra.mxu0 %v1742
        %1759 = vmatprep.subr.bf16.mxu0 0
        %1760 = vmatpush1.bf16.msra.mxu0 0
        %1761 = vmatprep.subr.bf16.mxu0 0
        %1762 = vmatpush1.bf16.msra.mxu0 0
        %1763 = vmatprep.subr.bf16.mxu0 0
        %1764 = vmatpush1.bf16.msra.mxu0 0
        %1765 = vmatprep.subr.bf16.mxu0 0
        %1766 = vmatpush1.bf16.msra.mxu0 0
        %1767 = vmatprep.subr.bf16.mxu0 0
        %1768 = vmatpush1.bf16.msra.mxu0 0
        %1769 = vmatprep.subr.bf16.mxu0 0
        %1770 = vmatpush1.bf16.msra.mxu0 0
        %1771 = vmatprep.subr.bf16.mxu0 0
        %1772 = vmatpush1.bf16.msra.mxu0 0
        %1773 = vmatprep.subr.bf16.mxu0 0
        %1774 = vmatpush1.bf16.msra.mxu0 0
        %1775 = vmatprep.subr.bf16.mxu0 0
        %1776 = vmatpush1.bf16.msra.mxu0 0
        %1777 = vmatprep.subr.bf16.mxu0 0
        %1778 = vmatpush1.bf16.msra.mxu0 0
        %1779 = vmatprep.subr.bf16.mxu0 0
        %1780 = vmatpush1.bf16.msra.mxu0 0
        %1781 = vmatprep.subr.bf16.mxu0 0
        %1782 = vmatpush1.bf16.msra.mxu0 0
        %1783 = vmatprep.mubr.bf16.mxu0 0
        %1784 = vmatmul.mubr.bf16.gmra.mrb[0].mxu0 %v1749
        %v1785 = vpop.f32.mrb[0].mxu0
        %v1786 = vadd.f32 %v1721, %v1785
        %v1787 = vpop.f32.mrb[0].mxu0
        %v1788 = vpop.f32.mrb[0].mxu0
        %v1789 = vadd.f32 %v1721, %v1788
        %v1790 = vpop.f32.mrb[0].mxu0
        %1791 = vdwg.mxu0
        %v1792 = vadd.f32 %v1635, %v1786
        %v1793 = vadd.f32 %v1636, %v1789
        %v1794 = vld [vmem:[%s18] sm:$0x1]
        %v1795 = vld [vmem:[%s19] sm:$0x1]
        %v1796 = vsel %vm854, %v1792, 0.0
        %1797 = vadd.xlane.f32.xlu0 %v1796
        %v1798 = vpop.xlane.xlu0 %1797
        %v1799 = vsel %vm854, %v1793, 0.0
        %1800 = vadd.xlane.f32.xlu0 %v1799
        %v1801 = vpop.xlane.xlu0 %1800
        %v1802 = vmul.f32 %v1798, %v1600
        %v1803 = vmul.f32 %v1801, %v1600
        %v1804 = vsub.f32 %v1792, %v1802
        %v1805 = vsub.f32 %v1793, %v1803
        %v1806 = vmul.f32 %v1804, %v1804
        %v1807 = vmul.f32 %v1805, %v1805
        %v1808 = vsel %vm854, %v1806, 0.0
        %1809 = vadd.xlane.f32.xlu0 %v1808
        %v1810 = vpop.xlane.xlu0 %1809
        %v1811 = vsel %vm854, %v1807, 0.0
        %1812 = vadd.xlane.f32.xlu0 %v1811
        %v1813 = vpop.xlane.xlu0 %1812
        %v1814 = vmul.f32 %v1810, %v1600
        %v1815 = vmul.f32 %v1813, %v1600
        %v1816 = vadd.f32 %v1814, 1e-05
        %v1817 = vadd.f32 %v1815, 1e-05
        %v1818 = vrsqrt.pop %v1816
        %v1819 = vrsqrt.pop %v1817
        %v1820 = vmul.f32 %v1804, %v1818
        %v1821 = vmul.f32 %v1805, %v1819
        %v1823 = vlaneseq
        %v1824 = vshrl.u32 %v1823, 7
        %v1825 = vsub.s32 0, %v1824
        %v1826 = vrot.slane %v1794, %v1825
        %v1828 = vmul.f32 %v1820, %v1826
        %v1829 = vmul.f32 %v1821, %v1826
        %v1831 = vlaneseq
        %v1832 = vshrl.u32 %v1831, 7
        %v1833 = vsub.s32 0, %v1832
        %v1834 = vrot.slane %v1795, %v1833
        %v1836 = vadd.f32 %v1828, %v1834
        %v1837 = vadd.f32 %v1829, %v1834
        %v1838 = vadd.f32 %v1836, %v823
        %v1839 = vadd.f32 %v1837, %v824
        %v1840 = vpack.c.bf16 %v1839, %v1838
        %s1841 = scalar_lea.vmem %s4, 32
        %v1842 = vld [vmem:[%s1841] sm:$0xf]
        %v1843 = vld [vmem:[%s1841 + $0x4] sm:$0xf]
        %v1844 = vld [vmem:[%s1841 + $0x8] sm:$0xf]
        %v1845 = vld [vmem:[%s1841 + $0xc] sm:$0xf]
        %s1846 = scalar_lea.vmem %s5, 2
        %v1847 = vld [vmem:[%s1846] sm:$0x1]
        %v1849 = vlaneseq
        %v1850 = vshrl.u32 %v1849, 7
        %v1851 = vsub.s32 0, %v1850
        %v1852 = vrot.slane %v1847, %v1851
        %v1858 = vunpack.c.l.b16 %v1842
        %v1859 = vunpack.c.l.b16 %v1843
        %v1860 = vunpack.c.l.b16 %v1844
        %v1861 = vunpack.c.l.b16 %v1845
        %v1862 = vpack.c.b16 %v1859, %v1858
        %v1863 = vpack.c.b16 %v1861, %v1860
        %v1867 = vsel %vm854, %v1840, 0
        %1869 = vmatprep.subr.bf16.mxu0 0
        %1870 = vmatpush1.bf16.msra.mxu0 %v1862
        %1871 = vmatprep.subr.bf16.mxu0 0
        %1872 = vmatpush1.bf16.msra.mxu0 %v1863
        %1873 = vmatprep.subr.bf16.mxu0 0
        %1874 = vmatpush1.bf16.msra.mxu0 0
        %1875 = vmatprep.subr.bf16.mxu0 0
        %1876 = vmatpush1.bf16.msra.mxu0 0
        %1877 = vmatprep.subr.bf16.mxu0 0
        %1878 = vmatpush1.bf16.msra.mxu0 0
        %1879 = vmatprep.subr.bf16.mxu0 0
        %1880 = vmatpush1.bf16.msra.mxu0 0
        %1881 = vmatprep.subr.bf16.mxu0 0
        %1882 = vmatpush1.bf16.msra.mxu0 0
        %1883 = vmatprep.subr.bf16.mxu0 0
        %1884 = vmatpush1.bf16.msra.mxu0 0
        %1885 = vmatprep.subr.bf16.mxu0 0
        %1886 = vmatpush1.bf16.msra.mxu0 0
        %1887 = vmatprep.subr.bf16.mxu0 0
        %1888 = vmatpush1.bf16.msra.mxu0 0
        %1889 = vmatprep.subr.bf16.mxu0 0
        %1890 = vmatpush1.bf16.msra.mxu0 0
        %1891 = vmatprep.subr.bf16.mxu0 0
        %1892 = vmatpush1.bf16.msra.mxu0 0
        %1893 = vmatprep.subr.bf16.mxu0 0
        %1894 = vmatpush1.bf16.msra.mxu0 0
        %1895 = vmatprep.subr.bf16.mxu0 0
        %1896 = vmatpush1.bf16.msra.mxu0 0
        %1897 = vmatprep.subr.bf16.mxu0 0
        %1898 = vmatpush1.bf16.msra.mxu0 0
        %1899 = vmatprep.subr.bf16.mxu0 0
        %1900 = vmatpush1.bf16.msra.mxu0 0
        %1901 = vmatprep.mubr.bf16.mxu0 0
        %1902 = vmatmul.mubr.bf16.gmra.mrb[0].mxu0 %v1867
        %v1903 = vpop.f32.mrb[0].mxu0
        %v1904 = vadd.f32 %v1852, %v1903
        %v1905 = vpop.f32.mrb[0].mxu0
        %v1906 = vpop.f32.mrb[0].mxu0
        %v1907 = vadd.f32 %v1852, %v1906
        %v1908 = vpop.f32.mrb[0].mxu0
        %1909 = vdwg.mxu0
        %s1910 = scalar_lea.vmem %s6, 32
        %v1911 = vld [vmem:[%s1910] sm:$0xf]
        %v1912 = vld [vmem:[%s1910 + $0x4] sm:$0xf]
        %v1913 = vld [vmem:[%s1910 + $0x8] sm:$0xf]
        %v1914 = vld [vmem:[%s1910 + $0xc] sm:$0xf]
        %s1915 = scalar_lea.vmem %s7, 2
        %v1916 = vld [vmem:[%s1915] sm:$0x1]
        %v1918 = vlaneseq
        %v1919 = vshrl.u32 %v1918, 7
        %v1920 = vsub.s32 0, %v1919
        %v1921 = vrot.slane %v1916, %v1920
        %v1927 = vunpack.c.l.b16 %v1911
        %v1928 = vunpack.c.l.b16 %v1912
        %v1929 = vunpack.c.l.b16 %v1913
        %v1930 = vunpack.c.l.b16 %v1914
        %v1931 = vpack.c.b16 %v1928, %v1927
        %v1932 = vpack.c.b16 %v1930, %v1929
        %1935 = vmatprep.subr.bf16.mxu0 0
        %1936 = vmatpush1.bf16.msra.mxu0 %v1931
        %1937 = vmatprep.subr.bf16.mxu0 0
        %1938 = vmatpush1.bf16.msra.mxu0 %v1932
        %1939 = vmatprep.subr.bf16.mxu0 0
        %1940 = vmatpush1.bf16.msra.mxu0 0
        %1941 = vmatprep.subr.bf16.mxu0 0
        %1942 = vmatpush1.bf16.msra.mxu0 0
        %1943 = vmatprep.subr.bf16.mxu0 0
        %1944 = vmatpush1.bf16.msra.mxu0 0
        %1945 = vmatprep.subr.bf16.mxu0 0
        %1946 = vmatpush1.bf16.msra.mxu0 0
        %1947 = vmatprep.subr.bf16.mxu0 0
        %1948 = vmatpush1.bf16.msra.mxu0 0
        %1949 = vmatprep.subr.bf16.mxu0 0
        %1950 = vmatpush1.bf16.msra.mxu0 0
        %1951 = vmatprep.subr.bf16.mxu0 0
        %1952 = vmatpush1.bf16.msra.mxu0 0
        %1953 = vmatprep.subr.bf16.mxu0 0
        %1954 = vmatpush1.bf16.msra.mxu0 0
        %1955 = vmatprep.subr.bf16.mxu0 0
        %1956 = vmatpush1.bf16.msra.mxu0 0
        %1957 = vmatprep.subr.bf16.mxu0 0
        %1958 = vmatpush1.bf16.msra.mxu0 0
        %1959 = vmatprep.subr.bf16.mxu0 0
        %1960 = vmatpush1.bf16.msra.mxu0 0
        %1961 = vmatprep.subr.bf16.mxu0 0
        %1962 = vmatpush1.bf16.msra.mxu0 0
        %1963 = vmatprep.subr.bf16.mxu0 0
        %1964 = vmatpush1.bf16.msra.mxu0 0
        %1965 = vmatprep.subr.bf16.mxu0 0
        %1966 = vmatpush1.bf16.msra.mxu0 0
        %1967 = vmatprep.mubr.bf16.mxu0 0
        %1968 = vmatmul.mubr.bf16.gmra.mrb[0].mxu0 %v1867
        %v1969 = vpop.f32.mrb[0].mxu0
        %v1970 = vadd.f32 %v1921, %v1969
        %v1971 = vpop.f32.mrb[0].mxu0
        %v1972 = vpop.f32.mrb[0].mxu0
        %v1973 = vadd.f32 %v1921, %v1972
        %v1974 = vpop.f32.mrb[0].mxu0
        %1975 = vdwg.mxu0
        %s1976 = scalar_lea.vmem %s8, 32
        %v1977 = vld [vmem:[%s1976] sm:$0xf]
        %v1978 = vld [vmem:[%s1976 + $0x4] sm:$0xf]
        %v1979 = vld [vmem:[%s1976 + $0x8] sm:$0xf]
        %v1980 = vld [vmem:[%s1976 + $0xc] sm:$0xf]
        %s1981 = scalar_lea.vmem %s9, 2
        %v1982 = vld [vmem:[%s1981] sm:$0x1]
        %v1984 = vlaneseq
        %v1985 = vshrl.u32 %v1984, 7
        %v1986 = vsub.s32 0, %v1985
        %v1987 = vrot.slane %v1982, %v1986
        %v1993 = vunpack.c.l.b16 %v1977
        %v1994 = vunpack.c.l.b16 %v1978
        %v1995 = vunpack.c.l.b16 %v1979
        %v1996 = vunpack.c.l.b16 %v1980
        %v1997 = vpack.c.b16 %v1994, %v1993
        %v1998 = vpack.c.b16 %v1996, %v1995
        %2001 = vmatprep.subr.bf16.mxu0 0
        %2002 = vmatpush1.bf16.msra.mxu0 %v1997
        %2003 = vmatprep.subr.bf16.mxu0 0
        %2004 = vmatpush1.bf16.msra.mxu0 %v1998
        %2005 = vmatprep.subr.bf16.mxu0 0
        %2006 = vmatpush1.bf16.msra.mxu0 0
        %2007 = vmatprep.subr.bf16.mxu0 0
        %2008 = vmatpush1.bf16.msra.mxu0 0
        %2009 = vmatprep.subr.bf16.mxu0 0
        %2010 = vmatpush1.bf16.msra.mxu0 0
        %2011 = vmatprep.subr.bf16.mxu0 0
        %2012 = vmatpush1.bf16.msra.mxu0 0
        %2013 = vmatprep.subr.bf16.mxu0 0
        %2014 = vmatpush1.bf16.msra.mxu0 0
        %2015 = vmatprep.subr.bf16.mxu0 0
        %2016 = vmatpush1.bf16.msra.mxu0 0
        %2017 = vmatprep.subr.bf16.mxu0 0
        %2018 = vmatpush1.bf16.msra.mxu0 0
        %2019 = vmatprep.subr.bf16.mxu0 0
        %2020 = vmatpush1.bf16.msra.mxu0 0
        %2021 = vmatprep.subr.bf16.mxu0 0
        %2022 = vmatpush1.bf16.msra.mxu0 0
        %2023 = vmatprep.subr.bf16.mxu0 0
        %2024 = vmatpush1.bf16.msra.mxu0 0
        %2025 = vmatprep.subr.bf16.mxu0 0
        %2026 = vmatpush1.bf16.msra.mxu0 0
        %2027 = vmatprep.subr.bf16.mxu0 0
        %2028 = vmatpush1.bf16.msra.mxu0 0
        %2029 = vmatprep.subr.bf16.mxu0 0
        %2030 = vmatpush1.bf16.msra.mxu0 0
        %2031 = vmatprep.subr.bf16.mxu0 0
        %2032 = vmatpush1.bf16.msra.mxu0 0
        %2033 = vmatprep.mubr.bf16.mxu0 0
        %2034 = vmatmul.mubr.bf16.gmra.mrb[0].mxu0 %v1867
        %v2035 = vpop.f32.mrb[0].mxu0
        %v2036 = vadd.f32 %v1987, %v2035
        %v2037 = vpop.f32.mrb[0].mxu0
        %v2038 = vpop.f32.mrb[0].mxu0
        %v2039 = vadd.f32 %v1987, %v2038
        %v2040 = vpop.f32.mrb[0].mxu0
        %2041 = vdwg.mxu0
        %v2042 = vpack.c.bf16 %v1907, %v1904
        %v2043 = vpack.c.bf16 %v1973, %v1970
        %v2045 = vsel %vm1029, %v2042, 0
        %v2048 = vsel %vm1029, %v2043, 0
        %2050 = vmatprep.subr.bf16.mxu0 0
        %2051 = vmatpush1.bf16.xpose.msra.mxu0 %v2048
        %2052 = vmatprep.subr.bf16.mxu0 0
        %2053 = vmatpush1.bf16.xpose.msra.mxu0 0
        %2054 = vmatprep.subr.bf16.mxu0 0
        %2055 = vmatpush1.bf16.xpose.msra.mxu0 0
        %2056 = vmatprep.subr.bf16.mxu0 0
        %2057 = vmatpush1.bf16.xpose.msra.mxu0 0
        %2058 = vmatprep.subr.bf16.mxu0 0
        %2059 = vmatpush1.bf16.xpose.msra.mxu0 0
        %2060 = vmatprep.subr.bf16.mxu0 0
        %2061 = vmatpush1.bf16.xpose.msra.mxu0 0
        %2062 = vmatprep.subr.bf16.mxu0 0
        %2063 = vmatpush1.bf16.xpose.msra.mxu0 0
        %2064 = vmatprep.subr.bf16.mxu0 0
        %2065 = vmatpush1.bf16.xpose.msra.mxu0 0
        %2066 = vmatprep.subr.bf16.mxu0 0
        %2067 = vmatpush1.bf16.xpose.msra.mxu0 0
        %2068 = vmatprep.subr.bf16.mxu0 0
        %2069 = vmatpush1.bf16.xpose.msra.mxu0 0
        %2070 = vmatprep.subr.bf16.mxu0 0
        %2071 = vmatpush1.bf16.xpose.msra.mxu0 0
        %2072 = vmatprep.subr.bf16.mxu0 0
        %2073 = vmatpush1.bf16.xpose.msra.mxu0 0
        %2074 = vmatprep.subr.bf16.mxu0 0
        %2075 = vmatpush1.bf16.xpose.msra.mxu0 0
        %2076 = vmatprep.subr.bf16.mxu0 0
        %2077 = vmatpush1.bf16.xpose.msra.mxu0 0
        %2078 = vmatprep.subr.bf16.mxu0 0
        %2079 = vmatpush1.bf16.xpose.msra.mxu0 0
        %2080 = vmatprep.subr.bf16.mxu0 0
        %2081 = vmatpush1.bf16.xpose.msra.mxu0 0
        %2082 = vmatprep.mubr.bf16.mxu0 0
        %2083 = vmatmul.mubr.bf16.gmra.mrb[0].mxu0 %v2045
        %v2084 = vpop.f32.mrb[0].mxu0
        %v2085 = vadd.f32 0.0, %v2084
        %v2086 = vpop.f32.mrb[0].mxu0
        %v2087 = vpop.f32.mrb[0].mxu0
        %v2088 = vadd.f32 0.0, %v2087
        %v2089 = vpop.f32.mrb[0].mxu0
        %2090 = vdwg.mxu0
        %v2091 = vmul.f32 %v2085, 0.25
        %v2092 = vmul.f32 %v2088, 0.25
        %v2093 = vadd.f32 %v2091, %v1083
        %v2094 = vadd.f32 %v2092, %v1083
        %v2095 = vsel %vm1029, %v2093, -inf
        %2096 = vmax.xlane.f32.xlu0 %v2095
        %v2097 = vpop.xlane.xlu0 %2096
        %v2098 = vsel %vm1029, %v2094, -inf
        %2099 = vmax.xlane.f32.xlu0 %v2098
        %v2100 = vpop.xlane.xlu0 %2099
        %v2101 = vsub.f32 %v2093, %v2097
        %v2102 = vsub.f32 %v2094, %v2100
        %v2103 = vmul.f32 %v2101, 1.442695
        %v2104 = vpow.pop %v2103
        %v2105 = vmul.f32 %v2102, 1.442695
        %v2106 = vpow.pop %v2105
        %v2107 = vsel %vm1029, %v2104, 0.0
        %2108 = vadd.xlane.f32.xlu0 %v2107
        %v2109 = vpop.xlane.xlu0 %2108
        %v2110 = vsel %vm1029, %v2106, 0.0
        %2111 = vadd.xlane.f32.xlu0 %v2110
        %v2112 = vpop.xlane.xlu0 %2111
        %v2113 = vrcp.pop %v2109
        %v2114 = vrcp.pop %v2112
        %v2115 = vmul.f32 %v2104, %v2113
        %v2116 = vmul.f32 %v2106, %v2114
        %v2117 = vpack.c.bf16 %v2116, %v2115
        %v2118 = vpack.c.bf16 %v2039, %v2036
        %v2120 = vsel %vm1029, %v2117, 0
        %2122 = vmatprep.subr.bf16.mxu0 0
        %2123 = vmatpush1.bf16.msra.mxu0 %v2118
        %2124 = vmatprep.subr.bf16.mxu0 0
        %2125 = vmatpush1.bf16.msra.mxu0 0
        %2126 = vmatprep.subr.bf16.mxu0 0
        %2127 = vmatpush1.bf16.msra.mxu0 0
        %2128 = vmatprep.subr.bf16.mxu0 0
        %2129 = vmatpush1.bf16.msra.mxu0 0
        %2130 = vmatprep.subr.bf16.mxu0 0
        %2131 = vmatpush1.bf16.msra.mxu0 0
        %2132 = vmatprep.subr.bf16.mxu0 0
        %2133 = vmatpush1.bf16.msra.mxu0 0
        %2134 = vmatprep.subr.bf16.mxu0 0
        %2135 = vmatpush1.bf16.msra.mxu0 0
        %2136 = vmatprep.subr.bf16.mxu0 0
        %2137 = vmatpush1.bf16.msra.mxu0 0
        %2138 = vmatprep.subr.bf16.mxu0 0
        %2139 = vmatpush1.bf16.msra.mxu0 0
        %2140 = vmatprep.subr.bf16.mxu0 0
        %2141 = vmatpush1.bf16.msra.mxu0 0
        %2142 = vmatprep.subr.bf16.mxu0 0
        %2143 = vmatpush1.bf16.msra.mxu0 0
        %2144 = vmatprep.subr.bf16.mxu0 0
        %2145 = vmatpush1.bf16.msra.mxu0 0
        %2146 = vmatprep.subr.bf16.mxu0 0
        %2147 = vmatpush1.bf16.msra.mxu0 0
        %2148 = vmatprep.subr.bf16.mxu0 0
        %2149 = vmatpush1.bf16.msra.mxu0 0
        %2150 = vmatprep.subr.bf16.mxu0 0
        %2151 = vmatpush1.bf16.msra.mxu0 0
        %2152 = vmatprep.subr.bf16.mxu0 0
        %2153 = vmatpush1.bf16.msra.mxu0 0
        %2154 = vmatprep.mubr.bf16.mxu0 0
        %2155 = vmatmul.mubr.bf16.gmra.mrb[0].mxu0 %v2120
        %v2156 = vpop.f32.mrb[0].mxu0
        %v2157 = vadd.f32 0.0, %v2156
        %v2158 = vpop.f32.mrb[0].mxu0
        %v2159 = vpop.f32.mrb[0].mxu0
        %v2160 = vadd.f32 0.0, %v2159
        %v2161 = vpop.f32.mrb[0].mxu0
        %2162 = vdwg.mxu0
        %v2163 = vpack.c.bf16 %v2160, %v2157
        %s2164 = scalar_lea.vmem %s10, 16
        %v2165 = vld [vmem:[%s2164] sm:$0xf]
        %v2166 = vld [vmem:[%s2164 + $0x4] sm:$0xf]
        %s2167 = scalar_lea.vmem %s4, 48
        %v2168 = vld [vmem:[%s2167] sm:$0xf]
        %v2169 = vld [vmem:[%s2167 + $0x4] sm:$0xf]
        %v2170 = vld [vmem:[%s2167 + $0x8] sm:$0xf]
        %v2171 = vld [vmem:[%s2167 + $0xc] sm:$0xf]
        %s2172 = scalar_lea.vmem %s5, 3
        %v2173 = vld [vmem:[%s2172] sm:$0x1]
        %v2175 = vlaneseq
        %v2176 = vshrl.u32 %v2175, 7
        %v2177 = vsub.s32 0, %v2176
        %v2178 = vrot.slane %v2173, %v2177
        %v2184 = vunpack.c.l.b16 %v2168
        %v2185 = vunpack.c.l.b16 %v2169
        %v2186 = vunpack.c.l.b16 %v2170
        %v2187 = vunpack.c.l.b16 %v2171
        %v2188 = vpack.c.b16 %v2185, %v2184
        %v2189 = vpack.c.b16 %v2187, %v2186
        %2192 = vmatprep.subr.bf16.mxu0 0
        %2193 = vmatpush1.bf16.msra.mxu0 %v2188
        %2194 = vmatprep.subr.bf16.mxu0 0
        %2195 = vmatpush1.bf16.msra.mxu0 %v2189
        %2196 = vmatprep.subr.bf16.mxu0 0
        %2197 = vmatpush1.bf16.msra.mxu0 0
        %2198 = vmatprep.subr.bf16.mxu0 0
        %2199 = vmatpush1.bf16.msra.mxu0 0
        %2200 = vmatprep.subr.bf16.mxu0 0
        %2201 = vmatpush1.bf16.msra.mxu0 0
        %2202 = vmatprep.subr.bf16.mxu0 0
        %2203 = vmatpush1.bf16.msra.mxu0 0
        %2204 = vmatprep.subr.bf16.mxu0 0
        %2205 = vmatpush1.bf16.msra.mxu0 0
        %2206 = vmatprep.subr.bf16.mxu0 0
        %2207 = vmatpush1.bf16.msra.mxu0 0
        %2208 = vmatprep.subr.bf16.mxu0 0
        %2209 = vmatpush1.bf16.msra.mxu0 0
        %2210 = vmatprep.subr.bf16.mxu0 0
        %2211 = vmatpush1.bf16.msra.mxu0 0
        %2212 = vmatprep.subr.bf16.mxu0 0
        %2213 = vmatpush1.bf16.msra.mxu0 0
        %2214 = vmatprep.subr.bf16.mxu0 0
        %2215 = vmatpush1.bf16.msra.mxu0 0
        %2216 = vmatprep.subr.bf16.mxu0 0
        %2217 = vmatpush1.bf16.msra.mxu0 0
        %2218 = vmatprep.subr.bf16.mxu0 0
        %2219 = vmatpush1.bf16.msra.mxu0 0
        %2220 = vmatprep.subr.bf16.mxu0 0
        %2221 = vmatpush1.bf16.msra.mxu0 0
        %2222 = vmatprep.subr.bf16.mxu0 0
        %2223 = vmatpush1.bf16.msra.mxu0 0
        %2224 = vmatprep.mubr.bf16.mxu0 0
        %2225 = vmatmul.mubr.bf16.gmra.mrb[0].mxu0 %v1867
        %v2226 = vpop.f32.mrb[0].mxu0
        %v2227 = vadd.f32 %v2178, %v2226
        %v2228 = vpop.f32.mrb[0].mxu0
        %v2229 = vpop.f32.mrb[0].mxu0
        %v2230 = vadd.f32 %v2178, %v2229
        %v2231 = vpop.f32.mrb[0].mxu0
        %2232 = vdwg.mxu0
        %s2233 = scalar_lea.vmem %s6, 48
        %v2234 = vld [vmem:[%s2233] sm:$0xf]
        %v2235 = vld [vmem:[%s2233 + $0x4] sm:$0xf]
        %v2236 = vld [vmem:[%s2233 + $0x8] sm:$0xf]
        %v2237 = vld [vmem:[%s2233 + $0xc] sm:$0xf]
        %s2238 = scalar_lea.vmem %s7, 3
        %v2239 = vld [vmem:[%s2238] sm:$0x1]
        %v2241 = vlaneseq
        %v2242 = vshrl.u32 %v2241, 7
        %v2243 = vsub.s32 0, %v2242
        %v2244 = vrot.slane %v2239, %v2243
        %v2250 = vunpack.c.l.b16 %v2234
        %v2251 = vunpack.c.l.b16 %v2235
        %v2252 = vunpack.c.l.b16 %v2236
        %v2253 = vunpack.c.l.b16 %v2237
        %v2254 = vpack.c.b16 %v2251, %v2250
        %v2255 = vpack.c.b16 %v2253, %v2252
        %2258 = vmatprep.subr.bf16.mxu0 0
        %2259 = vmatpush1.bf16.msra.mxu0 %v2254
        %2260 = vmatprep.subr.bf16.mxu0 0
        %2261 = vmatpush1.bf16.msra.mxu0 %v2255
        %2262 = vmatprep.subr.bf16.mxu0 0
        %2263 = vmatpush1.bf16.msra.mxu0 0
        %2264 = vmatprep.subr.bf16.mxu0 0
        %2265 = vmatpush1.bf16.msra.mxu0 0
        %2266 = vmatprep.subr.bf16.mxu0 0
        %2267 = vmatpush1.bf16.msra.mxu0 0
        %2268 = vmatprep.subr.bf16.mxu0 0
        %2269 = vmatpush1.bf16.msra.mxu0 0
        %2270 = vmatprep.subr.bf16.mxu0 0
        %2271 = vmatpush1.bf16.msra.mxu0 0
        %2272 = vmatprep.subr.bf16.mxu0 0
        %2273 = vmatpush1.bf16.msra.mxu0 0
        %2274 = vmatprep.subr.bf16.mxu0 0
        %2275 = vmatpush1.bf16.msra.mxu0 0
        %2276 = vmatprep.subr.bf16.mxu0 0
        %2277 = vmatpush1.bf16.msra.mxu0 0
        %2278 = vmatprep.subr.bf16.mxu0 0
        %2279 = vmatpush1.bf16.msra.mxu0 0
        %2280 = vmatprep.subr.bf16.mxu0 0
        %2281 = vmatpush1.bf16.msra.mxu0 0
        %2282 = vmatprep.subr.bf16.mxu0 0
        %2283 = vmatpush1.bf16.msra.mxu0 0
        %2284 = vmatprep.subr.bf16.mxu0 0
        %2285 = vmatpush1.bf16.msra.mxu0 0
        %2286 = vmatprep.subr.bf16.mxu0 0
        %2287 = vmatpush1.bf16.msra.mxu0 0
        %2288 = vmatprep.subr.bf16.mxu0 0
        %2289 = vmatpush1.bf16.msra.mxu0 0
        %2290 = vmatprep.mubr.bf16.mxu0 0
        %2291 = vmatmul.mubr.bf16.gmra.mrb[0].mxu0 %v1867
        %v2292 = vpop.f32.mrb[0].mxu0
        %v2293 = vadd.f32 %v2244, %v2292
        %v2294 = vpop.f32.mrb[0].mxu0
        %v2295 = vpop.f32.mrb[0].mxu0
        %v2296 = vadd.f32 %v2244, %v2295
        %v2297 = vpop.f32.mrb[0].mxu0
        %2298 = vdwg.mxu0
        %s2299 = scalar_lea.vmem %s8, 48
        %v2300 = vld [vmem:[%s2299] sm:$0xf]
        %v2301 = vld [vmem:[%s2299 + $0x4] sm:$0xf]
        %v2302 = vld [vmem:[%s2299 + $0x8] sm:$0xf]
        %v2303 = vld [vmem:[%s2299 + $0xc] sm:$0xf]
        %s2304 = scalar_lea.vmem %s9, 3
        %v2305 = vld [vmem:[%s2304] sm:$0x1]
        %v2307 = vlaneseq
        %v2308 = vshrl.u32 %v2307, 7
        %v2309 = vsub.s32 0, %v2308
        %v2310 = vrot.slane %v2305, %v2309
        %v2316 = vunpack.c.l.b16 %v2300
        %v2317 = vunpack.c.l.b16 %v2301
        %v2318 = vunpack.c.l.b16 %v2302
        %v2319 = vunpack.c.l.b16 %v2303
        %v2320 = vpack.c.b16 %v2317, %v2316
        %v2321 = vpack.c.b16 %v2319, %v2318
        %2324 = vmatprep.subr.bf16.mxu0 0
        %2325 = vmatpush1.bf16.msra.mxu0 %v2320
        %2326 = vmatprep.subr.bf16.mxu0 0
        %2327 = vmatpush1.bf16.msra.mxu0 %v2321
        %2328 = vmatprep.subr.bf16.mxu0 0
        %2329 = vmatpush1.bf16.msra.mxu0 0
        %2330 = vmatprep.subr.bf16.mxu0 0
        %2331 = vmatpush1.bf16.msra.mxu0 0
        %2332 = vmatprep.subr.bf16.mxu0 0
        %2333 = vmatpush1.bf16.msra.mxu0 0
        %2334 = vmatprep.subr.bf16.mxu0 0
        %2335 = vmatpush1.bf16.msra.mxu0 0
        %2336 = vmatprep.subr.bf16.mxu0 0
        %2337 = vmatpush1.bf16.msra.mxu0 0
        %2338 = vmatprep.subr.bf16.mxu0 0
        %2339 = vmatpush1.bf16.msra.mxu0 0
        %2340 = vmatprep.subr.bf16.mxu0 0
        %2341 = vmatpush1.bf16.msra.mxu0 0
        %2342 = vmatprep.subr.bf16.mxu0 0
        %2343 = vmatpush1.bf16.msra.mxu0 0
        %2344 = vmatprep.subr.bf16.mxu0 0
        %2345 = vmatpush1.bf16.msra.mxu0 0
        %2346 = vmatprep.subr.bf16.mxu0 0
        %2347 = vmatpush1.bf16.msra.mxu0 0
        %2348 = vmatprep.subr.bf16.mxu0 0
        %2349 = vmatpush1.bf16.msra.mxu0 0
        %2350 = vmatprep.subr.bf16.mxu0 0
        %2351 = vmatpush1.bf16.msra.mxu0 0
        %2352 = vmatprep.subr.bf16.mxu0 0
        %2353 = vmatpush1.bf16.msra.mxu0 0
        %2354 = vmatprep.subr.bf16.mxu0 0
        %2355 = vmatpush1.bf16.msra.mxu0 0
        %2356 = vmatprep.mubr.bf16.mxu0 0
        %2357 = vmatmul.mubr.bf16.gmra.mrb[0].mxu0 %v1867
        %v2358 = vpop.f32.mrb[0].mxu0
        %v2359 = vadd.f32 %v2310, %v2358
        %v2360 = vpop.f32.mrb[0].mxu0
        %v2361 = vpop.f32.mrb[0].mxu0
        %v2362 = vadd.f32 %v2310, %v2361
        %v2363 = vpop.f32.mrb[0].mxu0
        %2364 = vdwg.mxu0
        %v2365 = vpack.c.bf16 %v2230, %v2227
        %v2366 = vpack.c.bf16 %v2296, %v2293
        %v2368 = vsel %vm1029, %v2365, 0
        %v2371 = vsel %vm1029, %v2366, 0
        %2373 = vmatprep.subr.bf16.mxu0 0
        %2374 = vmatpush1.bf16.xpose.msra.mxu0 %v2371
        %2375 = vmatprep.subr.bf16.mxu0 0
        %2376 = vmatpush1.bf16.xpose.msra.mxu0 0
        %2377 = vmatprep.subr.bf16.mxu0 0
        %2378 = vmatpush1.bf16.xpose.msra.mxu0 0
        %2379 = vmatprep.subr.bf16.mxu0 0
        %2380 = vmatpush1.bf16.xpose.msra.mxu0 0
        %2381 = vmatprep.subr.bf16.mxu0 0
        %2382 = vmatpush1.bf16.xpose.msra.mxu0 0
        %2383 = vmatprep.subr.bf16.mxu0 0
        %2384 = vmatpush1.bf16.xpose.msra.mxu0 0
        %2385 = vmatprep.subr.bf16.mxu0 0
        %2386 = vmatpush1.bf16.xpose.msra.mxu0 0
        %2387 = vmatprep.subr.bf16.mxu0 0
        %2388 = vmatpush1.bf16.xpose.msra.mxu0 0
        %2389 = vmatprep.subr.bf16.mxu0 0
        %2390 = vmatpush1.bf16.xpose.msra.mxu0 0
        %2391 = vmatprep.subr.bf16.mxu0 0
        %2392 = vmatpush1.bf16.xpose.msra.mxu0 0
        %2393 = vmatprep.subr.bf16.mxu0 0
        %2394 = vmatpush1.bf16.xpose.msra.mxu0 0
        %2395 = vmatprep.subr.bf16.mxu0 0
        %2396 = vmatpush1.bf16.xpose.msra.mxu0 0
        %2397 = vmatprep.subr.bf16.mxu0 0
        %2398 = vmatpush1.bf16.xpose.msra.mxu0 0
        %2399 = vmatprep.subr.bf16.mxu0 0
        %2400 = vmatpush1.bf16.xpose.msra.mxu0 0
        %2401 = vmatprep.subr.bf16.mxu0 0
        %2402 = vmatpush1.bf16.xpose.msra.mxu0 0
        %2403 = vmatprep.subr.bf16.mxu0 0
        %2404 = vmatpush1.bf16.xpose.msra.mxu0 0
        %2405 = vmatprep.mubr.bf16.mxu0 0
        %2406 = vmatmul.mubr.bf16.gmra.mrb[0].mxu0 %v2368
        %v2407 = vpop.f32.mrb[0].mxu0
        %v2408 = vadd.f32 0.0, %v2407
        %v2409 = vpop.f32.mrb[0].mxu0
        %v2410 = vpop.f32.mrb[0].mxu0
        %v2411 = vadd.f32 0.0, %v2410
        %v2412 = vpop.f32.mrb[0].mxu0
        %2413 = vdwg.mxu0
        %v2414 = vmul.f32 %v2408, 0.25
        %v2415 = vmul.f32 %v2411, 0.25
        %v2416 = vadd.f32 %v2414, %v1083
        %v2417 = vadd.f32 %v2415, %v1083
        %v2418 = vsel %vm1029, %v2416, -inf
        %2419 = vmax.xlane.f32.xlu0 %v2418
        %v2420 = vpop.xlane.xlu0 %2419
        %v2421 = vsel %vm1029, %v2417, -inf
        %2422 = vmax.xlane.f32.xlu0 %v2421
        %v2423 = vpop.xlane.xlu0 %2422
        %v2424 = vsub.f32 %v2416, %v2420
        %v2425 = vsub.f32 %v2417, %v2423
        %v2426 = vmul.f32 %v2424, 1.442695
        %v2427 = vpow.pop %v2426
        %v2428 = vmul.f32 %v2425, 1.442695
        %v2429 = vpow.pop %v2428
        %v2430 = vsel %vm1029, %v2427, 0.0
        %2431 = vadd.xlane.f32.xlu0 %v2430
        %v2432 = vpop.xlane.xlu0 %2431
        %v2433 = vsel %vm1029, %v2429, 0.0
        %2434 = vadd.xlane.f32.xlu0 %v2433
        %v2435 = vpop.xlane.xlu0 %2434
        %v2436 = vrcp.pop %v2432
        %v2437 = vrcp.pop %v2435
        %v2438 = vmul.f32 %v2427, %v2436
        %v2439 = vmul.f32 %v2429, %v2437
        %v2440 = vpack.c.bf16 %v2439, %v2438
        %v2441 = vpack.c.bf16 %v2362, %v2359
        %v2443 = vsel %vm1029, %v2440, 0
        %2445 = vmatprep.subr.bf16.mxu0 0
        %2446 = vmatpush1.bf16.msra.mxu0 %v2441
        %2447 = vmatprep.subr.bf16.mxu0 0
        %2448 = vmatpush1.bf16.msra.mxu0 0
        %2449 = vmatprep.subr.bf16.mxu0 0
        %2450 = vmatpush1.bf16.msra.mxu0 0
        %2451 = vmatprep.subr.bf16.mxu0 0
        %2452 = vmatpush1.bf16.msra.mxu0 0
        %2453 = vmatprep.subr.bf16.mxu0 0
        %2454 = vmatpush1.bf16.msra.mxu0 0
        %2455 = vmatprep.subr.bf16.mxu0 0
        %2456 = vmatpush1.bf16.msra.mxu0 0
        %2457 = vmatprep.subr.bf16.mxu0 0
        %2458 = vmatpush1.bf16.msra.mxu0 0
        %2459 = vmatprep.subr.bf16.mxu0 0
        %2460 = vmatpush1.bf16.msra.mxu0 0
        %2461 = vmatprep.subr.bf16.mxu0 0
        %2462 = vmatpush1.bf16.msra.mxu0 0
        %2463 = vmatprep.subr.bf16.mxu0 0
        %2464 = vmatpush1.bf16.msra.mxu0 0
        %2465 = vmatprep.subr.bf16.mxu0 0
        %2466 = vmatpush1.bf16.msra.mxu0 0
        %2467 = vmatprep.subr.bf16.mxu0 0
        %2468 = vmatpush1.bf16.msra.mxu0 0
        %2469 = vmatprep.subr.bf16.mxu0 0
        %2470 = vmatpush1.bf16.msra.mxu0 0
        %2471 = vmatprep.subr.bf16.mxu0 0
        %2472 = vmatpush1.bf16.msra.mxu0 0
        %2473 = vmatprep.subr.bf16.mxu0 0
        %2474 = vmatpush1.bf16.msra.mxu0 0
        %2475 = vmatprep.subr.bf16.mxu0 0
        %2476 = vmatpush1.bf16.msra.mxu0 0
        %2477 = vmatprep.mubr.bf16.mxu0 0
        %2478 = vmatmul.mubr.bf16.gmra.mrb[0].mxu0 %v2443
        %v2479 = vpop.f32.mrb[0].mxu0
        %v2480 = vadd.f32 0.0, %v2479
        %v2481 = vpop.f32.mrb[0].mxu0
        %v2482 = vpop.f32.mrb[0].mxu0
        %v2483 = vadd.f32 0.0, %v2482
        %v2484 = vpop.f32.mrb[0].mxu0
        %2485 = vdwg.mxu0
        %v2486 = vpack.c.bf16 %v2483, %v2480
        %s2487 = scalar_lea.vmem %s10, 24
        %v2488 = vld [vmem:[%s2487] sm:$0xf]
        %v2489 = vld [vmem:[%s2487 + $0x4] sm:$0xf]
        %v2492 = vunpack.c.l.b16 %v2488
        %v2493 = vunpack.c.l.b16 %v2489
        %v2494 = vpack.c.b16 %v2493, %v2492
        %v2497 = vsel %vm1029, %v2486, 0
        %2499 = vmatprep.subr.bf16.mxu0 0
        %2500 = vmatpush1.bf16.msra.mxu0 %v2494
        %2501 = vmatprep.subr.bf16.mxu0 0
        %2502 = vmatpush1.bf16.msra.mxu0 0
        %2503 = vmatprep.subr.bf16.mxu0 0
        %2504 = vmatpush1.bf16.msra.mxu0 0
        %2505 = vmatprep.subr.bf16.mxu0 0
        %2506 = vmatpush1.bf16.msra.mxu0 0
        %2507 = vmatprep.subr.bf16.mxu0 0
        %2508 = vmatpush1.bf16.msra.mxu0 0
        %2509 = vmatprep.subr.bf16.mxu0 0
        %2510 = vmatpush1.bf16.msra.mxu0 0
        %2511 = vmatprep.subr.bf16.mxu0 0
        %2512 = vmatpush1.bf16.msra.mxu0 0
        %2513 = vmatprep.subr.bf16.mxu0 0
        %2514 = vmatpush1.bf16.msra.mxu0 0
        %2515 = vmatprep.subr.bf16.mxu0 0
        %2516 = vmatpush1.bf16.msra.mxu0 0
        %2517 = vmatprep.subr.bf16.mxu0 0
        %2518 = vmatpush1.bf16.msra.mxu0 0
        %2519 = vmatprep.subr.bf16.mxu0 0
        %2520 = vmatpush1.bf16.msra.mxu0 0
        %2521 = vmatprep.subr.bf16.mxu0 0
        %2522 = vmatpush1.bf16.msra.mxu0 0
        %2523 = vmatprep.subr.bf16.mxu0 0
        %2524 = vmatpush1.bf16.msra.mxu0 0
        %2525 = vmatprep.subr.bf16.mxu0 0
        %2526 = vmatpush1.bf16.msra.mxu0 0
        %2527 = vmatprep.subr.bf16.mxu0 0
        %2528 = vmatpush1.bf16.msra.mxu0 0
        %2529 = vmatprep.subr.bf16.mxu0 0
        %2530 = vmatpush1.bf16.msra.mxu0 0
        %2531 = vmatprep.mubr.bf16.mxu0 0
        %2532 = vmatmul.mubr.bf16.gmra.mrb[0].mxu0 %v2497
        %v2533 = vpop.f32.mrb[0].mxu0
        %v2534 = vadd.f32 0.0, %v2533
        %v2535 = vpop.f32.mrb[0].mxu0
        %v2536 = vpop.f32.mrb[0].mxu0
        %v2537 = vadd.f32 0.0, %v2536
        %v2538 = vpop.f32.mrb[0].mxu0
        %2539 = vdwg.mxu0
        %v2542 = vunpack.c.l.b16 %v2165
        %v2543 = vunpack.c.l.b16 %v2166
        %v2544 = vpack.c.b16 %v2543, %v2542
        %v2547 = vsel %vm1029, %v2163, 0
        %2549 = vmatprep.subr.bf16.mxu0 0
        %2550 = vmatpush1.bf16.msra.mxu0 %v2544
        %2551 = vmatprep.subr.bf16.mxu0 0
        %2552 = vmatpush1.bf16.msra.mxu0 0
        %2553 = vmatprep.subr.bf16.mxu0 0
        %2554 = vmatpush1.bf16.msra.mxu0 0
        %2555 = vmatprep.subr.bf16.mxu0 0
        %2556 = vmatpush1.bf16.msra.mxu0 0
        %2557 = vmatprep.subr.bf16.mxu0 0
        %2558 = vmatpush1.bf16.msra.mxu0 0
        %2559 = vmatprep.subr.bf16.mxu0 0
        %2560 = vmatpush1.bf16.msra.mxu0 0
        %2561 = vmatprep.subr.bf16.mxu0 0
        %2562 = vmatpush1.bf16.msra.mxu0 0
        %2563 = vmatprep.subr.bf16.mxu0 0
        %2564 = vmatpush1.bf16.msra.mxu0 0
        %2565 = vmatprep.subr.bf16.mxu0 0
        %2566 = vmatpush1.bf16.msra.mxu0 0
        %2567 = vmatprep.subr.bf16.mxu0 0
        %2568 = vmatpush1.bf16.msra.mxu0 0
        %2569 = vmatprep.subr.bf16.mxu0 0
        %2570 = vmatpush1.bf16.msra.mxu0 0
        %2571 = vmatprep.subr.bf16.mxu0 0
        %2572 = vmatpush1.bf16.msra.mxu0 0
        %2573 = vmatprep.subr.bf16.mxu0 0
        %2574 = vmatpush1.bf16.msra.mxu0 0
        %2575 = vmatprep.subr.bf16.mxu0 0
        %2576 = vmatpush1.bf16.msra.mxu0 0
        %2577 = vmatprep.subr.bf16.mxu0 0
        %2578 = vmatpush1.bf16.msra.mxu0 0
        %2579 = vmatprep.subr.bf16.mxu0 0
        %2580 = vmatpush1.bf16.msra.mxu0 0
        %2581 = vmatprep.mubr.bf16.mxu0 0
        %2582 = vmatmul.mubr.bf16.gmra.mrb[0].mxu0 %v2547
        %v2583 = vpop.f32.mrb[0].mxu0
        %v2584 = vadd.f32 %v2534, %v2583
        %v2585 = vpop.f32.mrb[0].mxu0
        %v2586 = vpop.f32.mrb[0].mxu0
        %v2587 = vadd.f32 %v2537, %v2586
        %v2588 = vpop.f32.mrb[0].mxu0
        %2589 = vdwg.mxu0
        %s2590 = scalar_lea.vmem %s11, 1
        %v2591 = vld [vmem:[%s2590] sm:$0x1]
        %v2593 = vlaneseq
        %v2594 = vshrl.u32 %v2593, 7
        %v2595 = vsub.s32 0, %v2594
        %v2596 = vrot.slane %v2591, %v2595
        %v2598 = vadd.f32 %v2584, %v2596
        %v2599 = vadd.f32 %v2587, %v2596
        %v2600 = vadd.f32 %v1838, %v2598
        %v2601 = vadd.f32 %v1839, %v2599
        %s2602 = scalar_lea.vmem %s12, 1
        %v2603 = vld [vmem:[%s2602] sm:$0x1]
        %s2604 = scalar_lea.vmem %s13, 1
        %v2605 = vld [vmem:[%s2604] sm:$0x1]
        %v2606 = vsel %vm854, %v2600, 0.0
        %2607 = vadd.xlane.f32.xlu0 %v2606
        %v2608 = vpop.xlane.xlu0 %2607
        %v2609 = vsel %vm854, %v2601, 0.0
        %2610 = vadd.xlane.f32.xlu0 %v2609
        %v2611 = vpop.xlane.xlu0 %2610
        %v2612 = vmul.f32 %v2608, %v1600
        %v2613 = vmul.f32 %v2611, %v1600
        %v2614 = vsub.f32 %v2600, %v2612
        %v2615 = vsub.f32 %v2601, %v2613
        %v2616 = vmul.f32 %v2614, %v2614
        %v2617 = vmul.f32 %v2615, %v2615
        %v2618 = vsel %vm854, %v2616, 0.0
        %2619 = vadd.xlane.f32.xlu0 %v2618
        %v2620 = vpop.xlane.xlu0 %2619
        %v2621 = vsel %vm854, %v2617, 0.0
        %2622 = vadd.xlane.f32.xlu0 %v2621
        %v2623 = vpop.xlane.xlu0 %2622
        %v2624 = vmul.f32 %v2620, %v1600
        %v2625 = vmul.f32 %v2623, %v1600
        %v2626 = vadd.f32 %v2624, 1e-05
        %v2627 = vadd.f32 %v2625, 1e-05
        %v2628 = vrsqrt.pop %v2626
        %v2629 = vrsqrt.pop %v2627
        %v2630 = vmul.f32 %v2614, %v2628
        %v2631 = vmul.f32 %v2615, %v2629
        %v2633 = vlaneseq
        %v2634 = vshrl.u32 %v2633, 7
        %v2635 = vsub.s32 0, %v2634
        %v2636 = vrot.slane %v2603, %v2635
        %v2638 = vmul.f32 %v2630, %v2636
        %v2639 = vmul.f32 %v2631, %v2636
        %v2641 = vlaneseq
        %v2642 = vshrl.u32 %v2641, 7
        %v2643 = vsub.s32 0, %v2642
        %v2644 = vrot.slane %v2605, %v2643
        %v2646 = vadd.f32 %v2638, %v2644
        %v2647 = vadd.f32 %v2639, %v2644
        %v2648 = vpack.c.bf16 %v2647, %v2646
        %s2649 = scalar_lea.vmem %s14, 16
        %v2650 = vld [vmem:[%s2649] sm:$0xf]
        %v2651 = vld [vmem:[%s2649 + $0x4] sm:$0xf]
        %v2652 = vld [vmem:[%s2649 + $0x8] sm:$0xf]
        %v2653 = vld [vmem:[%s2649 + $0xc] sm:$0xf]
        %s2654 = scalar_lea.vmem %s15, 1
        %v2655 = vld [vmem:[%s2654] sm:$0x1]
        %v2657 = vlaneseq
        %v2658 = vshrl.u32 %v2657, 7
        %v2659 = vsub.s32 0, %v2658
        %v2660 = vrot.slane %v2655, %v2659
        %v2666 = vunpack.c.l.b16 %v2650
        %v2667 = vunpack.c.l.b16 %v2651
        %v2668 = vunpack.c.l.b16 %v2652
        %v2669 = vunpack.c.l.b16 %v2653
        %v2670 = vpack.c.b16 %v2667, %v2666
        %v2671 = vpack.c.b16 %v2669, %v2668
        %v2675 = vsel %vm854, %v2648, 0
        %2677 = vmatprep.subr.bf16.mxu0 0
        %2678 = vmatpush1.bf16.msra.mxu0 %v2670
        %2679 = vmatprep.subr.bf16.mxu0 0
        %2680 = vmatpush1.bf16.msra.mxu0 %v2671
        %2681 = vmatprep.subr.bf16.mxu0 0
        %2682 = vmatpush1.bf16.msra.mxu0 0
        %2683 = vmatprep.subr.bf16.mxu0 0
        %2684 = vmatpush1.bf16.msra.mxu0 0
        %2685 = vmatprep.subr.bf16.mxu0 0
        %2686 = vmatpush1.bf16.msra.mxu0 0
        %2687 = vmatprep.subr.bf16.mxu0 0
        %2688 = vmatpush1.bf16.msra.mxu0 0
        %2689 = vmatprep.subr.bf16.mxu0 0
        %2690 = vmatpush1.bf16.msra.mxu0 0
        %2691 = vmatprep.subr.bf16.mxu0 0
        %2692 = vmatpush1.bf16.msra.mxu0 0
        %2693 = vmatprep.subr.bf16.mxu0 0
        %2694 = vmatpush1.bf16.msra.mxu0 0
        %2695 = vmatprep.subr.bf16.mxu0 0
        %2696 = vmatpush1.bf16.msra.mxu0 0
        %2697 = vmatprep.subr.bf16.mxu0 0
        %2698 = vmatpush1.bf16.msra.mxu0 0
        %2699 = vmatprep.subr.bf16.mxu0 0
        %2700 = vmatpush1.bf16.msra.mxu0 0
        %2701 = vmatprep.subr.bf16.mxu0 0
        %2702 = vmatpush1.bf16.msra.mxu0 0
        %2703 = vmatprep.subr.bf16.mxu0 0
        %2704 = vmatpush1.bf16.msra.mxu0 0
        %2705 = vmatprep.subr.bf16.mxu0 0
        %2706 = vmatpush1.bf16.msra.mxu0 0
        %2707 = vmatprep.subr.bf16.mxu0 0
        %2708 = vmatpush1.bf16.msra.mxu0 0
        %2709 = vmatprep.mubr.bf16.mxu0 0
        %2710 = vmatmul.mubr.bf16.gmra.mrb[0].mxu0 %v2675
        %v2711 = vpop.f32.mrb[0].mxu0
        %v2712 = vadd.f32 %v2660, %v2711
        %v2713 = vpop.f32.mrb[0].mxu0
        %v2714 = vpop.f32.mrb[0].mxu0
        %v2715 = vadd.f32 %v2660, %v2714
        %v2716 = vpop.f32.mrb[0].mxu0
        %2717 = vdwg.mxu0
        %v2718 = vmax.f32 %v2712, 0.0
        %v2719 = vmax.f32 %v2715, 0.0
        %v2720 = vpack.c.bf16 %v2719, %v2718
        %s2721 = scalar_lea.vmem %s16, 32
        %v2722 = vld [vmem:[%s2721] sm:$0xf]
        %v2723 = vld [vmem:[%s2721 + $0x4] sm:$0xf]
        %v2724 = vld [vmem:[%s2721 + $0x8] sm:$0xf]
        %v2725 = vld [vmem:[%s2721 + $0xc] sm:$0xf]
        %v2726 = vld [vmem:[%s2721 + $0x10] sm:$0xf]
        %v2727 = vld [vmem:[%s2721 + $0x14] sm:$0xf]
        %v2728 = vld [vmem:[%s2721 + $0x18] sm:$0xf]
        %v2729 = vld [vmem:[%s2721 + $0x1c] sm:$0xf]
        %s2730 = scalar_lea.vmem %s17, 1
        %v2731 = vld [vmem:[%s2730] sm:$0x1]
        %v2733 = vlaneseq
        %v2734 = vshrl.u32 %v2733, 7
        %v2735 = vsub.s32 0, %v2734
        %v2736 = vrot.slane %v2731, %v2735
        %v2746 = vunpack.c.l.b16 %v2722
        %v2747 = vunpack.c.l.b16 %v2723
        %v2748 = vunpack.c.l.b16 %v2724
        %v2749 = vunpack.c.l.b16 %v2725
        %v2750 = vunpack.c.l.b16 %v2726
        %v2751 = vunpack.c.l.b16 %v2727
        %v2752 = vunpack.c.l.b16 %v2728
        %v2753 = vunpack.c.l.b16 %v2729
        %v2754 = vpack.c.b16 %v2747, %v2746
        %v2755 = vpack.c.b16 %v2749, %v2748
        %v2756 = vpack.c.b16 %v2751, %v2750
        %v2757 = vpack.c.b16 %v2753, %v2752
        %v2763 = vsel %vm1747, %v2720, 0
        %2765 = vmatprep.subr.bf16.mxu0 0
        %2766 = vmatpush1.bf16.msra.mxu0 %v2754
        %2767 = vmatprep.subr.bf16.mxu0 0
        %2768 = vmatpush1.bf16.msra.mxu0 %v2755
        %2769 = vmatprep.subr.bf16.mxu0 0
        %2770 = vmatpush1.bf16.msra.mxu0 %v2756
        %2771 = vmatprep.subr.bf16.mxu0 0
        %2772 = vmatpush1.bf16.msra.mxu0 %v2757
        %2773 = vmatprep.subr.bf16.mxu0 0
        %2774 = vmatpush1.bf16.msra.mxu0 0
        %2775 = vmatprep.subr.bf16.mxu0 0
        %2776 = vmatpush1.bf16.msra.mxu0 0
        %2777 = vmatprep.subr.bf16.mxu0 0
        %2778 = vmatpush1.bf16.msra.mxu0 0
        %2779 = vmatprep.subr.bf16.mxu0 0
        %2780 = vmatpush1.bf16.msra.mxu0 0
        %2781 = vmatprep.subr.bf16.mxu0 0
        %2782 = vmatpush1.bf16.msra.mxu0 0
        %2783 = vmatprep.subr.bf16.mxu0 0
        %2784 = vmatpush1.bf16.msra.mxu0 0
        %2785 = vmatprep.subr.bf16.mxu0 0
        %2786 = vmatpush1.bf16.msra.mxu0 0
        %2787 = vmatprep.subr.bf16.mxu0 0
        %2788 = vmatpush1.bf16.msra.mxu0 0
        %2789 = vmatprep.subr.bf16.mxu0 0
        %2790 = vmatpush1.bf16.msra.mxu0 0
        %2791 = vmatprep.subr.bf16.mxu0 0
        %2792 = vmatpush1.bf16.msra.mxu0 0
        %2793 = vmatprep.subr.bf16.mxu0 0
        %2794 = vmatpush1.bf16.msra.mxu0 0
        %2795 = vmatprep.subr.bf16.mxu0 0
        %2796 = vmatpush1.bf16.msra.mxu0 0
        %2797 = vmatprep.mubr.bf16.mxu0 0
        %2798 = vmatmul.mubr.bf16.gmra.mrb[0].mxu0 %v2763
        %v2799 = vpop.f32.mrb[0].mxu0
        %v2800 = vadd.f32 %v2736, %v2799
        %v2801 = vpop.f32.mrb[0].mxu0
        %v2802 = vpop.f32.mrb[0].mxu0
        %v2803 = vadd.f32 %v2736, %v2802
        %v2804 = vpop.f32.mrb[0].mxu0
        %2805 = vdwg.mxu0
        %v2806 = vadd.f32 %v2646, %v2800
        %v2807 = vadd.f32 %v2647, %v2803
        %s2808 = scalar_lea.vmem %s18, 1
        %v2809 = vld [vmem:[%s2808] sm:$0x1]
        %s2810 = scalar_lea.vmem %s19, 1
        %v2811 = vld [vmem:[%s2810] sm:$0x1]
        %v2812 = vsel %vm854, %v2806, 0.0
        %2813 = vadd.xlane.f32.xlu0 %v2812
        %v2814 = vpop.xlane.xlu0 %2813
        %v2815 = vsel %vm854, %v2807, 0.0
        %2816 = vadd.xlane.f32.xlu0 %v2815
        %v2817 = vpop.xlane.xlu0 %2816
        %v2818 = vmul.f32 %v2814, %v1600
        %v2819 = vmul.f32 %v2817, %v1600
        %v2820 = vsub.f32 %v2806, %v2818
        %v2821 = vsub.f32 %v2807, %v2819
        %v2822 = vmul.f32 %v2820, %v2820
        %v2823 = vmul.f32 %v2821, %v2821
        %v2824 = vsel %vm854, %v2822, 0.0
        %2825 = vadd.xlane.f32.xlu0 %v2824
        %v2826 = vpop.xlane.xlu0 %2825
        %v2827 = vsel %vm854, %v2823, 0.0
        %2828 = vadd.xlane.f32.xlu0 %v2827
        %v2829 = vpop.xlane.xlu0 %2828
        %v2830 = vmul.f32 %v2826, %v1600
        %v2831 = vmul.f32 %v2829, %v1600
        %v2832 = vadd.f32 %v2830, 1e-05
        %v2833 = vadd.f32 %v2831, 1e-05
        %v2834 = vrsqrt.pop %v2832
        %v2835 = vrsqrt.pop %v2833
        %v2836 = vmul.f32 %v2820, %v2834
        %v2837 = vmul.f32 %v2821, %v2835
        %v2839 = vlaneseq
        %v2840 = vshrl.u32 %v2839, 7
        %v2841 = vsub.s32 0, %v2840
        %v2842 = vrot.slane %v2809, %v2841
        %v2844 = vmul.f32 %v2836, %v2842
        %v2845 = vmul.f32 %v2837, %v2842
        %v2847 = vlaneseq
        %v2848 = vshrl.u32 %v2847, 7
        %v2849 = vsub.s32 0, %v2848
        %v2850 = vrot.slane %v2811, %v2849
        %v2852 = vadd.f32 %v2844, %v2850
        %v2853 = vadd.f32 %v2845, %v2850
        %v2854 = vpack.c.bf16 %v2853, %v2852
        %v2855 = vld [vmem:[%s20] sm:$0xf]
        %v2856 = vld [vmem:[%s20 + $0x4] sm:$0xf]
        %v2857 = vld [vmem:[%s20 + $0x8] sm:$0xf]
        %v2858 = vld [vmem:[%s20 + $0xc] sm:$0xf]
        %v2859 = vld [vmem:[%s21] sm:$0x1]
        %v2861 = vlaneseq
        %v2862 = vshrl.u32 %v2861, 7
        %v2863 = vsub.s32 0, %v2862
        %v2864 = vrot.slane %v2859, %v2863
        %v2870 = vunpack.c.l.b16 %v2855
        %v2871 = vunpack.c.l.b16 %v2856
        %v2872 = vunpack.c.l.b16 %v2857
        %v2873 = vunpack.c.l.b16 %v2858
        %v2874 = vpack.c.b16 %v2871, %v2870
        %v2875 = vpack.c.b16 %v2873, %v2872
        %v2879 = vsel %vm854, %v2854, 0
        %2881 = vmatprep.subr.bf16.mxu0 0
        %2882 = vmatpush1.bf16.msra.mxu0 %v2874
        %2883 = vmatprep.subr.bf16.mxu0 0
        %2884 = vmatpush1.bf16.msra.mxu0 %v2875
        %2885 = vmatprep.subr.bf16.mxu0 0
        %2886 = vmatpush1.bf16.msra.mxu0 0
        %2887 = vmatprep.subr.bf16.mxu0 0
        %2888 = vmatpush1.bf16.msra.mxu0 0
        %2889 = vmatprep.subr.bf16.mxu0 0
        %2890 = vmatpush1.bf16.msra.mxu0 0
        %2891 = vmatprep.subr.bf16.mxu0 0
        %2892 = vmatpush1.bf16.msra.mxu0 0
        %2893 = vmatprep.subr.bf16.mxu0 0
        %2894 = vmatpush1.bf16.msra.mxu0 0
        %2895 = vmatprep.subr.bf16.mxu0 0
        %2896 = vmatpush1.bf16.msra.mxu0 0
        %2897 = vmatprep.subr.bf16.mxu0 0
        %2898 = vmatpush1.bf16.msra.mxu0 0
        %2899 = vmatprep.subr.bf16.mxu0 0
        %2900 = vmatpush1.bf16.msra.mxu0 0
        %2901 = vmatprep.subr.bf16.mxu0 0
        %2902 = vmatpush1.bf16.msra.mxu0 0
        %2903 = vmatprep.subr.bf16.mxu0 0
        %2904 = vmatpush1.bf16.msra.mxu0 0
        %2905 = vmatprep.subr.bf16.mxu0 0
        %2906 = vmatpush1.bf16.msra.mxu0 0
        %2907 = vmatprep.subr.bf16.mxu0 0
        %2908 = vmatpush1.bf16.msra.mxu0 0
        %2909 = vmatprep.subr.bf16.mxu0 0
        %2910 = vmatpush1.bf16.msra.mxu0 0
        %2911 = vmatprep.subr.bf16.mxu0 0
        %2912 = vmatpush1.bf16.msra.mxu0 0
        %2913 = vmatprep.mubr.bf16.mxu0 0
        %2914 = vmatmul.mubr.bf16.gmra.mrb[0].mxu0 %v2879
        %v2915 = vpop.f32.mrb[0].mxu0
        %v2916 = vadd.f32 %v2864, %v2915
        %v2917 = vpop.f32.mrb[0].mxu0
        %v2918 = vpop.f32.mrb[0].mxu0
        %v2919 = vadd.f32 %v2864, %v2918
        %v2920 = vpop.f32.mrb[0].mxu0
        %2921 = vdwg.mxu0
        %2922 = vst [vmem:[%s688] sm:$0xff] %v2916
        %2923 = vst [vmem:[%s688 + $0x8] sm:$0xff] %v2919
        %s2924 = sand.u32 %s516, 1
        %s2925 = scalar_lea.sflag [#allocation3], %s2924
        %s2926 = sand.u32 %s516, 1
        %s2927 = smul.addr %s2926, 16
        %s2928 = scalar_lea.vmem [#allocation2], %s2927
        // Predicated region
        $region109: #{trained_transformer_forward.1} parent=107 // pred_check
          %p2929 = pneg %p526
        $region110: #{trained_transformer_forward.1} parent=107 // pred_check_branch
          %2931 = sbr.rel (%p2929) target = $region112
        $region111: #{trained_transformer_forward.1} parent=107 // pred_region
          %s2933 = ssub.s32 256, 256
          %2934 = vsyncadd %s2925, %s2933
          %s2935 = smul.addr %s36, 2
          %s2936 = smul.addr %s2935, 128
          %s2937 = scalar_lea.hbm %s22, %s2936
          %s2938 = sshll.u32 %s2928, 4
          %s2939 = int_to_ptr.vmem [resolvable:$true] %s2938
          %2944 = dma.vmem_to_hbm [thread:$0]  %s2939, 256, %s2937, %s2925, 128, 128, 8
        $region112: #{trained_transformer_forward.1} parent=107 // pred_fallthru
          _
      $region108: #{trained_transformer_forward.1} parent=5 // pred_fallthru
        _
      %p2945 = scmp.le.s32.totalorder 2, %s31
      // Predicated region
      $region113: #{trained_transformer_forward.1} parent=5 // pred_check
        %p2946 = pneg %p2945
      $region114: #{trained_transformer_forward.1} parent=5 // pred_check_branch
        %2948 = sbr.rel (%p2946) target = $region116
      $region115: #{trained_transformer_forward.1} parent=5 // pred_region
        %s2949 = ssub.s32 %s31, 2
        // Predicated region
        $region117: #{trained_transformer_forward.1} parent=115 // pred_check
          %p2950 = pneg %p532
        $region118: #{trained_transformer_forward.1} parent=115 // pred_check_branch
          %2952 = sbr.rel (%p2950) target = $region120
        $region119: #{trained_transformer_forward.1} parent=115 // pred_region
          %s2953 = sand.u32 %s517, 1
          %s2954 = scalar_lea.sflag [#allocation3], %s2953
          %s2955 = sand.u32 %s517, 1
          %s2956 = smul.addr %s2955, 16
          %s2957 = scalar_lea.vmem [#allocation2], %s2956
          %2958 = dma.done %s2954, 256
        $region120: #{trained_transformer_forward.1} parent=115 // pred_fallthru
          _
      $region116: #{trained_transformer_forward.1} parent=5 // pred_fallthru
        _
    $region6: #{trained_transformer_forward.1} parent=1 // loop_footer
      %s35 = sadd.s32 1, %s31
    $region7: #{trained_transformer_forward.1} parent=1 // loop_footer_branch
      %30 = sbr.rel target = $region3
    $region8: #{trained_transformer_forward.1} parent=1 // loop_exit
      _
    %2959 = vsyncpa [#allocation3], 1
    %s2960 = scalar_lea.sflag [#allocation3], 1
    %2961 = vsyncpa %s2960, 1

</llo_original>
